<compile_context>
chip_gen: v7x
topology: tpu7x:2x2x1
jax: 0.10.0
libtpu: 0.0.40
codegen_flags: <defaults>
</compile_context>

<pallas_src>
import functools
import numpy as np
import jax
import jax.numpy as jnp
from jax import lax
from jax.experimental import pallas as pl
from jax.experimental.pallas import tpu as pltpu

CHANNEL = 7
BN_EPS = 1e-5
# torch.nn.BatchNorm1d in eval mode with default state (running_mean=0, running_var=1,
# gamma=1, beta=0) is a pure scale by 1/sqrt(1+eps) -> folded into weights at init.
BN_SCALE = float(1.0 / np.sqrt(1.0 + BN_EPS))

TILE_M = 2048                 # rows per grid step; tiny vs VMEM (a [2048,32] f32 tile is 256 KiB)
SUB_M = 512                   # in-kernel row sub-block: bounds live vregs & feeds v5e's 4 MXUs
VMEM_LIMIT_BYTES = 32 * 1024 * 1024


def _round_up(v, m):
    return (v + m - 1) // m * m


# ----------------------------------------------------------------------------- Pallas kernel
def _fused_net_kernel(x_ref, *refs, meta, sub_m):
    """Multi-branch fused layer program.

    refs = (w_0..w_{L-1}, b_0..b_{L-1}, out) with L = total layers over all branches.
    meta = tuple of branches (src, col_start, col_width, acts, kinds):
        src == -1      : branch input is x_ref[:, col_start:col_start+col_width]
        src == k >= 0  : branch input is the (column-sliced) result of branch k (chained)
    kinds[l] == "dense"  : W stored (K_in, K_out) bf16 -> MXU matmul, f32 accumulate.
    kinds[l] == "rowvec" : K_out == 1, W stored transposed (1, K_in) f32 -> VPU multiply +
                           lane reduction (avoids a 1-wide MXU matmul).
    All eval-mode BatchNorm scales / GAT attention projections are pre-folded into W/b.
    Branch outputs are concatenated (in meta order) into one lane-contiguous store.
    """
    L = sum(len(m[3]) for m in meta)
    w_refs = refs[:L]
    b_refs = refs[L:2 * L]
    out_ref = refs[2 * L]
    tile_m = x_ref.shape[0]
    n_sub = tile_m // sub_m

    def compute(xblk):
        results, outs = [], []
        li = 0
        for (src, c0, cw, acts, kinds) in meta:
            base = xblk if src < 0 else results[src]
            h = base[:, c0:c0 + cw]
            for a, kind in zip(acts, kinds):
                w = w_refs[li][...]
                b = b_refs[li][...]
                li += 1
                if kind == "rowvec":
                    h = jnp.sum(h * w, axis=-1, keepdims=True)          # VPU + lane reduce
                else:
                    h = jnp.dot(h.astype(jnp.bfloat16), w,              # bf16 MXU operands
                                preferred_element_type=jnp.float32)     # f32 accumulate
                h = h + b                                               # f32 epilogue
                if a == "relu":
                    h = jnp.maximum(h, 0.0)
                elif a == "sigmoid":
                    h = jax.nn.sigmoid(h)
            results.append(h)
            outs.append(h)
        return outs[0] if len(outs) == 1 else jnp.concatenate(outs, axis=-1)

    if n_sub <= 1:
        out_ref[...] = compute(x_ref[...])
    else:
        def body(i, carry):
            off = pl.multiple_of(i * sub_m, sub_m)
            out_ref[pl.ds(off, sub_m), :] = compute(x_ref[pl.ds(off, sub_m), :])
            return carry
        lax.fori_loop(0, n_sub, body, 0, unroll=True)


def pallas_program(x, prog):
    """Apply a prepared multi-branch fused layer program to x: [M, K0] -> [M, out_dim].

    The row dimension is tiled (grid over M, "parallel"); weights/biases use constant
    index_maps so they stay resident in VMEM across the grid.  Feature dims are passed at
    their TRUE width (block dim == full array dim), so no 128-lane zero padding of
    activations is ever written to HBM.  VMEM is not a constraint on any generation for
    these tile sizes; TILE_M is chosen to amortize per-grid-step pipeline overhead.
    """
    ws, bs, meta, out_dim = prog["weights"], prog["biases"], prog["meta"], prog["out_dim"]

    x = x.astype(jnp.float32)
    M, K0 = x.shape
    Mp = _round_up(max(M, 8), 8)                 # sublane multiple
    if Mp > SUB_M:
        Mp = _round_up(Mp, SUB_M)                # keep the sub-block loop exact
    if Mp != M:
        x = jnp.zeros((Mp, K0), jnp.float32).at[:M].set(x)

    tile_m = min(TILE_M, Mp)
    sub_m = SUB_M if (tile_m > SUB_M and tile_m % SUB_M == 0) else tile_m
    grid = (pl.cdiv(Mp, tile_m),)

    kernel = functools.partial(_fused_net_kernel, meta=meta, sub_m=sub_m)
    in_specs = ([pl.BlockSpec((tile_m, K0), lambda i: (i, 0))]
                + [pl.BlockSpec(tuple(w.shape), lambda i: (0, 0)) for w in ws]
                + [pl.BlockSpec(tuple(b.shape), lambda i: (0, 0)) for b in bs])

    out = pl.pallas_call(
        kernel,
        grid=grid,
        in_specs=in_specs,
        out_specs=pl.BlockSpec((tile_m, out_dim), lambda i: (i, 0)),
        out_shape=jax.ShapeDtypeStruct((Mp, out_dim), jnp.float32),
        compiler_params=pltpu.CompilerParams(
            # TODO(synk): on v7x use pltpu.CORE_PARALLEL here to shard the row grid across
            # both TensorCores; "parallel" is kept since it is accepted on all generations.
            dimension_semantics=("parallel",),
            vmem_limit_bytes=VMEM_LIMIT_BYTES,
        ),
    )(x, *ws, *bs)
    return out if Mp == M else out[:M]


# ----------------------------------------------------------------------------- graph glue (plain JAX)
def registration(x, edge_index, dis):
    # TODO(synk): `registration` is not defined in the provided source; implemented as the
    # per-edge residual between (learned-displacement-corrected) source position and target position.
    src, dst = edge_index[0], edge_index[1]
    pos = x[:, 0:3]
    return (pos + dis)[src] - pos[dst]                                  # [E, 3]


def gat_aggregate(h_ext, alpha_edge, edge_index, bias, out_ch, num_nodes):
    """Single-head GAT aggregation.  h_ext carries [h | h@a_src | h@a_dst] produced by the
    fused node-projection kernel; alpha_edge is the fused edge-attention column."""
    # TODO(synk): PyG GATConv default add_self_loops=True is not reproduced (no self loops added).
    src, dst = edge_index[0], edge_index[1]
    h = h_ext[:, :out_ch]
    alpha = h_ext[:, out_ch][src] + h_ext[:, out_ch + 1][dst] + alpha_edge
    alpha = jnp.where(alpha > 0, alpha, 0.2 * alpha)                    # LeakyReLU(0.2)
    # TODO(synk): segment softmax / scatter-add have no clean rectangular-BlockSpec Pallas form;
    # kept as jax.ops.segment_* glue (fused by XLA under jit).
    amax = jax.ops.segment_max(alpha, dst, num_segments=num_nodes)
    amax = jnp.where(jnp.isfinite(amax), amax, 0.0)
    ex = jnp.exp(alpha - amax[dst])
    denom = jax.ops.segment_sum(ex, dst, num_segments=num_nodes)
    coef = ex / (denom[dst] + 1e-16)
    out = jax.ops.segment_sum(coef[:, None] * h[src], dst, num_segments=num_nodes)
    return out + bias


# ----------------------------------------------------------------------------- raw parameters
def _init_linear(key, fan_in, fan_out):
    w = jax.random.normal(key, (fan_in, fan_out), jnp.float32) * (1.0 / np.sqrt(fan_in))
    b = jnp.zeros((fan_out,), jnp.float32)
    return w, b


def init_mlp(key, dims):
    ws, bs = [], []
    keys = jax.random.split(key, len(dims) - 1)
    for k, din, dout in zip(keys, dims[:-1], dims[1:]):
        w, b = _init_linear(k, din, dout)
        ws.append(w)
        bs.append(b)
    return ws, bs


def init_gat(key, in_ch, out_ch, edge_dim):
    k1, k2, k3, k4, k5 = jax.random.split(key, 5)
    return dict(
        W=jax.random.normal(k1, (in_ch, out_ch), jnp.float32) / np.sqrt(in_ch),
        We=jax.random.normal(k2, (edge_dim, out_ch), jnp.float32) / np.sqrt(edge_dim),
        a_src=jax.random.normal(k3, (out_ch,), jnp.float32) * 0.1,
        a_dst=jax.random.normal(k4, (out_ch,), jnp.float32) * 0.1,
        a_edge=jax.random.normal(k5, (out_ch,), jnp.float32) * 0.1,
        bias=jnp.zeros((out_ch,), jnp.float32),
    )


def init_params(key):
    ks = jax.random.split(key, 9)
    return {
        "mlp1_1": init_mlp(ks[0], [3, 64, 64, 3]),
        "mlp1_4": init_mlp(ks[1], [4, 64, 64, 7]),
        "conv1_1": init_gat(ks[2], CHANNEL, CHANNEL, edge_dim=7),
        "mlp1_2": init_mlp(ks[3], [CHANNEL, 64, 64, 11]),
        "mlp1_7": init_mlp(ks[4], [3, 32, 32, 3]),
        "mlp1_8": init_mlp(ks[5], [14, 32, 32, 7]),
        "conv1_2": init_gat(ks[6], 11, 16, edge_dim=7),
        "mlp1_3": init_mlp(ks[7], [16, 64, 64, 32]),
        "lin1_1": init_mlp(ks[8], [32, 1]),
    }


# ----------------------------------------------------------------------------- one-time prep / folding
def _layer_stack(ws, bs):
    """Pack one layer stack: dense weights -> bf16 MXU operands; width-1 heads stored as
    transposed f32 row-vectors evaluated with a lane reduction instead of a matmul."""
    Ws, Bs, kinds = [], [], []
    for w, b in zip(ws, bs):
        w = jnp.asarray(w, jnp.float32)
        b = jnp.asarray(b, jnp.float32).reshape(1, -1)
        if w.shape[1] == 1:
            kinds.append("rowvec")
            Ws.append(jnp.asarray(w.T, jnp.float32))      # (1, K_in), stays f32 on the VPU path
        else:
            kinds.append("dense")
            Ws.append(jnp.asarray(w, jnp.bfloat16))       # bf16 MXU operand
        Bs.append(b)
    out_dim = 1 if kinds[-1] == "rowvec" else int(ws[-1].shape[1])
    return Ws, Bs, tuple(kinds), out_dim


def _program(branch_defs):
    """Pack several (possibly chained) layer stacks sharing one row-tiled input into a
    single fused-kernel program; output columns follow branch order."""
    meta, Ws, Bs = [], [], []
    out_dim = 0
    for bd in branch_defs:
        sWs, sBs, kinds, od = _layer_stack(bd["ws"], bd["bs"])
        meta.append((bd["src"], bd["cols"][0], bd["cols"][1], tuple(bd["acts"]), kinds))
        Ws += sWs
        Bs += sBs
        out_dim += od
    return dict(weights=Ws, biases=Bs, meta=tuple(meta), out_dim=out_dim)


def prepare_params(raw):
    """Fold eval-mode BatchNorm scales, GAT attention projections and the sigmoid head into
    fused branch programs.  Runs ONCE at init (no per-forward copies / padding / casts)."""
    P = {}

    def fold_internal(ws, bs):
        # PyG MLP: Linear -> BN -> ReLU after every layer except the last (plain_last).
        ws = [w * (BN_SCALE if l < len(ws) - 1 else 1.0) for l, w in enumerate(ws)]
        bs = [b * (BN_SCALE if l < len(bs) - 1 else 1.0) for l, b in enumerate(bs)]
        return list(ws), list(bs)

    def gat_node_proj(g):
        # node projection [W | W@a_src | W@a_dst]
        Wn = jnp.concatenate([g["W"], (g["W"] @ g["a_src"])[:, None],
                              (g["W"] @ g["a_dst"])[:, None]], axis=1)
        return [Wn], [jnp.zeros((Wn.shape[1],), jnp.float32)]

    def gat_edge_stack(mlp_raw, g):
        # relu(mlp(.)) @ (We @ a_edge) : edge attention fused into the edge MLP stack
        ws, bs = fold_internal(*mlp_raw)
        return ws + [(g["We"] @ g["a_edge"])[:, None]], bs + [jnp.zeros((1,), jnp.float32)]

    # --- fused node kernel #1 on x: d1 | d2 | conv1_1 node projection (one x DMA) -------
    w11, b11 = fold_internal(*raw["mlp1_1"])
    w17, b17 = fold_internal(*raw["mlp1_7"])
    wn1, bn1 = gat_node_proj(raw["conv1_1"])
    P["node1"] = _program([
        dict(src=-1, cols=(0, 3), ws=w11, bs=b11, acts=["relu", "relu", None]),        # -> [:,0:3]
        dict(src=-1, cols=(0, 3), ws=w17, bs=b17, acts=["relu", "relu", None]),        # -> [:,3:6]
        dict(src=-1, cols=(0, CHANNEL), ws=wn1, bs=bn1, acts=[None]),                  # -> [:,6:15]
    ])
    P["conv1_1_bias"] = raw["conv1_1"]["bias"]
    P["conv1_1_oc"] = int(raw["conv1_1"]["W"].shape[1])

    # --- edge attention #1: mlp1_4 (+ explicit relu) + fused attention column ------------
    we1, be1 = gat_edge_stack(raw["mlp1_4"], raw["conv1_1"])
    P["edge1"] = _program([dict(src=-1, cols=(0, 4), ws=we1, bs=be1,
                                acts=["relu", "relu", "relu", None])])

    # --- fused node kernel #2 on aggregated nf: mlp1_2 chain -> conv1_2 node projection --
    w12, b12 = fold_internal(*raw["mlp1_2"])
    w12[0] = w12[0] * BN_SCALE            # bn1_1 on the conv1_1 output (mlp1_2 input)
    w12[-1] = w12[-1] * BN_SCALE          # trailing relu -> bn1_2 (positive scale commutes)
    b12[-1] = b12[-1] * BN_SCALE
    wn2, bn2 = gat_node_proj(raw["conv1_2"])
    P["nf"] = _program([
        dict(src=-1, cols=(0, CHANNEL), ws=w12, bs=b12, acts=["relu", "relu", "relu"]),  # -> [:,0:11]
        dict(src=0, cols=(0, 11), ws=wn2, bs=bn2, acts=[None]),                           # -> [:,11:29]
    ])
    P["conv1_2_bias"] = raw["conv1_2"]["bias"]
    P["conv1_2_oc"] = int(raw["conv1_2"]["W"].shape[1])

    # --- edge attention #2 ----------------------------------------------------------------
    we2, be2 = gat_edge_stack(raw["mlp1_8"], raw["conv1_2"])
    P["edge2"] = _program([dict(src=-1, cols=(0, 14), ws=we2, bs=be2,
                                acts=["relu", "relu", "relu", None])])

    # --- head: bn1_3 -> mlp1_3 -> relu -> bn1_4 -> lin1_1 -> sigmoid, all in one kernel ----
    w13, b13 = fold_internal(*raw["mlp1_3"])
    w13[0] = w13[0] * BN_SCALE            # bn1_3 on the input
    w13[-1] = w13[-1] * BN_SCALE          # relu -> bn1_4
    b13[-1] = b13[-1] * BN_SCALE
    wl, bl = raw["lin1_1"]
    P["head"] = _program([dict(src=-1, cols=(0, 16), ws=w13 + [wl[0]], bs=b13 + [bl[0]],
                               acts=["relu", "relu", "relu", "sigmoid"])])
    return P


# ----------------------------------------------------------------------------- Net.forward (data_prev=None path)
def net_forward(P, x, edge_index):
    # TODO(synk): the `data_prev is not None` temporal branch (uses undefined knn()/GCNConv in the
    # source) is not exercised here; this reproduces the default data_prev=None forward path.
    N = x.shape[0]
    src, dst = edge_index[0], edge_index[1]
    pos = x[:, 0:3]

    node1 = pallas_program(x, P["node1"])                               # [N, 15] (one fused call)
    d1, d2, h1 = node1[:, 0:3], node1[:, 3:6], node1[:, 6:15]

    r1 = registration(x, edge_index, d1)                                # [E, 3]
    r1 = jnp.concatenate([r1, x[:, 3:4][dst]], axis=1)                  # [E, 4]
    alpha_e1 = pallas_program(r1, P["edge1"])[:, 0]                     # [E]  fused mlp1_4 + edge attn

    nf = gat_aggregate(h1, alpha_e1, edge_index, P["conv1_1_bias"], P["conv1_1_oc"], N)   # [N, 7]

    nf_prog = pallas_program(nf, P["nf"])                               # [N, 29] (one fused call)
    nf2, h2 = nf_prog[:, 0:11], nf_prog[:, 11:29]                       # bn1_2(relu(mlp1_2(bn1_1(.)))) | conv1_2 proj

    r2 = registration(x, edge_index, d2)                                # [E, 3]
    r2 = jnp.concatenate([r2, nf2[dst]], axis=1)                        # [E, 14]
    alpha_e2 = pallas_program(r2, P["edge2"])[:, 0]                     # [E]  fused mlp1_8 + edge attn

    nf3 = gat_aggregate(h2, alpha_e2, edge_index, P["conv1_2_bias"], P["conv1_2_oc"], N)  # [N, 16]
    out = pallas_program(nf3, P["head"])                                # [N, 1]  bn1_3/mlp1_3/bn1_4/lin1_1/sigmoid
    return out


if __name__ == "__main__":
    key = jax.random.PRNGKey(0)
    kparam, kx, ks, kd = jax.random.split(key, 4)
    params = prepare_params(init_params(kparam))

    N, E = 16, 48
    x = jax.random.normal(kx, (N, CHANNEL), jnp.float32)
    src = jax.random.randint(ks, (E,), 0, N)
    dst = jax.random.randint(kd, (E,), 0, N)
    edge_index = jnp.stack([src, dst]).astype(jnp.int32)                # [2, E]

    fwd = jax.jit(functools.partial(net_forward, params))
    out = jax.block_until_ready(fwd(x, edge_index))
    assert out.shape == (N, 1) and out.dtype == jnp.float32
    assert bool(jnp.all(jnp.isfinite(out)))
    print("KERNEL_OK")
</pallas_src>

<mosaic_0001>
module attributes {stable_mosaic.version = 11 : i64} {
  func.func private @main(%arg0: i32) attributes {dimension_semantics = [#tpu.dimension_semantics<core_parallel>], iteration_bounds = array<i64: 2>, tpu.core_type = #tpu.core_type<sc_scalar_subcore>, window_params = []} {
    return
  }
}

module attributes {stable_mosaic.version = 11 : i64} {
  func.func private @main(%arg0: i32) attributes {dimension_semantics = [#tpu.dimension_semantics<core_parallel>], iteration_bounds = array<i64: 2>, tpu.core_type = #tpu.core_type<sc_scalar_subcore>, window_params = []} {
    return
  }
}

module attributes {stable_mosaic.version = 11 : i64} {
  func.func @_fused_net_kernel(%arg0: i32, %arg1: memref<16x7xf32, #tpu.memory_space<vmem>>, %arg2: memref<3x64xbf16, #tpu.memory_space<vmem>>, %arg3: memref<64x64xbf16, #tpu.memory_space<vmem>>, %arg4: memref<64x3xbf16, #tpu.memory_space<vmem>>, %arg5: memref<3x32xbf16, #tpu.memory_space<vmem>>, %arg6: memref<32x32xbf16, #tpu.memory_space<vmem>>, %arg7: memref<32x3xbf16, #tpu.memory_space<vmem>>, %arg8: memref<7x9xbf16, #tpu.memory_space<vmem>>, %arg9: memref<1x64xf32, #tpu.memory_space<vmem>>, %arg10: memref<1x64xf32, #tpu.memory_space<vmem>>, %arg11: memref<1x3xf32, #tpu.memory_space<vmem>>, %arg12: memref<1x32xf32, #tpu.memory_space<vmem>>, %arg13: memref<1x32xf32, #tpu.memory_space<vmem>>, %arg14: memref<1x3xf32, #tpu.memory_space<vmem>>, %arg15: memref<1x9xf32, #tpu.memory_space<vmem>>, %arg16: memref<16x15xf32, #tpu.memory_space<vmem>>) attributes {dimension_semantics = [#tpu.dimension_semantics<parallel>], iteration_bounds = array<i64: 1>, scalar_prefetch = 0 : i64, scratch_operands = 0 : i64, tpu.core_type = #tpu.core_type<tc>, window_params = [{transform_indices = @transform_0, window_bounds = array<i64: 16, 7>}, {pipeline_mode = #tpu.pipeline_mode<synchronous>, transform_indices = @transform_1, window_bounds = array<i64: 3, 64>}, {pipeline_mode = #tpu.pipeline_mode<synchronous>, transform_indices = @transform_2, window_bounds = array<i64: 64, 64>}, {pipeline_mode = #tpu.pipeline_mode<synchronous>, transform_indices = @transform_3, window_bounds = array<i64: 64, 3>}, {pipeline_mode = #tpu.pipeline_mode<synchronous>, transform_indices = @transform_4, window_bounds = array<i64: 3, 32>}, {pipeline_mode = #tpu.pipeline_mode<synchronous>, transform_indices = @transform_5, window_bounds = array<i64: 32, 32>}, {pipeline_mode = #tpu.pipeline_mode<synchronous>, transform_indices = @transform_6, window_bounds = array<i64: 32, 3>}, {pipeline_mode = #tpu.pipeline_mode<synchronous>, transform_indices = @transform_7, window_bounds = array<i64: 7, 9>}, {pipeline_mode = #tpu.pipeline_mode<synchronous>, transform_indices = @transform_8, window_bounds = array<i64: 1, 64>}, {pipeline_mode = #tpu.pipeline_mode<synchronous>, transform_indices = @transform_9, window_bounds = array<i64: 1, 64>}, {pipeline_mode = #tpu.pipeline_mode<synchronous>, transform_indices = @transform_10, window_bounds = array<i64: 1, 3>}, {pipeline_mode = #tpu.pipeline_mode<synchronous>, transform_indices = @transform_11, window_bounds = array<i64: 1, 32>}, {pipeline_mode = #tpu.pipeline_mode<synchronous>, transform_indices = @transform_12, window_bounds = array<i64: 1, 32>}, {pipeline_mode = #tpu.pipeline_mode<synchronous>, transform_indices = @transform_13, window_bounds = array<i64: 1, 3>}, {pipeline_mode = #tpu.pipeline_mode<synchronous>, transform_indices = @transform_14, window_bounds = array<i64: 1, 9>}, {transform_indices = @transform_15, window_bounds = array<i64: 16, 15>}]} {
    %c0 = arith.constant 0 : index
    %c0_0 = arith.constant 0 : index
    %0 = vector.load %arg1[%c0, %c0_0] : memref<16x7xf32, #tpu.memory_space<vmem>>, vector<16x7xf32>
    %1 = vector.extract_strided_slice %0 {offsets = [0, 0], sizes = [16, 3], strides = [1, 1]} : vector<16x7xf32> to vector<16x3xf32>
    %c0_1 = arith.constant 0 : index
    %c0_2 = arith.constant 0 : index
    %2 = vector.load %arg2[%c0_1, %c0_2] : memref<3x64xbf16, #tpu.memory_space<vmem>>, vector<3x64xbf16>
    %c0_3 = arith.constant 0 : index
    %c0_4 = arith.constant 0 : index
    %3 = vector.load %arg9[%c0_3, %c0_4] : memref<1x64xf32, #tpu.memory_space<vmem>>, vector<1x64xf32>
    %4 = arith.truncf %1 : vector<16x3xf32> to vector<16x3xbf16>
    %cst = arith.constant dense<0.000000e+00> : vector<16x64xf32>
    %5 = tpu.matmul %4, %2, %cst {dimension_numbers = #tpu.dot_dimension_numbers<[1], [0], [0], [1], [0, 0, 1, 1], [], []>} : vector<16x3xbf16>, vector<3x64xbf16>, vector<16x64xf32> -> vector<16x64xf32>
    %6 = vector.broadcast %3 : vector<1x64xf32> to vector<16x64xf32>
    %7 = arith.addf %5, %6 : vector<16x64xf32>
    %cst_5 = arith.constant 0.000000e+00 : f32
    %8 = vector.broadcast %cst_5 : f32 to vector<16x64xf32>
    %9 = arith.maximumf %7, %8 : vector<16x64xf32>
    %c0_6 = arith.constant 0 : index
    %c0_7 = arith.constant 0 : index
    %10 = vector.load %arg3[%c0_6, %c0_7] : memref<64x64xbf16, #tpu.memory_space<vmem>>, vector<64x64xbf16>
    %c0_8 = arith.constant 0 : index
    %c0_9 = arith.constant 0 : index
    %11 = vector.load %arg10[%c0_8, %c0_9] : memref<1x64xf32, #tpu.memory_space<vmem>>, vector<1x64xf32>
    %12 = arith.truncf %9 : vector<16x64xf32> to vector<16x64xbf16>
    %cst_10 = arith.constant dense<0.000000e+00> : vector<16x64xf32>
    %13 = tpu.matmul %12, %10, %cst_10 {dimension_numbers = #tpu.dot_dimension_numbers<[1], [0], [0], [1], [0, 0, 1, 1], [], []>} : vector<16x64xbf16>, vector<64x64xbf16>, vector<16x64xf32> -> vector<16x64xf32>
    %14 = vector.broadcast %11 : vector<1x64xf32> to vector<16x64xf32>
    %15 = arith.addf %13, %14 : vector<16x64xf32>
    %cst_11 = arith.constant 0.000000e+00 : f32
    %16 = vector.broadcast %cst_11 : f32 to vector<16x64xf32>
    %17 = arith.maximumf %15, %16 : vector<16x64xf32>
    %c0_12 = arith.constant 0 : index
    %c0_13 = arith.constant 0 : index
    %18 = vector.load %arg4[%c0_12, %c0_13] : memref<64x3xbf16, #tpu.memory_space<vmem>>, vector<64x3xbf16>
    %c0_14 = arith.constant 0 : index
    %c0_15 = arith.constant 0 : index
    %19 = vector.load %arg11[%c0_14, %c0_15] : memref<1x3xf32, #tpu.memory_space<vmem>>, vector<1x3xf32>
    %20 = arith.truncf %17 : vector<16x64xf32> to vector<16x64xbf16>
    %cst_16 = arith.constant dense<0.000000e+00> : vector<16x3xf32>
    %21 = tpu.matmul %20, %18, %cst_16 {dimension_numbers = #tpu.dot_dimension_numbers<[1], [0], [0], [1], [0, 0, 1, 1], [], []>} : vector<16x64xbf16>, vector<64x3xbf16>, vector<16x3xf32> -> vector<16x3xf32>
    %22 = vector.broadcast %19 : vector<1x3xf32> to vector<16x3xf32>
    %23 = arith.addf %21, %22 : vector<16x3xf32>
    %24 = vector.extract_strided_slice %0 {offsets = [0, 0], sizes = [16, 3], strides = [1, 1]} : vector<16x7xf32> to vector<16x3xf32>
    %c0_17 = arith.constant 0 : index
    %c0_18 = arith.constant 0 : index
    %25 = vector.load %arg5[%c0_17, %c0_18] : memref<3x32xbf16, #tpu.memory_space<vmem>>, vector<3x32xbf16>
    %c0_19 = arith.constant 0 : index
    %c0_20 = arith.constant 0 : index
    %26 = vector.load %arg12[%c0_19, %c0_20] : memref<1x32xf32, #tpu.memory_space<vmem>>, vector<1x32xf32>
    %27 = arith.truncf %24 : vector<16x3xf32> to vector<16x3xbf16>
    %cst_21 = arith.constant dense<0.000000e+00> : vector<16x32xf32>
    %28 = tpu.matmul %27, %25, %cst_21 {dimension_numbers = #tpu.dot_dimension_numbers<[1], [0], [0], [1], [0, 0, 1, 1], [], []>} : vector<16x3xbf16>, vector<3x32xbf16>, vector<16x32xf32> -> vector<16x32xf32>
    %29 = vector.broadcast %26 : vector<1x32xf32> to vector<16x32xf32>
    %30 = arith.addf %28, %29 : vector<16x32xf32>
    %cst_22 = arith.constant 0.000000e+00 : f32
    %31 = vector.broadcast %cst_22 : f32 to vector<16x32xf32>
    %32 = arith.maximumf %30, %31 : vector<16x32xf32>
    %c0_23 = arith.constant 0 : index
    %c0_24 = arith.constant 0 : index
    %33 = vector.load %arg6[%c0_23, %c0_24] : memref<32x32xbf16, #tpu.memory_space<vmem>>, vector<32x32xbf16>
    %c0_25 = arith.constant 0 : index
    %c0_26 = arith.constant 0 : index
    %34 = vector.load %arg13[%c0_25, %c0_26] : memref<1x32xf32, #tpu.memory_space<vmem>>, vector<1x32xf32>
    %35 = arith.truncf %32 : vector<16x32xf32> to vector<16x32xbf16>
    %cst_27 = arith.constant dense<0.000000e+00> : vector<16x32xf32>
    %36 = tpu.matmul %35, %33, %cst_27 {dimension_numbers = #tpu.dot_dimension_numbers<[1], [0], [0], [1], [0, 0, 1, 1], [], []>} : vector<16x32xbf16>, vector<32x32xbf16>, vector<16x32xf32> -> vector<16x32xf32>
    %37 = vector.broadcast %34 : vector<1x32xf32> to vector<16x32xf32>
    %38 = arith.addf %36, %37 : vector<16x32xf32>
    %cst_28 = arith.constant 0.000000e+00 : f32
    %39 = vector.broadcast %cst_28 : f32 to vector<16x32xf32>
    %40 = arith.maximumf %38, %39 : vector<16x32xf32>
    %c0_29 = arith.constant 0 : index
    %c0_30 = arith.constant 0 : index
    %41 = vector.load %arg7[%c0_29, %c0_30] : memref<32x3xbf16, #tpu.memory_space<vmem>>, vector<32x3xbf16>
    %c0_31 = arith.constant 0 : index
    %c0_32 = arith.constant 0 : index
    %42 = vector.load %arg14[%c0_31, %c0_32] : memref<1x3xf32, #tpu.memory_space<vmem>>, vector<1x3xf32>
    %43 = arith.truncf %40 : vector<16x32xf32> to vector<16x32xbf16>
    %cst_33 = arith.constant dense<0.000000e+00> : vector<16x3xf32>
    %44 = tpu.matmul %43, %41, %cst_33 {dimension_numbers = #tpu.dot_dimension_numbers<[1], [0], [0], [1], [0, 0, 1, 1], [], []>} : vector<16x32xbf16>, vector<32x3xbf16>, vector<16x3xf32> -> vector<16x3xf32>
    %45 = vector.broadcast %42 : vector<1x3xf32> to vector<16x3xf32>
    %46 = arith.addf %44, %45 : vector<16x3xf32>
    %c0_34 = arith.constant 0 : index
    %c0_35 = arith.constant 0 : index
    %47 = vector.load %arg8[%c0_34, %c0_35] : memref<7x9xbf16, #tpu.memory_space<vmem>>, vector<7x9xbf16>
    %c0_36 = arith.constant 0 : index
    %c0_37 = arith.constant 0 : index
    %48 = vector.load %arg15[%c0_36, %c0_37] : memref<1x9xf32, #tpu.memory_space<vmem>>, vector<1x9xf32>
    %49 = arith.truncf %0 : vector<16x7xf32> to vector<16x7xbf16>
    %cst_38 = arith.constant dense<0.000000e+00> : vector<16x9xf32>
    %50 = tpu.matmul %49, %47, %cst_38 {dimension_numbers = #tpu.dot_dimension_numbers<[1], [0], [0], [1], [0, 0, 1, 1], [], []>} : vector<16x7xbf16>, vector<7x9xbf16>, vector<16x9xf32> -> vector<16x9xf32>
    %51 = vector.broadcast %48 : vector<1x9xf32> to vector<16x9xf32>
    %52 = arith.addf %50, %51 : vector<16x9xf32>
    %53 = tpu.concatenate %23, %46, %52 in 1 : vector<16x3xf32>, vector<16x3xf32>, vector<16x9xf32> -> vector<16x15xf32>
    %c0_39 = arith.constant 0 : index
    %c0_40 = arith.constant 0 : index
    %54 = vector.load %arg16[%c0_39, %c0_40] : memref<16x15xf32, #tpu.memory_space<vmem>>, vector<16x15xf32>
    tpu.vector_store %arg16[%c0_39, %c0_40], %53 {strides = array<i32>} : memref<16x15xf32, #tpu.memory_space<vmem>>, vector<16x15xf32>,
    return
  }
  func.func @transform_0(%arg0: i32) -> (i32, i32) {
    %c0_i32 = arith.constant 0 : i32
    %c0_i32_0 = arith.constant 0 : i32
    return %arg0, %c0_i32 : i32, i32
  }
  func.func @transform_1(%arg0: i32) -> (i32, i32) {
    %c0_i32 = arith.constant 0 : i32
    %c0_i32_0 = arith.constant 0 : i32
    %c0_i32_1 = arith.constant 0 : i32
    return %c0_i32, %c0_i32_0 : i32, i32
  }
  func.func @transform_2(%arg0: i32) -> (i32, i32) {
    %c0_i32 = arith.constant 0 : i32
    %c0_i32_0 = arith.constant 0 : i32
    %c0_i32_1 = arith.constant 0 : i32
    return %c0_i32, %c0_i32_0 : i32, i32
  }
  func.func @transform_3(%arg0: i32) -> (i32, i32) {
    %c0_i32 = arith.constant 0 : i32
    %c0_i32_0 = arith.constant 0 : i32
    %c0_i32_1 = arith.constant 0 : i32
    return %c0_i32, %c0_i32_0 : i32, i32
  }
  func.func @transform_4(%arg0: i32) -> (i32, i32) {
    %c0_i32 = arith.constant 0 : i32
    %c0_i32_0 = arith.constant 0 : i32
    %c0_i32_1 = arith.constant 0 : i32
    return %c0_i32, %c0_i32_0 : i32, i32
  }
  func.func @transform_5(%arg0: i32) -> (i32, i32) {
    %c0_i32 = arith.constant 0 : i32
    %c0_i32_0 = arith.constant 0 : i32
    %c0_i32_1 = arith.constant 0 : i32
    return %c0_i32, %c0_i32_0 : i32, i32
  }
  func.func @transform_6(%arg0: i32) -> (i32, i32) {
    %c0_i32 = arith.constant 0 : i32
    %c0_i32_0 = arith.constant 0 : i32
    %c0_i32_1 = arith.constant 0 : i32
    return %c0_i32, %c0_i32_0 : i32, i32
  }
  func.func @transform_7(%arg0: i32) -> (i32, i32) {
    %c0_i32 = arith.constant 0 : i32
    %c0_i32_0 = arith.constant 0 : i32
    %c0_i32_1 = arith.constant 0 : i32
    return %c0_i32, %c0_i32_0 : i32, i32
  }
  func.func @transform_8(%arg0: i32) -> (i32, i32) {
    %c0_i32 = arith.constant 0 : i32
    %c0_i32_0 = arith.constant 0 : i32
    %c0_i32_1 = arith.constant 0 : i32
    return %c0_i32, %c0_i32_0 : i32, i32
  }
  func.func @transform_9(%arg0: i32) -> (i32, i32) {
    %c0_i32 = arith.constant 0 : i32
    %c0_i32_0 = arith.constant 0 : i32
    %c0_i32_1 = arith.constant 0 : i32
    return %c0_i32, %c0_i32_0 : i32, i32
  }
  func.func @transform_10(%arg0: i32) -> (i32, i32) {
    %c0_i32 = arith.constant 0 : i32
    %c0_i32_0 = arith.constant 0 : i32
    %c0_i32_1 = arith.constant 0 : i32
    return %c0_i32, %c0_i32_0 : i32, i32
  }
  func.func @transform_11(%arg0: i32) -> (i32, i32) {
    %c0_i32 = arith.constant 0 : i32
    %c0_i32_0 = arith.constant 0 : i32
    %c0_i32_1 = arith.constant 0 : i32
    return %c0_i32, %c0_i32_0 : i32, i32
  }
  func.func @transform_12(%arg0: i32) -> (i32, i32) {
    %c0_i32 = arith.constant 0 : i32
    %c0_i32_0 = arith.constant 0 : i32
    %c0_i32_1 = arith.constant 0 : i32
    return %c0_i32, %c0_i32_0 : i32, i32
  }
  func.func @transform_13(%arg0: i32) -> (i32, i32) {
    %c0_i32 = arith.constant 0 : i32
    %c0_i32_0 = arith.constant 0 : i32
    %c0_i32_1 = arith.constant 0 : i32
    return %c0_i32, %c0_i32_0 : i32, i32
  }
  func.func @transform_14(%arg0: i32) -> (i32, i32) {
    %c0_i32 = arith.constant 0 : i32
    %c0_i32_0 = arith.constant 0 : i32
    %c0_i32_1 = arith.constant 0 : i32
    return %c0_i32, %c0_i32_0 : i32, i32
  }
  func.func @transform_15(%arg0: i32) -> (i32, i32) {
    %c0_i32 = arith.constant 0 : i32
    %c0_i32_0 = arith.constant 0 : i32
    return %arg0, %c0_i32 : i32, i32
  }
}

module attributes {stable_mosaic.version = 11 : i64} {
  func.func @_fused_net_kernel(%arg0: i32, %arg1: memref<48x4xf32, #tpu.memory_space<vmem>>, %arg2: memref<4x64xbf16, #tpu.memory_space<vmem>>, %arg3: memref<64x64xbf16, #tpu.memory_space<vmem>>, %arg4: memref<64x7xbf16, #tpu.memory_space<vmem>>, %arg5: memref<1x7xf32, #tpu.memory_space<vmem>>, %arg6: memref<1x64xf32, #tpu.memory_space<vmem>>, %arg7: memref<1x64xf32, #tpu.memory_space<vmem>>, %arg8: memref<1x7xf32, #tpu.memory_space<vmem>>, %arg9: memref<1x1xf32, #tpu.memory_space<vmem>>, %arg10: memref<48x1xf32, #tpu.memory_space<vmem>>) attributes {dimension_semantics = [#tpu.dimension_semantics<parallel>], iteration_bounds = array<i64: 1>, scalar_prefetch = 0 : i64, scratch_operands = 0 : i64, tpu.core_type = #tpu.core_type<tc>, window_params = [{transform_indices = @transform_0, window_bounds = array<i64: 48, 4>}, {pipeline_mode = #tpu.pipeline_mode<synchronous>, transform_indices = @transform_1, window_bounds = array<i64: 4, 64>}, {pipeline_mode = #tpu.pipeline_mode<synchronous>, transform_indices = @transform_2, window_bounds = array<i64: 64, 64>}, {pipeline_mode = #tpu.pipeline_mode<synchronous>, transform_indices = @transform_3, window_bounds = array<i64: 64, 7>}, {pipeline_mode = #tpu.pipeline_mode<synchronous>, transform_indices = @transform_4, window_bounds = array<i64: 1, 7>}, {pipeline_mode = #tpu.pipeline_mode<synchronous>, transform_indices = @transform_5, window_bounds = array<i64: 1, 64>}, {pipeline_mode = #tpu.pipeline_mode<synchronous>, transform_indices = @transform_6, window_bounds = array<i64: 1, 64>}, {pipeline_mode = #tpu.pipeline_mode<synchronous>, transform_indices = @transform_7, window_bounds = array<i64: 1, 7>}, {pipeline_mode = #tpu.pipeline_mode<synchronous>, transform_indices = @transform_8, window_bounds = array<i64: 1, 1>}, {transform_indices = @transform_9, window_bounds = array<i64: 48, 1>}]} {
    %c0 = arith.constant 0 : index
    %c0_0 = arith.constant 0 : index
    %0 = vector.load %arg1[%c0, %c0_0] : memref<48x4xf32, #tpu.memory_space<vmem>>, vector<48x4xf32>
    %c0_1 = arith.constant 0 : index
    %c0_2 = arith.constant 0 : index
    %1 = vector.load %arg2[%c0_1, %c0_2] : memref<4x64xbf16, #tpu.memory_space<vmem>>, vector<4x64xbf16>
    %c0_3 = arith.constant 0 : index
    %c0_4 = arith.constant 0 : index
    %2 = vector.load %arg6[%c0_3, %c0_4] : memref<1x64xf32, #tpu.memory_space<vmem>>, vector<1x64xf32>
    %3 = arith.truncf %0 : vector<48x4xf32> to vector<48x4xbf16>
    %cst = arith.constant dense<0.000000e+00> : vector<48x64xf32>
    %4 = tpu.matmul %3, %1, %cst {dimension_numbers = #tpu.dot_dimension_numbers<[1], [0], [0], [1], [0, 0, 1, 1], [], []>} : vector<48x4xbf16>, vector<4x64xbf16>, vector<48x64xf32> -> vector<48x64xf32>
    %5 = vector.broadcast %2 : vector<1x64xf32> to vector<48x64xf32>
    %6 = arith.addf %4, %5 : vector<48x64xf32>
    %cst_5 = arith.constant 0.000000e+00 : f32
    %7 = vector.broadcast %cst_5 : f32 to vector<48x64xf32>
    %8 = arith.maximumf %6, %7 : vector<48x64xf32>
    %c0_6 = arith.constant 0 : index
    %c0_7 = arith.constant 0 : index
    %9 = vector.load %arg3[%c0_6, %c0_7] : memref<64x64xbf16, #tpu.memory_space<vmem>>, vector<64x64xbf16>
    %c0_8 = arith.constant 0 : index
    %c0_9 = arith.constant 0 : index
    %10 = vector.load %arg7[%c0_8, %c0_9] : memref<1x64xf32, #tpu.memory_space<vmem>>, vector<1x64xf32>
    %11 = arith.truncf %8 : vector<48x64xf32> to vector<48x64xbf16>
    %cst_10 = arith.constant dense<0.000000e+00> : vector<48x64xf32>
    %12 = tpu.matmul %11, %9, %cst_10 {dimension_numbers = #tpu.dot_dimension_numbers<[1], [0], [0], [1], [0, 0, 1, 1], [], []>} : vector<48x64xbf16>, vector<64x64xbf16>, vector<48x64xf32> -> vector<48x64xf32>
    %13 = vector.broadcast %10 : vector<1x64xf32> to vector<48x64xf32>
    %14 = arith.addf %12, %13 : vector<48x64xf32>
    %cst_11 = arith.constant 0.000000e+00 : f32
    %15 = vector.broadcast %cst_11 : f32 to vector<48x64xf32>
    %16 = arith.maximumf %14, %15 : vector<48x64xf32>
    %c0_12 = arith.constant 0 : index
    %c0_13 = arith.constant 0 : index
    %17 = vector.load %arg4[%c0_12, %c0_13] : memref<64x7xbf16, #tpu.memory_space<vmem>>, vector<64x7xbf16>
    %c0_14 = arith.constant 0 : index
    %c0_15 = arith.constant 0 : index
    %18 = vector.load %arg8[%c0_14, %c0_15] : memref<1x7xf32, #tpu.memory_space<vmem>>, vector<1x7xf32>
    %19 = arith.truncf %16 : vector<48x64xf32> to vector<48x64xbf16>
    %cst_16 = arith.constant dense<0.000000e+00> : vector<48x7xf32>
    %20 = tpu.matmul %19, %17, %cst_16 {dimension_numbers = #tpu.dot_dimension_numbers<[1], [0], [0], [1], [0, 0, 1, 1], [], []>} : vector<48x64xbf16>, vector<64x7xbf16>, vector<48x7xf32> -> vector<48x7xf32>
    %21 = vector.broadcast %18 : vector<1x7xf32> to vector<48x7xf32>
    %22 = arith.addf %20, %21 : vector<48x7xf32>
    %cst_17 = arith.constant 0.000000e+00 : f32
    %23 = vector.broadcast %cst_17 : f32 to vector<48x7xf32>
    %24 = arith.maximumf %22, %23 : vector<48x7xf32>
    %c0_18 = arith.constant 0 : index
    %c0_19 = arith.constant 0 : index
    %25 = vector.load %arg5[%c0_18, %c0_19] : memref<1x7xf32, #tpu.memory_space<vmem>>, vector<1x7xf32>
    %c0_20 = arith.constant 0 : index
    %c0_21 = arith.constant 0 : index
    %26 = vector.load %arg9[%c0_20, %c0_21] : memref<1x1xf32, #tpu.memory_space<vmem>>, vector<1x1xf32>
    %27 = vector.broadcast %25 : vector<1x7xf32> to vector<48x7xf32>
    %28 = arith.mulf %24, %27 : vector<48x7xf32>
    %cst_22 = arith.constant dense<0.000000e+00> : vector<48xf32>
    %29 = vector.multi_reduction <add>, %28, %cst_22 [1] : vector<48x7xf32> to vector<48xf32>
    %30 = vector.shape_cast %29 : vector<48xf32> to vector<48x1xf32>
    %31 = vector.broadcast %26 : vector<1x1xf32> to vector<48x1xf32>
    %32 = arith.addf %30, %31 : vector<48x1xf32>
    %c0_23 = arith.constant 0 : index
    %c0_24 = arith.constant 0 : index
    %33 = vector.load %arg10[%c0_23, %c0_24] : memref<48x1xf32, #tpu.memory_space<vmem>>, vector<48x1xf32>
    tpu.vector_store %arg10[%c0_23, %c0_24], %32 {strides = array<i32>} : memref<48x1xf32, #tpu.memory_space<vmem>>, vector<48x1xf32>,
    return
  }
  func.func @transform_0(%arg0: i32) -> (i32, i32) {
    %c0_i32 = arith.constant 0 : i32
    %c0_i32_0 = arith.constant 0 : i32
    return %arg0, %c0_i32 : i32, i32
  }
  func.func @transform_1(%arg0: i32) -> (i32, i32) {
    %c0_i32 = arith.constant 0 : i32
    %c0_i32_0 = arith.constant 0 : i32
    %c0_i32_1 = arith.constant 0 : i32
    return %c0_i32, %c0_i32_0 : i32, i32
  }
  func.func @transform_2(%arg0: i32) -> (i32, i32) {
    %c0_i32 = arith.constant 0 : i32
    %c0_i32_0 = arith.constant 0 : i32
    %c0_i32_1 = arith.constant 0 : i32
    return %c0_i32, %c0_i32_0 : i32, i32
  }
  func.func @transform_3(%arg0: i32) -> (i32, i32) {
    %c0_i32 = arith.constant 0 : i32
    %c0_i32_0 = arith.constant 0 : i32
    %c0_i32_1 = arith.constant 0 : i32
    return %c0_i32, %c0_i32_0 : i32, i32
  }
  func.func @transform_4(%arg0: i32) -> (i32, i32) {
    %c0_i32 = arith.constant 0 : i32
    %c0_i32_0 = arith.constant 0 : i32
    %c0_i32_1 = arith.constant 0 : i32
    return %c0_i32, %c0_i32_0 : i32, i32
  }
  func.func @transform_5(%arg0: i32) -> (i32, i32) {
    %c0_i32 = arith.constant 0 : i32
    %c0_i32_0 = arith.constant 0 : i32
    %c0_i32_1 = arith.constant 0 : i32
    return %c0_i32, %c0_i32_0 : i32, i32
  }
  func.func @transform_6(%arg0: i32) -> (i32, i32) {
    %c0_i32 = arith.constant 0 : i32
    %c0_i32_0 = arith.constant 0 : i32
    %c0_i32_1 = arith.constant 0 : i32
    return %c0_i32, %c0_i32_0 : i32, i32
  }
  func.func @transform_7(%arg0: i32) -> (i32, i32) {
    %c0_i32 = arith.constant 0 : i32
    %c0_i32_0 = arith.constant 0 : i32
    %c0_i32_1 = arith.constant 0 : i32
    return %c0_i32, %c0_i32_0 : i32, i32
  }
  func.func @transform_8(%arg0: i32) -> (i32, i32) {
    %c0_i32 = arith.constant 0 : i32
    %c0_i32_0 = arith.constant 0 : i32
    %c0_i32_1 = arith.constant 0 : i32
    return %c0_i32, %c0_i32_0 : i32, i32
  }
  func.func @transform_9(%arg0: i32) -> (i32, i32) {
    %c0_i32 = arith.constant 0 : i32
    %c0_i32_0 = arith.constant 0 : i32
    return %arg0, %c0_i32 : i32, i32
  }
}

module attributes {stable_mosaic.version = 11 : i64} {
  func.func @_fused_net_kernel(%arg0: i32, %arg1: memref<16x7xf32, #tpu.memory_space<vmem>>, %arg2: memref<7x64xbf16, #tpu.memory_space<vmem>>, %arg3: memref<64x64xbf16, #tpu.memory_space<vmem>>, %arg4: memref<64x11xbf16, #tpu.memory_space<vmem>>, %arg5: memref<11x18xbf16, #tpu.memory_space<vmem>>, %arg6: memref<1x64xf32, #tpu.memory_space<vmem>>, %arg7: memref<1x64xf32, #tpu.memory_space<vmem>>, %arg8: memref<1x11xf32, #tpu.memory_space<vmem>>, %arg9: memref<1x18xf32, #tpu.memory_space<vmem>>, %arg10: memref<16x29xf32, #tpu.memory_space<vmem>>) attributes {dimension_semantics = [#tpu.dimension_semantics<parallel>], iteration_bounds = array<i64: 1>, scalar_prefetch = 0 : i64, scratch_operands = 0 : i64, tpu.core_type = #tpu.core_type<tc>, window_params = [{transform_indices = @transform_0, window_bounds = array<i64: 16, 7>}, {pipeline_mode = #tpu.pipeline_mode<synchronous>, transform_indices = @transform_1, window_bounds = array<i64: 7, 64>}, {pipeline_mode = #tpu.pipeline_mode<synchronous>, transform_indices = @transform_2, window_bounds = array<i64: 64, 64>}, {pipeline_mode = #tpu.pipeline_mode<synchronous>, transform_indices = @transform_3, window_bounds = array<i64: 64, 11>}, {pipeline_mode = #tpu.pipeline_mode<synchronous>, transform_indices = @transform_4, window_bounds = array<i64: 11, 18>}, {pipeline_mode = #tpu.pipeline_mode<synchronous>, transform_indices = @transform_5, window_bounds = array<i64: 1, 64>}, {pipeline_mode = #tpu.pipeline_mode<synchronous>, transform_indices = @transform_6, window_bounds = array<i64: 1, 64>}, {pipeline_mode = #tpu.pipeline_mode<synchronous>, transform_indices = @transform_7, window_bounds = array<i64: 1, 11>}, {pipeline_mode = #tpu.pipeline_mode<synchronous>, transform_indices = @transform_8, window_bounds = array<i64: 1, 18>}, {transform_indices = @transform_9, window_bounds = array<i64: 16, 29>}]} {
    %c0 = arith.constant 0 : index
    %c0_0 = arith.constant 0 : index
    %0 = vector.load %arg1[%c0, %c0_0] : memref<16x7xf32, #tpu.memory_space<vmem>>, vector<16x7xf32>
    %c0_1 = arith.constant 0 : index
    %c0_2 = arith.constant 0 : index
    %1 = vector.load %arg2[%c0_1, %c0_2] : memref<7x64xbf16, #tpu.memory_space<vmem>>, vector<7x64xbf16>
    %c0_3 = arith.constant 0 : index
    %c0_4 = arith.constant 0 : index
    %2 = vector.load %arg6[%c0_3, %c0_4] : memref<1x64xf32, #tpu.memory_space<vmem>>, vector<1x64xf32>
    %3 = arith.truncf %0 : vector<16x7xf32> to vector<16x7xbf16>
    %cst = arith.constant dense<0.000000e+00> : vector<16x64xf32>
    %4 = tpu.matmul %3, %1, %cst {dimension_numbers = #tpu.dot_dimension_numbers<[1], [0], [0], [1], [0, 0, 1, 1], [], []>} : vector<16x7xbf16>, vector<7x64xbf16>, vector<16x64xf32> -> vector<16x64xf32>
    %5 = vector.broadcast %2 : vector<1x64xf32> to vector<16x64xf32>
    %6 = arith.addf %4, %5 : vector<16x64xf32>
    %cst_5 = arith.constant 0.000000e+00 : f32
    %7 = vector.broadcast %cst_5 : f32 to vector<16x64xf32>
    %8 = arith.maximumf %6, %7 : vector<16x64xf32>
    %c0_6 = arith.constant 0 : index
    %c0_7 = arith.constant 0 : index
    %9 = vector.load %arg3[%c0_6, %c0_7] : memref<64x64xbf16, #tpu.memory_space<vmem>>, vector<64x64xbf16>
    %c0_8 = arith.constant 0 : index
    %c0_9 = arith.constant 0 : index
    %10 = vector.load %arg7[%c0_8, %c0_9] : memref<1x64xf32, #tpu.memory_space<vmem>>, vector<1x64xf32>
    %11 = arith.truncf %8 : vector<16x64xf32> to vector<16x64xbf16>
    %cst_10 = arith.constant dense<0.000000e+00> : vector<16x64xf32>
    %12 = tpu.matmul %11, %9, %cst_10 {dimension_numbers = #tpu.dot_dimension_numbers<[1], [0], [0], [1], [0, 0, 1, 1], [], []>} : vector<16x64xbf16>, vector<64x64xbf16>, vector<16x64xf32> -> vector<16x64xf32>
    %13 = vector.broadcast %10 : vector<1x64xf32> to vector<16x64xf32>
    %14 = arith.addf %12, %13 : vector<16x64xf32>
    %cst_11 = arith.constant 0.000000e+00 : f32
    %15 = vector.broadcast %cst_11 : f32 to vector<16x64xf32>
    %16 = arith.maximumf %14, %15 : vector<16x64xf32>
    %c0_12 = arith.constant 0 : index
    %c0_13 = arith.constant 0 : index
    %17 = vector.load %arg4[%c0_12, %c0_13] : memref<64x11xbf16, #tpu.memory_space<vmem>>, vector<64x11xbf16>
    %c0_14 = arith.constant 0 : index
    %c0_15 = arith.constant 0 : index
    %18 = vector.load %arg8[%c0_14, %c0_15] : memref<1x11xf32, #tpu.memory_space<vmem>>, vector<1x11xf32>
    %19 = arith.truncf %16 : vector<16x64xf32> to vector<16x64xbf16>
    %cst_16 = arith.constant dense<0.000000e+00> : vector<16x11xf32>
    %20 = tpu.matmul %19, %17, %cst_16 {dimension_numbers = #tpu.dot_dimension_numbers<[1], [0], [0], [1], [0, 0, 1, 1], [], []>} : vector<16x64xbf16>, vector<64x11xbf16>, vector<16x11xf32> -> vector<16x11xf32>
    %21 = vector.broadcast %18 : vector<1x11xf32> to vector<16x11xf32>
    %22 = arith.addf %20, %21 : vector<16x11xf32>
    %cst_17 = arith.constant 0.000000e+00 : f32
    %23 = vector.broadcast %cst_17 : f32 to vector<16x11xf32>
    %24 = arith.maximumf %22, %23 : vector<16x11xf32>
    %c0_18 = arith.constant 0 : index
    %c0_19 = arith.constant 0 : index
    %25 = vector.load %arg5[%c0_18, %c0_19] : memref<11x18xbf16, #tpu.memory_space<vmem>>, vector<11x18xbf16>
    %c0_20 = arith.constant 0 : index
    %c0_21 = arith.constant 0 : index
    %26 = vector.load %arg9[%c0_20, %c0_21] : memref<1x18xf32, #tpu.memory_space<vmem>>, vector<1x18xf32>
    %27 = arith.truncf %24 : vector<16x11xf32> to vector<16x11xbf16>
    %cst_22 = arith.constant dense<0.000000e+00> : vector<16x18xf32>
    %28 = tpu.matmul %27, %25, %cst_22 {dimension_numbers = #tpu.dot_dimension_numbers<[1], [0], [0], [1], [0, 0, 1, 1], [], []>} : vector<16x11xbf16>, vector<11x18xbf16>, vector<16x18xf32> -> vector<16x18xf32>
    %29 = vector.broadcast %26 : vector<1x18xf32> to vector<16x18xf32>
    %30 = arith.addf %28, %29 : vector<16x18xf32>
    %31 = tpu.concatenate %24, %30 in 1 : vector<16x11xf32>, vector<16x18xf32> -> vector<16x29xf32>
    %c0_23 = arith.constant 0 : index
    %c0_24 = arith.constant 0 : index
    %32 = vector.load %arg10[%c0_23, %c0_24] : memref<16x29xf32, #tpu.memory_space<vmem>>, vector<16x29xf32>
    tpu.vector_store %arg10[%c0_23, %c0_24], %31 {strides = array<i32>} : memref<16x29xf32, #tpu.memory_space<vmem>>, vector<16x29xf32>,
    return
  }
  func.func @transform_0(%arg0: i32) -> (i32, i32) {
    %c0_i32 = arith.constant 0 : i32
    %c0_i32_0 = arith.constant 0 : i32
    return %arg0, %c0_i32 : i32, i32
  }
  func.func @transform_1(%arg0: i32) -> (i32, i32) {
    %c0_i32 = arith.constant 0 : i32
    %c0_i32_0 = arith.constant 0 : i32
    %c0_i32_1 = arith.constant 0 : i32
    return %c0_i32, %c0_i32_0 : i32, i32
  }
  func.func @transform_2(%arg0: i32) -> (i32, i32) {
    %c0_i32 = arith.constant 0 : i32
    %c0_i32_0 = arith.constant 0 : i32
    %c0_i32_1 = arith.constant 0 : i32
    return %c0_i32, %c0_i32_0 : i32, i32
  }
  func.func @transform_3(%arg0: i32) -> (i32, i32) {
    %c0_i32 = arith.constant 0 : i32
    %c0_i32_0 = arith.constant 0 : i32
    %c0_i32_1 = arith.constant 0 : i32
    return %c0_i32, %c0_i32_0 : i32, i32
  }
  func.func @transform_4(%arg0: i32) -> (i32, i32) {
    %c0_i32 = arith.constant 0 : i32
    %c0_i32_0 = arith.constant 0 : i32
    %c0_i32_1 = arith.constant 0 : i32
    return %c0_i32, %c0_i32_0 : i32, i32
  }
  func.func @transform_5(%arg0: i32) -> (i32, i32) {
    %c0_i32 = arith.constant 0 : i32
    %c0_i32_0 = arith.constant 0 : i32
    %c0_i32_1 = arith.constant 0 : i32
    return %c0_i32, %c0_i32_0 : i32, i32
  }
  func.func @transform_6(%arg0: i32) -> (i32, i32) {
    %c0_i32 = arith.constant 0 : i32
    %c0_i32_0 = arith.constant 0 : i32
    %c0_i32_1 = arith.constant 0 : i32
    return %c0_i32, %c0_i32_0 : i32, i32
  }
  func.func @transform_7(%arg0: i32) -> (i32, i32) {
    %c0_i32 = arith.constant 0 : i32
    %c0_i32_0 = arith.constant 0 : i32
    %c0_i32_1 = arith.constant 0 : i32
    return %c0_i32, %c0_i32_0 : i32, i32
  }
  func.func @transform_8(%arg0: i32) -> (i32, i32) {
    %c0_i32 = arith.constant 0 : i32
    %c0_i32_0 = arith.constant 0 : i32
    %c0_i32_1 = arith.constant 0 : i32
    return %c0_i32, %c0_i32_0 : i32, i32
  }
  func.func @transform_9(%arg0: i32) -> (i32, i32) {
    %c0_i32 = arith.constant 0 : i32
    %c0_i32_0 = arith.constant 0 : i32
    return %arg0, %c0_i32 : i32, i32
  }
}

module attributes {stable_mosaic.version = 11 : i64} {
  func.func @_fused_net_kernel(%arg0: i32, %arg1: memref<48x14xf32, #tpu.memory_space<vmem>>, %arg2: memref<14x32xbf16, #tpu.memory_space<vmem>>, %arg3: memref<32x32xbf16, #tpu.memory_space<vmem>>, %arg4: memref<32x7xbf16, #tpu.memory_space<vmem>>, %arg5: memref<1x7xf32, #tpu.memory_space<vmem>>, %arg6: memref<1x32xf32, #tpu.memory_space<vmem>>, %arg7: memref<1x32xf32, #tpu.memory_space<vmem>>, %arg8: memref<1x7xf32, #tpu.memory_space<vmem>>, %arg9: memref<1x1xf32, #tpu.memory_space<vmem>>, %arg10: memref<48x1xf32, #tpu.memory_space<vmem>>) attributes {dimension_semantics = [#tpu.dimension_semantics<parallel>], iteration_bounds = array<i64: 1>, scalar_prefetch = 0 : i64, scratch_operands = 0 : i64, tpu.core_type = #tpu.core_type<tc>, window_params = [{transform_indices = @transform_0, window_bounds = array<i64: 48, 14>}, {pipeline_mode = #tpu.pipeline_mode<synchronous>, transform_indices = @transform_1, window_bounds = array<i64: 14, 32>}, {pipeline_mode = #tpu.pipeline_mode<synchronous>, transform_indices = @transform_2, window_bounds = array<i64: 32, 32>}, {pipeline_mode = #tpu.pipeline_mode<synchronous>, transform_indices = @transform_3, window_bounds = array<i64: 32, 7>}, {pipeline_mode = #tpu.pipeline_mode<synchronous>, transform_indices = @transform_4, window_bounds = array<i64: 1, 7>}, {pipeline_mode = #tpu.pipeline_mode<synchronous>, transform_indices = @transform_5, window_bounds = array<i64: 1, 32>}, {pipeline_mode = #tpu.pipeline_mode<synchronous>, transform_indices = @transform_6, window_bounds = array<i64: 1, 32>}, {pipeline_mode = #tpu.pipeline_mode<synchronous>, transform_indices = @transform_7, window_bounds = array<i64: 1, 7>}, {pipeline_mode = #tpu.pipeline_mode<synchronous>, transform_indices = @transform_8, window_bounds = array<i64: 1, 1>}, {transform_indices = @transform_9, window_bounds = array<i64: 48, 1>}]} {
    %c0 = arith.constant 0 : index
    %c0_0 = arith.constant 0 : index
    %0 = vector.load %arg1[%c0, %c0_0] : memref<48x14xf32, #tpu.memory_space<vmem>>, vector<48x14xf32>
    %c0_1 = arith.constant 0 : index
    %c0_2 = arith.constant 0 : index
    %1 = vector.load %arg2[%c0_1, %c0_2] : memref<14x32xbf16, #tpu.memory_space<vmem>>, vector<14x32xbf16>
    %c0_3 = arith.constant 0 : index
    %c0_4 = arith.constant 0 : index
    %2 = vector.load %arg6[%c0_3, %c0_4] : memref<1x32xf32, #tpu.memory_space<vmem>>, vector<1x32xf32>
    %3 = arith.truncf %0 : vector<48x14xf32> to vector<48x14xbf16>
    %cst = arith.constant dense<0.000000e+00> : vector<48x32xf32>
    %4 = tpu.matmul %3, %1, %cst {dimension_numbers = #tpu.dot_dimension_numbers<[1], [0], [0], [1], [0, 0, 1, 1], [], []>} : vector<48x14xbf16>, vector<14x32xbf16>, vector<48x32xf32> -> vector<48x32xf32>
    %5 = vector.broadcast %2 : vector<1x32xf32> to vector<48x32xf32>
    %6 = arith.addf %4, %5 : vector<48x32xf32>
    %cst_5 = arith.constant 0.000000e+00 : f32
    %7 = vector.broadcast %cst_5 : f32 to vector<48x32xf32>
    %8 = arith.maximumf %6, %7 : vector<48x32xf32>
    %c0_6 = arith.constant 0 : index
    %c0_7 = arith.constant 0 : index
    %9 = vector.load %arg3[%c0_6, %c0_7] : memref<32x32xbf16, #tpu.memory_space<vmem>>, vector<32x32xbf16>
    %c0_8 = arith.constant 0 : index
    %c0_9 = arith.constant 0 : index
    %10 = vector.load %arg7[%c0_8, %c0_9] : memref<1x32xf32, #tpu.memory_space<vmem>>, vector<1x32xf32>
    %11 = arith.truncf %8 : vector<48x32xf32> to vector<48x32xbf16>
    %cst_10 = arith.constant dense<0.000000e+00> : vector<48x32xf32>
    %12 = tpu.matmul %11, %9, %cst_10 {dimension_numbers = #tpu.dot_dimension_numbers<[1], [0], [0], [1], [0, 0, 1, 1], [], []>} : vector<48x32xbf16>, vector<32x32xbf16>, vector<48x32xf32> -> vector<48x32xf32>
    %13 = vector.broadcast %10 : vector<1x32xf32> to vector<48x32xf32>
    %14 = arith.addf %12, %13 : vector<48x32xf32>
    %cst_11 = arith.constant 0.000000e+00 : f32
    %15 = vector.broadcast %cst_11 : f32 to vector<48x32xf32>
    %16 = arith.maximumf %14, %15 : vector<48x32xf32>
    %c0_12 = arith.constant 0 : index
    %c0_13 = arith.constant 0 : index
    %17 = vector.load %arg4[%c0_12, %c0_13] : memref<32x7xbf16, #tpu.memory_space<vmem>>, vector<32x7xbf16>
    %c0_14 = arith.constant 0 : index
    %c0_15 = arith.constant 0 : index
    %18 = vector.load %arg8[%c0_14, %c0_15] : memref<1x7xf32, #tpu.memory_space<vmem>>, vector<1x7xf32>
    %19 = arith.truncf %16 : vector<48x32xf32> to vector<48x32xbf16>
    %cst_16 = arith.constant dense<0.000000e+00> : vector<48x7xf32>
    %20 = tpu.matmul %19, %17, %cst_16 {dimension_numbers = #tpu.dot_dimension_numbers<[1], [0], [0], [1], [0, 0, 1, 1], [], []>} : vector<48x32xbf16>, vector<32x7xbf16>, vector<48x7xf32> -> vector<48x7xf32>
    %21 = vector.broadcast %18 : vector<1x7xf32> to vector<48x7xf32>
    %22 = arith.addf %20, %21 : vector<48x7xf32>
    %cst_17 = arith.constant 0.000000e+00 : f32
    %23 = vector.broadcast %cst_17 : f32 to vector<48x7xf32>
    %24 = arith.maximumf %22, %23 : vector<48x7xf32>
    %c0_18 = arith.constant 0 : index
    %c0_19 = arith.constant 0 : index
    %25 = vector.load %arg5[%c0_18, %c0_19] : memref<1x7xf32, #tpu.memory_space<vmem>>, vector<1x7xf32>
    %c0_20 = arith.constant 0 : index
    %c0_21 = arith.constant 0 : index
    %26 = vector.load %arg9[%c0_20, %c0_21] : memref<1x1xf32, #tpu.memory_space<vmem>>, vector<1x1xf32>
    %27 = vector.broadcast %25 : vector<1x7xf32> to vector<48x7xf32>
    %28 = arith.mulf %24, %27 : vector<48x7xf32>
    %cst_22 = arith.constant dense<0.000000e+00> : vector<48xf32>
    %29 = vector.multi_reduction <add>, %28, %cst_22 [1] : vector<48x7xf32> to vector<48xf32>
    %30 = vector.shape_cast %29 : vector<48xf32> to vector<48x1xf32>
    %31 = vector.broadcast %26 : vector<1x1xf32> to vector<48x1xf32>
    %32 = arith.addf %30, %31 : vector<48x1xf32>
    %c0_23 = arith.constant 0 : index
    %c0_24 = arith.constant 0 : index
    %33 = vector.load %arg10[%c0_23, %c0_24] : memref<48x1xf32, #tpu.memory_space<vmem>>, vector<48x1xf32>
    tpu.vector_store %arg10[%c0_23, %c0_24], %32 {strides = array<i32>} : memref<48x1xf32, #tpu.memory_space<vmem>>, vector<48x1xf32>,
    return
  }
  func.func @transform_0(%arg0: i32) -> (i32, i32) {
    %c0_i32 = arith.constant 0 : i32
    %c0_i32_0 = arith.constant 0 : i32
    return %arg0, %c0_i32 : i32, i32
  }
  func.func @transform_1(%arg0: i32) -> (i32, i32) {
    %c0_i32 = arith.constant 0 : i32
    %c0_i32_0 = arith.constant 0 : i32
    %c0_i32_1 = arith.constant 0 : i32
    return %c0_i32, %c0_i32_0 : i32, i32
  }
  func.func @transform_2(%arg0: i32) -> (i32, i32) {
    %c0_i32 = arith.constant 0 : i32
    %c0_i32_0 = arith.constant 0 : i32
    %c0_i32_1 = arith.constant 0 : i32
    return %c0_i32, %c0_i32_0 : i32, i32
  }
  func.func @transform_3(%arg0: i32) -> (i32, i32) {
    %c0_i32 = arith.constant 0 : i32
    %c0_i32_0 = arith.constant 0 : i32
    %c0_i32_1 = arith.constant 0 : i32
    return %c0_i32, %c0_i32_0 : i32, i32
  }
  func.func @transform_4(%arg0: i32) -> (i32, i32) {
    %c0_i32 = arith.constant 0 : i32
    %c0_i32_0 = arith.constant 0 : i32
    %c0_i32_1 = arith.constant 0 : i32
    return %c0_i32, %c0_i32_0 : i32, i32
  }
  func.func @transform_5(%arg0: i32) -> (i32, i32) {
    %c0_i32 = arith.constant 0 : i32
    %c0_i32_0 = arith.constant 0 : i32
    %c0_i32_1 = arith.constant 0 : i32
    return %c0_i32, %c0_i32_0 : i32, i32
  }
  func.func @transform_6(%arg0: i32) -> (i32, i32) {
    %c0_i32 = arith.constant 0 : i32
    %c0_i32_0 = arith.constant 0 : i32
    %c0_i32_1 = arith.constant 0 : i32
    return %c0_i32, %c0_i32_0 : i32, i32
  }
  func.func @transform_7(%arg0: i32) -> (i32, i32) {
    %c0_i32 = arith.constant 0 : i32
    %c0_i32_0 = arith.constant 0 : i32
    %c0_i32_1 = arith.constant 0 : i32
    return %c0_i32, %c0_i32_0 : i32, i32
  }
  func.func @transform_8(%arg0: i32) -> (i32, i32) {
    %c0_i32 = arith.constant 0 : i32
    %c0_i32_0 = arith.constant 0 : i32
    %c0_i32_1 = arith.constant 0 : i32
    return %c0_i32, %c0_i32_0 : i32, i32
  }
  func.func @transform_9(%arg0: i32) -> (i32, i32) {
    %c0_i32 = arith.constant 0 : i32
    %c0_i32_0 = arith.constant 0 : i32
    return %arg0, %c0_i32 : i32, i32
  }
}

module attributes {stable_mosaic.version = 11 : i64} {
  func.func @_fused_net_kernel(%arg0: i32, %arg1: memref<16x16xf32, #tpu.memory_space<vmem>>, %arg2: memref<16x64xbf16, #tpu.memory_space<vmem>>, %arg3: memref<64x64xbf16, #tpu.memory_space<vmem>>, %arg4: memref<64x32xbf16, #tpu.memory_space<vmem>>, %arg5: memref<1x32xf32, #tpu.memory_space<vmem>>, %arg6: memref<1x64xf32, #tpu.memory_space<vmem>>, %arg7: memref<1x64xf32, #tpu.memory_space<vmem>>, %arg8: memref<1x32xf32, #tpu.memory_space<vmem>>, %arg9: memref<1x1xf32, #tpu.memory_space<vmem>>, %arg10: memref<16x1xf32, #tpu.memory_space<vmem>>) attributes {dimension_semantics = [#tpu.dimension_semantics<parallel>], iteration_bounds = array<i64: 1>, scalar_prefetch = 0 : i64, scratch_operands = 0 : i64, tpu.core_type = #tpu.core_type<tc>, window_params = [{transform_indices = @transform_0, window_bounds = array<i64: 16, 16>}, {pipeline_mode = #tpu.pipeline_mode<synchronous>, transform_indices = @transform_1, window_bounds = array<i64: 16, 64>}, {pipeline_mode = #tpu.pipeline_mode<synchronous>, transform_indices = @transform_2, window_bounds = array<i64: 64, 64>}, {pipeline_mode = #tpu.pipeline_mode<synchronous>, transform_indices = @transform_3, window_bounds = array<i64: 64, 32>}, {pipeline_mode = #tpu.pipeline_mode<synchronous>, transform_indices = @transform_4, window_bounds = array<i64: 1, 32>}, {pipeline_mode = #tpu.pipeline_mode<synchronous>, transform_indices = @transform_5, window_bounds = array<i64: 1, 64>}, {pipeline_mode = #tpu.pipeline_mode<synchronous>, transform_indices = @transform_6, window_bounds = array<i64: 1, 64>}, {pipeline_mode = #tpu.pipeline_mode<synchronous>, transform_indices = @transform_7, window_bounds = array<i64: 1, 32>}, {pipeline_mode = #tpu.pipeline_mode<synchronous>, transform_indices = @transform_8, window_bounds = array<i64: 1, 1>}, {transform_indices = @transform_9, window_bounds = array<i64: 16, 1>}]} {
    %c0 = arith.constant 0 : index
    %c0_0 = arith.constant 0 : index
    %0 = vector.load %arg1[%c0, %c0_0] : memref<16x16xf32, #tpu.memory_space<vmem>>, vector<16x16xf32>
    %c0_1 = arith.constant 0 : index
    %c0_2 = arith.constant 0 : index
    %1 = vector.load %arg2[%c0_1, %c0_2] : memref<16x64xbf16, #tpu.memory_space<vmem>>, vector<16x64xbf16>
    %c0_3 = arith.constant 0 : index
    %c0_4 = arith.constant 0 : index
    %2 = vector.load %arg6[%c0_3, %c0_4] : memref<1x64xf32, #tpu.memory_space<vmem>>, vector<1x64xf32>
    %3 = arith.truncf %0 : vector<16x16xf32> to vector<16x16xbf16>
    %cst = arith.constant dense<0.000000e+00> : vector<16x64xf32>
    %4 = tpu.matmul %3, %1, %cst {dimension_numbers = #tpu.dot_dimension_numbers<[1], [0], [0], [1], [0, 0, 1, 1], [], []>} : vector<16x16xbf16>, vector<16x64xbf16>, vector<16x64xf32> -> vector<16x64xf32>
    %5 = vector.broadcast %2 : vector<1x64xf32> to vector<16x64xf32>
    %6 = arith.addf %4, %5 : vector<16x64xf32>
    %cst_5 = arith.constant 0.000000e+00 : f32
    %7 = vector.broadcast %cst_5 : f32 to vector<16x64xf32>
    %8 = arith.maximumf %6, %7 : vector<16x64xf32>
    %c0_6 = arith.constant 0 : index
    %c0_7 = arith.constant 0 : index
    %9 = vector.load %arg3[%c0_6, %c0_7] : memref<64x64xbf16, #tpu.memory_space<vmem>>, vector<64x64xbf16>
    %c0_8 = arith.constant 0 : index
    %c0_9 = arith.constant 0 : index
    %10 = vector.load %arg7[%c0_8, %c0_9] : memref<1x64xf32, #tpu.memory_space<vmem>>, vector<1x64xf32>
    %11 = arith.truncf %8 : vector<16x64xf32> to vector<16x64xbf16>
    %cst_10 = arith.constant dense<0.000000e+00> : vector<16x64xf32>
    %12 = tpu.matmul %11, %9, %cst_10 {dimension_numbers = #tpu.dot_dimension_numbers<[1], [0], [0], [1], [0, 0, 1, 1], [], []>} : vector<16x64xbf16>, vector<64x64xbf16>, vector<16x64xf32> -> vector<16x64xf32>
    %13 = vector.broadcast %10 : vector<1x64xf32> to vector<16x64xf32>
    %14 = arith.addf %12, %13 : vector<16x64xf32>
    %cst_11 = arith.constant 0.000000e+00 : f32
    %15 = vector.broadcast %cst_11 : f32 to vector<16x64xf32>
    %16 = arith.maximumf %14, %15 : vector<16x64xf32>
    %c0_12 = arith.constant 0 : index
    %c0_13 = arith.constant 0 : index
    %17 = vector.load %arg4[%c0_12, %c0_13] : memref<64x32xbf16, #tpu.memory_space<vmem>>, vector<64x32xbf16>
    %c0_14 = arith.constant 0 : index
    %c0_15 = arith.constant 0 : index
    %18 = vector.load %arg8[%c0_14, %c0_15] : memref<1x32xf32, #tpu.memory_space<vmem>>, vector<1x32xf32>
    %19 = arith.truncf %16 : vector<16x64xf32> to vector<16x64xbf16>
    %cst_16 = arith.constant dense<0.000000e+00> : vector<16x32xf32>
    %20 = tpu.matmul %19, %17, %cst_16 {dimension_numbers = #tpu.dot_dimension_numbers<[1], [0], [0], [1], [0, 0, 1, 1], [], []>} : vector<16x64xbf16>, vector<64x32xbf16>, vector<16x32xf32> -> vector<16x32xf32>
    %21 = vector.broadcast %18 : vector<1x32xf32> to vector<16x32xf32>
    %22 = arith.addf %20, %21 : vector<16x32xf32>
    %cst_17 = arith.constant 0.000000e+00 : f32
    %23 = vector.broadcast %cst_17 : f32 to vector<16x32xf32>
    %24 = arith.maximumf %22, %23 : vector<16x32xf32>
    %c0_18 = arith.constant 0 : index
    %c0_19 = arith.constant 0 : index
    %25 = vector.load %arg5[%c0_18, %c0_19] : memref<1x32xf32, #tpu.memory_space<vmem>>, vector<1x32xf32>
    %c0_20 = arith.constant 0 : index
    %c0_21 = arith.constant 0 : index
    %26 = vector.load %arg9[%c0_20, %c0_21] : memref<1x1xf32, #tpu.memory_space<vmem>>, vector<1x1xf32>
    %27 = vector.broadcast %25 : vector<1x32xf32> to vector<16x32xf32>
    %28 = arith.mulf %24, %27 : vector<16x32xf32>
    %cst_22 = arith.constant dense<0.000000e+00> : vector<16xf32>
    %29 = vector.multi_reduction <add>, %28, %cst_22 [1] : vector<16x32xf32> to vector<16xf32>
    %30 = vector.shape_cast %29 : vector<16xf32> to vector<16x1xf32>
    %31 = vector.broadcast %26 : vector<1x1xf32> to vector<16x1xf32>
    %32 = arith.addf %30, %31 : vector<16x1xf32>
    %33 = arith.negf %32 : vector<16x1xf32>
    %34 = math.exp %33 : vector<16x1xf32>
    %cst_23 = arith.constant 1.000000e+00 : f32
    %35 = vector.broadcast %cst_23 : f32 to vector<16x1xf32>
    %36 = arith.addf %35, %34 : vector<16x1xf32>
    %37 = arith.divf %35, %36 : vector<16x1xf32>
    %c0_24 = arith.constant 0 : index
    %c0_25 = arith.constant 0 : index
    %38 = vector.load %arg10[%c0_24, %c0_25] : memref<16x1xf32, #tpu.memory_space<vmem>>, vector<16x1xf32>
    tpu.vector_store %arg10[%c0_24, %c0_25], %37 {strides = array<i32>} : memref<16x1xf32, #tpu.memory_space<vmem>>, vector<16x1xf32>,
    return
  }
  func.func @transform_0(%arg0: i32) -> (i32, i32) {
    %c0_i32 = arith.constant 0 : i32
    %c0_i32_0 = arith.constant 0 : i32
    return %arg0, %c0_i32 : i32, i32
  }
  func.func @transform_1(%arg0: i32) -> (i32, i32) {
    %c0_i32 = arith.constant 0 : i32
    %c0_i32_0 = arith.constant 0 : i32
    %c0_i32_1 = arith.constant 0 : i32
    return %c0_i32, %c0_i32_0 : i32, i32
  }
  func.func @transform_2(%arg0: i32) -> (i32, i32) {
    %c0_i32 = arith.constant 0 : i32
    %c0_i32_0 = arith.constant 0 : i32
    %c0_i32_1 = arith.constant 0 : i32
    return %c0_i32, %c0_i32_0 : i32, i32
  }
  func.func @transform_3(%arg0: i32) -> (i32, i32) {
    %c0_i32 = arith.constant 0 : i32
    %c0_i32_0 = arith.constant 0 : i32
    %c0_i32_1 = arith.constant 0 : i32
    return %c0_i32, %c0_i32_0 : i32, i32
  }
  func.func @transform_4(%arg0: i32) -> (i32, i32) {
    %c0_i32 = arith.constant 0 : i32
    %c0_i32_0 = arith.constant 0 : i32
    %c0_i32_1 = arith.constant 0 : i32
    return %c0_i32, %c0_i32_0 : i32, i32
  }
  func.func @transform_5(%arg0: i32) -> (i32, i32) {
    %c0_i32 = arith.constant 0 : i32
    %c0_i32_0 = arith.constant 0 : i32
    %c0_i32_1 = arith.constant 0 : i32
    return %c0_i32, %c0_i32_0 : i32, i32
  }
  func.func @transform_6(%arg0: i32) -> (i32, i32) {
    %c0_i32 = arith.constant 0 : i32
    %c0_i32_0 = arith.constant 0 : i32
    %c0_i32_1 = arith.constant 0 : i32
    return %c0_i32, %c0_i32_0 : i32, i32
  }
  func.func @transform_7(%arg0: i32) -> (i32, i32) {
    %c0_i32 = arith.constant 0 : i32
    %c0_i32_0 = arith.constant 0 : i32
    %c0_i32_1 = arith.constant 0 : i32
    return %c0_i32, %c0_i32_0 : i32, i32
  }
  func.func @transform_8(%arg0: i32) -> (i32, i32) {
    %c0_i32 = arith.constant 0 : i32
    %c0_i32_0 = arith.constant 0 : i32
    %c0_i32_1 = arith.constant 0 : i32
    return %c0_i32, %c0_i32_0 : i32, i32
  }
  func.func @transform_9(%arg0: i32) -> (i32, i32) {
    %c0_i32 = arith.constant 0 : i32
    %c0_i32_0 = arith.constant 0 : i32
    return %arg0, %c0_i32 : i32, i32
  }
}

</mosaic_0001>

<llo_original>
// kernel: net_forward.5
$region0: #{net_forward.5}
  #allocation0 [shape = 'u32[]', space=smem, size = 0x4, offset = 0x4, fixed_abs, tag = 'smem constant byte address 0x4 - core index']
  #allocation1 [shape = 'u32[144,128]{1,0:T(1,128)}', space=vmem, size = 0x12000, scoped, tag = 'internal scratch']
  %s0 = inlined_call_operand.vmem [shape: f32[16,7], index: 0, kind: input, shape index: {}]
  %s1 = inlined_call_operand.vmem [shape: bf16[3,64], index: 1, kind: input, shape index: {}]
  %s2 = inlined_call_operand.vmem [shape: bf16[64,64], index: 2, kind: input, shape index: {}]
  %s3 = inlined_call_operand.vmem [shape: bf16[64,3], index: 3, kind: input, shape index: {}]
  %s4 = inlined_call_operand.vmem [shape: bf16[3,32], index: 4, kind: input, shape index: {}]
  %s5 = inlined_call_operand.vmem [shape: bf16[32,32], index: 5, kind: input, shape index: {}]
  %s6 = inlined_call_operand.vmem [shape: bf16[32,3], index: 6, kind: input, shape index: {}]
  %s7 = inlined_call_operand.vmem [shape: bf16[7,9], index: 7, kind: input, shape index: {}]
  %s8 = inlined_call_operand.vmem [shape: f32[1,64], index: 8, kind: input, shape index: {}, may-alias: {8,9}]
  %s9 = inlined_call_operand.vmem [shape: f32[1,64], index: 9, kind: input, shape index: {}, may-alias: {8,9}]
  %s10 = inlined_call_operand.vmem [shape: f32[1,3], index: 10, kind: input, shape index: {}, may-alias: {10,13}]
  %s11 = inlined_call_operand.vmem [shape: f32[1,32], index: 11, kind: input, shape index: {}, may-alias: {11,12}]
  %s12 = inlined_call_operand.vmem [shape: f32[1,32], index: 12, kind: input, shape index: {}, may-alias: {11,12}]
  %s13 = inlined_call_operand.vmem [shape: f32[1,3], index: 13, kind: input, shape index: {}, may-alias: {10,13}]
  %s14 = inlined_call_operand.vmem [shape: f32[1,9], index: 14, kind: input, shape index: {}]
  %s15 = inlined_call_operand.vmem [shape: f32[16,15], index: 15, kind: output, shape index: {}]
  %s16 = sld [smem:[#allocation0]]
  $region70: #{net_forward.5} parent=0
    _
  %s18 = ssub.s32 1, %s16
  %s19 = scalar_select 0, %s18, %s16
  // Predicated region
  $region2: #{net_forward.5} parent=0 // pred_check
    _
  $region3: #{net_forward.5} parent=0 // pred_check_branch
    %21 = sbr.rel (0) target = $region5
  $region4: #{net_forward.5} parent=0 // pred_region
    _
  $region5: #{net_forward.5} parent=0 // pred_fallthru
    _
  // Predicated region
  $region6: #{net_forward.5} parent=0 // pred_check
    _
  $region7: #{net_forward.5} parent=0 // pred_check_branch
    %23 = sbr.rel (0) target = $region9
  $region8: #{net_forward.5} parent=0 // pred_region
    _
  $region9: #{net_forward.5} parent=0 // pred_fallthru
    _
  // Predicated region
  $region10: #{net_forward.5} parent=0 // pred_check
    _
  $region11: #{net_forward.5} parent=0 // pred_check_branch
    %25 = sbr.rel (0) target = $region13
  $region12: #{net_forward.5} parent=0 // pred_region
    _
  $region13: #{net_forward.5} parent=0 // pred_fallthru
    _
  // Predicated region
  $region14: #{net_forward.5} parent=0 // pred_check
    _
  $region15: #{net_forward.5} parent=0 // pred_check_branch
    %27 = sbr.rel (0) target = $region17
  $region16: #{net_forward.5} parent=0 // pred_region
    _
  $region17: #{net_forward.5} parent=0 // pred_fallthru
    _
  // Predicated region
  $region18: #{net_forward.5} parent=0 // pred_check
    _
  $region19: #{net_forward.5} parent=0 // pred_check_branch
    %29 = sbr.rel (0) target = $region21
  $region20: #{net_forward.5} parent=0 // pred_region
    _
  $region21: #{net_forward.5} parent=0 // pred_fallthru
    _
  // Predicated region
  $region22: #{net_forward.5} parent=0 // pred_check
    _
  $region23: #{net_forward.5} parent=0 // pred_check_branch
    %31 = sbr.rel (0) target = $region25
  $region24: #{net_forward.5} parent=0 // pred_region
    _
  $region25: #{net_forward.5} parent=0 // pred_fallthru
    _
  // Predicated region
  $region26: #{net_forward.5} parent=0 // pred_check
    _
  $region27: #{net_forward.5} parent=0 // pred_check_branch
    %33 = sbr.rel (0) target = $region29
  $region28: #{net_forward.5} parent=0 // pred_region
    _
  $region29: #{net_forward.5} parent=0 // pred_fallthru
    _
  // Predicated region
  $region30: #{net_forward.5} parent=0 // pred_check
    _
  $region31: #{net_forward.5} parent=0 // pred_check_branch
    %35 = sbr.rel (0) target = $region33
  $region32: #{net_forward.5} parent=0 // pred_region
    _
  $region33: #{net_forward.5} parent=0 // pred_fallthru
    _
  // Predicated region
  $region34: #{net_forward.5} parent=0 // pred_check
    _
  $region35: #{net_forward.5} parent=0 // pred_check_branch
    %37 = sbr.rel (0) target = $region37
  $region36: #{net_forward.5} parent=0 // pred_region
    _
  $region37: #{net_forward.5} parent=0 // pred_fallthru
    _
  // Predicated region
  $region38: #{net_forward.5} parent=0 // pred_check
    _
  $region39: #{net_forward.5} parent=0 // pred_check_branch
    %39 = sbr.rel (0) target = $region41
  $region40: #{net_forward.5} parent=0 // pred_region
    _
  $region41: #{net_forward.5} parent=0 // pred_fallthru
    _
  // Predicated region
  $region42: #{net_forward.5} parent=0 // pred_check
    _
  $region43: #{net_forward.5} parent=0 // pred_check_branch
    %41 = sbr.rel (0) target = $region45
  $region44: #{net_forward.5} parent=0 // pred_region
    _
  $region45: #{net_forward.5} parent=0 // pred_fallthru
    _
  // Predicated region
  $region46: #{net_forward.5} parent=0 // pred_check
    _
  $region47: #{net_forward.5} parent=0 // pred_check_branch
    %43 = sbr.rel (0) target = $region49
  $region48: #{net_forward.5} parent=0 // pred_region
    _
  $region49: #{net_forward.5} parent=0 // pred_fallthru
    _
  // Predicated region
  $region50: #{net_forward.5} parent=0 // pred_check
    _
  $region51: #{net_forward.5} parent=0 // pred_check_branch
    %45 = sbr.rel (0) target = $region53
  $region52: #{net_forward.5} parent=0 // pred_region
    _
  $region53: #{net_forward.5} parent=0 // pred_fallthru
    _
  // Predicated region
  $region54: #{net_forward.5} parent=0 // pred_check
    _
  $region55: #{net_forward.5} parent=0 // pred_check_branch
    %47 = sbr.rel (0) target = $region57
  $region56: #{net_forward.5} parent=0 // pred_region
    _
  $region57: #{net_forward.5} parent=0 // pred_fallthru
    _
  // Predicated region
  $region58: #{net_forward.5} parent=0 // pred_check
    _
  $region59: #{net_forward.5} parent=0 // pred_check_branch
    %49 = sbr.rel (0) target = $region61
  $region60: #{net_forward.5} parent=0 // pred_region
    _
  $region61: #{net_forward.5} parent=0 // pred_fallthru
    _
  %v51 = vld [vmem:[%s0] sm:$0xff]
  %v52 = vld [vmem:[%s0 + $0x8] sm:$0xff]
  %v53 = vld [vmem:[%s1] sm:$0x3]
  %v54 = vld [vmem:[%s8] sm:$0x1]
  %v55 = vpack.c.bf16 %v52, %v51
  %v57 = vlaneseq
  %v58 = vshrl.u32 %v57, 7
  %v59 = vsub.s32 0, %v58
  %v60 = vrot.slane %v54, %v59
  %vm62 = vcmask 23552
  %v64 = vsel %vm62, %v55, 0
  %vm66 = vcmask 1040384
  %vm67 = vcmask 1041408
  %v68 = vsel %vm66, 4294967295, 65535
  %v69 = vsel %vm67, %v68, 0
  %v71 = vand.u32 %v53, %v69
  %73 = vmatprep.subr.bf16.mxu0 0
  %74 = vmatpush1.bf16.msra.mxu0 %v71
  %75 = vmatprep.subr.bf16.mxu0 0
  %76 = vmatpush1.bf16.msra.mxu0 0
  %77 = vmatprep.subr.bf16.mxu0 0
  %78 = vmatpush1.bf16.msra.mxu0 0
  %79 = vmatprep.subr.bf16.mxu0 0
  %80 = vmatpush1.bf16.msra.mxu0 0
  %81 = vmatprep.subr.bf16.mxu0 0
  %82 = vmatpush1.bf16.msra.mxu0 0
  %83 = vmatprep.subr.bf16.mxu0 0
  %84 = vmatpush1.bf16.msra.mxu0 0
  %85 = vmatprep.subr.bf16.mxu0 0
  %86 = vmatpush1.bf16.msra.mxu0 0
  %87 = vmatprep.subr.bf16.mxu0 0
  %88 = vmatpush1.bf16.msra.mxu0 0
  %89 = vmatprep.subr.bf16.mxu0 0
  %90 = vmatpush1.bf16.msra.mxu0 0
  %91 = vmatprep.subr.bf16.mxu0 0
  %92 = vmatpush1.bf16.msra.mxu0 0
  %93 = vmatprep.subr.bf16.mxu0 0
  %94 = vmatpush1.bf16.msra.mxu0 0
  %95 = vmatprep.subr.bf16.mxu0 0
  %96 = vmatpush1.bf16.msra.mxu0 0
  %97 = vmatprep.subr.bf16.mxu0 0
  %98 = vmatpush1.bf16.msra.mxu0 0
  %99 = vmatprep.subr.bf16.mxu0 0
  %100 = vmatpush1.bf16.msra.mxu0 0
  %101 = vmatprep.subr.bf16.mxu0 0
  %102 = vmatpush1.bf16.msra.mxu0 0
  %103 = vmatprep.subr.bf16.mxu0 0
  %104 = vmatpush1.bf16.msra.mxu0 0
  %105 = vmatprep.mubr.bf16.mxu0 0
  %106 = vmatmul.mubr.bf16.gmra.mrb[0].mxu0 %v64
  %v107 = vpop.f32.mrb[0].mxu0
  %v108 = vadd.f32 %v60, %v107
  %v109 = vpop.f32.mrb[0].mxu0
  %v110 = vpop.f32.mrb[0].mxu0
  %v111 = vadd.f32 %v60, %v110
  %v112 = vpop.f32.mrb[0].mxu0
  %113 = vdwg.mxu0
  %v114 = vmax.f32 %v108, 0.0
  %v115 = vmax.f32 %v111, 0.0
  %v116 = vld [vmem:[%s2] sm:$0xf]
  %v117 = vld [vmem:[%s2 + $0x4] sm:$0xf]
  %v118 = vld [vmem:[%s2 + $0x8] sm:$0xf]
  %v119 = vld [vmem:[%s2 + $0xc] sm:$0xf]
  %v120 = vld [vmem:[%s2 + $0x10] sm:$0xf]
  %v121 = vld [vmem:[%s2 + $0x14] sm:$0xf]
  %v122 = vld [vmem:[%s2 + $0x18] sm:$0xf]
  %v123 = vld [vmem:[%s2 + $0x1c] sm:$0xf]
  %v124 = vld [vmem:[%s9] sm:$0x1]
  %v125 = vpack.c.bf16 %v115, %v114
  %v127 = vlaneseq
  %v128 = vshrl.u32 %v127, 7
  %v129 = vsub.s32 0, %v128
  %v130 = vrot.slane %v124, %v129
  %v140 = vunpack.c.l.b16 %v116
  %v141 = vunpack.c.l.b16 %v117
  %v142 = vunpack.c.l.b16 %v118
  %v143 = vunpack.c.l.b16 %v119
  %v144 = vunpack.c.l.b16 %v120
  %v145 = vunpack.c.l.b16 %v121
  %v146 = vunpack.c.l.b16 %v122
  %v147 = vunpack.c.l.b16 %v123
  %v148 = vpack.c.b16 %v141, %v140
  %v149 = vpack.c.b16 %v143, %v142
  %v150 = vpack.c.b16 %v145, %v144
  %v151 = vpack.c.b16 %v147, %v146
  %vm156 = vcmask 523264
  %v158 = vsel %vm156, %v125, 0
  %160 = vmatprep.subr.bf16.mxu0 0
  %161 = vmatpush1.bf16.msra.mxu0 %v148
  %162 = vmatprep.subr.bf16.mxu0 0
  %163 = vmatpush1.bf16.msra.mxu0 %v149
  %164 = vmatprep.subr.bf16.mxu0 0
  %165 = vmatpush1.bf16.msra.mxu0 %v150
  %166 = vmatprep.subr.bf16.mxu0 0
  %167 = vmatpush1.bf16.msra.mxu0 %v151
  %168 = vmatprep.subr.bf16.mxu0 0
  %169 = vmatpush1.bf16.msra.mxu0 0
  %170 = vmatprep.subr.bf16.mxu0 0
  %171 = vmatpush1.bf16.msra.mxu0 0
  %172 = vmatprep.subr.bf16.mxu0 0
  %173 = vmatpush1.bf16.msra.mxu0 0
  %174 = vmatprep.subr.bf16.mxu0 0
  %175 = vmatpush1.bf16.msra.mxu0 0
  %176 = vmatprep.subr.bf16.mxu0 0
  %177 = vmatpush1.bf16.msra.mxu0 0
  %178 = vmatprep.subr.bf16.mxu0 0
  %179 = vmatpush1.bf16.msra.mxu0 0
  %180 = vmatprep.subr.bf16.mxu0 0
  %181 = vmatpush1.bf16.msra.mxu0 0
  %182 = vmatprep.subr.bf16.mxu0 0
  %183 = vmatpush1.bf16.msra.mxu0 0
  %184 = vmatprep.subr.bf16.mxu0 0
  %185 = vmatpush1.bf16.msra.mxu0 0
  %186 = vmatprep.subr.bf16.mxu0 0
  %187 = vmatpush1.bf16.msra.mxu0 0
  %188 = vmatprep.subr.bf16.mxu0 0
  %189 = vmatpush1.bf16.msra.mxu0 0
  %190 = vmatprep.subr.bf16.mxu0 0
  %191 = vmatpush1.bf16.msra.mxu0 0
  %192 = vmatprep.mubr.bf16.mxu0 0
  %193 = vmatmul.mubr.bf16.gmra.mrb[0].mxu0 %v158
  %v194 = vpop.f32.mrb[0].mxu0
  %v195 = vadd.f32 %v130, %v194
  %v196 = vpop.f32.mrb[0].mxu0
  %v197 = vpop.f32.mrb[0].mxu0
  %v198 = vadd.f32 %v130, %v197
  %v199 = vpop.f32.mrb[0].mxu0
  %200 = vdwg.mxu0
  %v201 = vmax.f32 %v195, 0.0
  %v202 = vmax.f32 %v198, 0.0
  %v203 = vld [vmem:[%s3] sm:$0xf]
  %v204 = vld [vmem:[%s3 + $0x4] sm:$0xf]
  %v205 = vld [vmem:[%s3 + $0x8] sm:$0xf]
  %v206 = vld [vmem:[%s3 + $0xc] sm:$0xf]
  %v207 = vld [vmem:[%s3 + $0x10] sm:$0xf]
  %v208 = vld [vmem:[%s3 + $0x14] sm:$0xf]
  %v209 = vld [vmem:[%s3 + $0x18] sm:$0xf]
  %v210 = vld [vmem:[%s3 + $0x1c] sm:$0xf]
  %v211 = vld [vmem:[%s10] sm:$0x1]
  %v212 = vpack.c.bf16 %v202, %v201
  %v214 = vlaneseq
  %v215 = vshrl.u32 %v214, 7
  %v216 = vsub.s32 0, %v215
  %v217 = vrot.slane %v211, %v216
  %v227 = vunpack.c.l.b16 %v203
  %v228 = vunpack.c.l.b16 %v204
  %v229 = vunpack.c.l.b16 %v205
  %v230 = vunpack.c.l.b16 %v206
  %v231 = vunpack.c.l.b16 %v207
  %v232 = vunpack.c.l.b16 %v208
  %v233 = vunpack.c.l.b16 %v209
  %v234 = vunpack.c.l.b16 %v210
  %v235 = vpack.c.b16 %v228, %v227
  %v236 = vpack.c.b16 %v230, %v229
  %v237 = vpack.c.b16 %v232, %v231
  %v238 = vpack.c.b16 %v234, %v233
  %v244 = vsel %vm156, %v212, 0
  %246 = vmatprep.subr.bf16.mxu0 0
  %247 = vmatpush1.bf16.msra.mxu0 %v235
  %248 = vmatprep.subr.bf16.mxu0 0
  %249 = vmatpush1.bf16.msra.mxu0 %v236
  %250 = vmatprep.subr.bf16.mxu0 0
  %251 = vmatpush1.bf16.msra.mxu0 %v237
  %252 = vmatprep.subr.bf16.mxu0 0
  %253 = vmatpush1.bf16.msra.mxu0 %v238
  %254 = vmatprep.subr.bf16.mxu0 0
  %255 = vmatpush1.bf16.msra.mxu0 0
  %256 = vmatprep.subr.bf16.mxu0 0
  %257 = vmatpush1.bf16.msra.mxu0 0
  %258 = vmatprep.subr.bf16.mxu0 0
  %259 = vmatpush1.bf16.msra.mxu0 0
  %260 = vmatprep.subr.bf16.mxu0 0
  %261 = vmatpush1.bf16.msra.mxu0 0
  %262 = vmatprep.subr.bf16.mxu0 0
  %263 = vmatpush1.bf16.msra.mxu0 0
  %264 = vmatprep.subr.bf16.mxu0 0
  %265 = vmatpush1.bf16.msra.mxu0 0
  %266 = vmatprep.subr.bf16.mxu0 0
  %267 = vmatpush1.bf16.msra.mxu0 0
  %268 = vmatprep.subr.bf16.mxu0 0
  %269 = vmatpush1.bf16.msra.mxu0 0
  %270 = vmatprep.subr.bf16.mxu0 0
  %271 = vmatpush1.bf16.msra.mxu0 0
  %272 = vmatprep.subr.bf16.mxu0 0
  %273 = vmatpush1.bf16.msra.mxu0 0
  %274 = vmatprep.subr.bf16.mxu0 0
  %275 = vmatpush1.bf16.msra.mxu0 0
  %276 = vmatprep.subr.bf16.mxu0 0
  %277 = vmatpush1.bf16.msra.mxu0 0
  %278 = vmatprep.mubr.bf16.mxu0 0
  %279 = vmatmul.mubr.bf16.gmra.mrb[0].mxu0 %v244
  %v280 = vpop.f32.mrb[0].mxu0
  %v281 = vadd.f32 %v217, %v280
  %v282 = vpop.f32.mrb[0].mxu0
  %v283 = vpop.f32.mrb[0].mxu0
  %v284 = vadd.f32 %v217, %v283
  %v285 = vpop.f32.mrb[0].mxu0
  %286 = vdwg.mxu0
  %v287 = vld [vmem:[%s4] sm:$0x3]
  %v288 = vld [vmem:[%s11] sm:$0x1]
  %v290 = vlaneseq
  %v291 = vshrl.u32 %v290, 7
  %v292 = vsub.s32 0, %v291
  %v293 = vrot.slane %v288, %v292
  %v296 = vand.u32 %v287, %v69
  %298 = vmatprep.subr.bf16.mxu0 0
  %299 = vmatpush1.bf16.msra.mxu0 %v296
  %300 = vmatprep.subr.bf16.mxu0 0
  %301 = vmatpush1.bf16.msra.mxu0 0
  %302 = vmatprep.subr.bf16.mxu0 0
  %303 = vmatpush1.bf16.msra.mxu0 0
  %304 = vmatprep.subr.bf16.mxu0 0
  %305 = vmatpush1.bf16.msra.mxu0 0
  %306 = vmatprep.subr.bf16.mxu0 0
  %307 = vmatpush1.bf16.msra.mxu0 0
  %308 = vmatprep.subr.bf16.mxu0 0
  %309 = vmatpush1.bf16.msra.mxu0 0
  %310 = vmatprep.subr.bf16.mxu0 0
  %311 = vmatpush1.bf16.msra.mxu0 0
  %312 = vmatprep.subr.bf16.mxu0 0
  %313 = vmatpush1.bf16.msra.mxu0 0
  %314 = vmatprep.subr.bf16.mxu0 0
  %315 = vmatpush1.bf16.msra.mxu0 0
  %316 = vmatprep.subr.bf16.mxu0 0
  %317 = vmatpush1.bf16.msra.mxu0 0
  %318 = vmatprep.subr.bf16.mxu0 0
  %319 = vmatpush1.bf16.msra.mxu0 0
  %320 = vmatprep.subr.bf16.mxu0 0
  %321 = vmatpush1.bf16.msra.mxu0 0
  %322 = vmatprep.subr.bf16.mxu0 0
  %323 = vmatpush1.bf16.msra.mxu0 0
  %324 = vmatprep.subr.bf16.mxu0 0
  %325 = vmatpush1.bf16.msra.mxu0 0
  %326 = vmatprep.subr.bf16.mxu0 0
  %327 = vmatpush1.bf16.msra.mxu0 0
  %328 = vmatprep.subr.bf16.mxu0 0
  %329 = vmatpush1.bf16.msra.mxu0 0
  %330 = vmatprep.mubr.bf16.mxu0 0
  %331 = vmatmul.mubr.bf16.gmra.mrb[0].mxu0 %v64
  %v332 = vpop.f32.mrb[0].mxu0
  %v333 = vadd.f32 %v293, %v332
  %v334 = vpop.f32.mrb[0].mxu0
  %v335 = vpop.f32.mrb[0].mxu0
  %v336 = vadd.f32 %v293, %v335
  %v337 = vpop.f32.mrb[0].mxu0
  %338 = vdwg.mxu0
  %v339 = vmax.f32 %v333, 0.0
  %v340 = vmax.f32 %v336, 0.0
  %v341 = vld [vmem:[%s5] sm:$0xf]
  %v342 = vld [vmem:[%s5 + $0x4] sm:$0xf]
  %v343 = vld [vmem:[%s5 + $0x8] sm:$0xf]
  %v344 = vld [vmem:[%s5 + $0xc] sm:$0xf]
  %v345 = vld [vmem:[%s12] sm:$0x1]
  %v346 = vpack.c.bf16 %v340, %v339
  %v348 = vlaneseq
  %v349 = vshrl.u32 %v348, 7
  %v350 = vsub.s32 0, %v349
  %v351 = vrot.slane %v345, %v350
  %v357 = vunpack.c.l.b16 %v341
  %v358 = vunpack.c.l.b16 %v342
  %v359 = vunpack.c.l.b16 %v343
  %v360 = vunpack.c.l.b16 %v344
  %v361 = vpack.c.b16 %v358, %v357
  %v362 = vpack.c.b16 %v360, %v359
  %vm365 = vcmask 261120
  %v367 = vsel %vm365, %v346, 0
  %369 = vmatprep.subr.bf16.mxu0 0
  %370 = vmatpush1.bf16.msra.mxu0 %v361
  %371 = vmatprep.subr.bf16.mxu0 0
  %372 = vmatpush1.bf16.msra.mxu0 %v362
  %373 = vmatprep.subr.bf16.mxu0 0
  %374 = vmatpush1.bf16.msra.mxu0 0
  %375 = vmatprep.subr.bf16.mxu0 0
  %376 = vmatpush1.bf16.msra.mxu0 0
  %377 = vmatprep.subr.bf16.mxu0 0
  %378 = vmatpush1.bf16.msra.mxu0 0
  %379 = vmatprep.subr.bf16.mxu0 0
  %380 = vmatpush1.bf16.msra.mxu0 0
  %381 = vmatprep.subr.bf16.mxu0 0
  %382 = vmatpush1.bf16.msra.mxu0 0
  %383 = vmatprep.subr.bf16.mxu0 0
  %384 = vmatpush1.bf16.msra.mxu0 0
  %385 = vmatprep.subr.bf16.mxu0 0
  %386 = vmatpush1.bf16.msra.mxu0 0
  %387 = vmatprep.subr.bf16.mxu0 0
  %388 = vmatpush1.bf16.msra.mxu0 0
  %389 = vmatprep.subr.bf16.mxu0 0
  %390 = vmatpush1.bf16.msra.mxu0 0
  %391 = vmatprep.subr.bf16.mxu0 0
  %392 = vmatpush1.bf16.msra.mxu0 0
  %393 = vmatprep.subr.bf16.mxu0 0
  %394 = vmatpush1.bf16.msra.mxu0 0
  %395 = vmatprep.subr.bf16.mxu0 0
  %396 = vmatpush1.bf16.msra.mxu0 0
  %397 = vmatprep.subr.bf16.mxu0 0
  %398 = vmatpush1.bf16.msra.mxu0 0
  %399 = vmatprep.subr.bf16.mxu0 0
  %400 = vmatpush1.bf16.msra.mxu0 0
  %401 = vmatprep.mubr.bf16.mxu0 0
  %402 = vmatmul.mubr.bf16.gmra.mrb[0].mxu0 %v367
  %v403 = vpop.f32.mrb[0].mxu0
  %v404 = vadd.f32 %v351, %v403
  %v405 = vpop.f32.mrb[0].mxu0
  %v406 = vpop.f32.mrb[0].mxu0
  %v407 = vadd.f32 %v351, %v406
  %v408 = vpop.f32.mrb[0].mxu0
  %409 = vdwg.mxu0
  %v410 = vmax.f32 %v404, 0.0
  %v411 = vmax.f32 %v407, 0.0
  %v412 = vld [vmem:[%s6] sm:$0xf]
  %v413 = vld [vmem:[%s6 + $0x4] sm:$0xf]
  %v414 = vld [vmem:[%s6 + $0x8] sm:$0xf]
  %v415 = vld [vmem:[%s6 + $0xc] sm:$0xf]
  %v416 = vld [vmem:[%s13] sm:$0x1]
  %v417 = vpack.c.bf16 %v411, %v410
  %v419 = vlaneseq
  %v420 = vshrl.u32 %v419, 7
  %v421 = vsub.s32 0, %v420
  %v422 = vrot.slane %v416, %v421
  %v428 = vunpack.c.l.b16 %v412
  %v429 = vunpack.c.l.b16 %v413
  %v430 = vunpack.c.l.b16 %v414
  %v431 = vunpack.c.l.b16 %v415
  %v432 = vpack.c.b16 %v429, %v428
  %v433 = vpack.c.b16 %v431, %v430
  %v437 = vsel %vm365, %v417, 0
  %439 = vmatprep.subr.bf16.mxu0 0
  %440 = vmatpush1.bf16.msra.mxu0 %v432
  %441 = vmatprep.subr.bf16.mxu0 0
  %442 = vmatpush1.bf16.msra.mxu0 %v433
  %443 = vmatprep.subr.bf16.mxu0 0
  %444 = vmatpush1.bf16.msra.mxu0 0
  %445 = vmatprep.subr.bf16.mxu0 0
  %446 = vmatpush1.bf16.msra.mxu0 0
  %447 = vmatprep.subr.bf16.mxu0 0
  %448 = vmatpush1.bf16.msra.mxu0 0
  %449 = vmatprep.subr.bf16.mxu0 0
  %450 = vmatpush1.bf16.msra.mxu0 0
  %451 = vmatprep.subr.bf16.mxu0 0
  %452 = vmatpush1.bf16.msra.mxu0 0
  %453 = vmatprep.subr.bf16.mxu0 0
  %454 = vmatpush1.bf16.msra.mxu0 0
  %455 = vmatprep.subr.bf16.mxu0 0
  %456 = vmatpush1.bf16.msra.mxu0 0
  %457 = vmatprep.subr.bf16.mxu0 0
  %458 = vmatpush1.bf16.msra.mxu0 0
  %459 = vmatprep.subr.bf16.mxu0 0
  %460 = vmatpush1.bf16.msra.mxu0 0
  %461 = vmatprep.subr.bf16.mxu0 0
  %462 = vmatpush1.bf16.msra.mxu0 0
  %463 = vmatprep.subr.bf16.mxu0 0
  %464 = vmatpush1.bf16.msra.mxu0 0
  %465 = vmatprep.subr.bf16.mxu0 0
  %466 = vmatpush1.bf16.msra.mxu0 0
  %467 = vmatprep.subr.bf16.mxu0 0
  %468 = vmatpush1.bf16.msra.mxu0 0
  %469 = vmatprep.subr.bf16.mxu0 0
  %470 = vmatpush1.bf16.msra.mxu0 0
  %471 = vmatprep.mubr.bf16.mxu0 0
  %472 = vmatmul.mubr.bf16.gmra.mrb[0].mxu0 %v437
  %v473 = vpop.f32.mrb[0].mxu0
  %v474 = vadd.f32 %v422, %v473
  %v475 = vpop.f32.mrb[0].mxu0
  %v476 = vpop.f32.mrb[0].mxu0
  %v477 = vadd.f32 %v422, %v476
  %v478 = vpop.f32.mrb[0].mxu0
  %479 = vdwg.mxu0
  %v480 = vld [vmem:[%s7] sm:$0xf]
  %v481 = vld [vmem:[%s14] sm:$0x1]
  %v483 = vlaneseq
  %v484 = vshrl.u32 %v483, 7
  %v485 = vsub.s32 0, %v484
  %v486 = vrot.slane %v481, %v485
  %vm488 = vcmask 56320
  %v489 = vsel %vm488, %v55, 0
  %vm491 = vcmask 1042432
  %vm492 = vcmask 1043456
  %v493 = vsel %vm491, 4294967295, 65535
  %v494 = vsel %vm492, %v493, 0
  %v496 = vand.u32 %v480, %v494
  %498 = vmatprep.subr.bf16.mxu0 0
  %499 = vmatpush1.bf16.msra.mxu0 %v496
  %500 = vmatprep.subr.bf16.mxu0 0
  %501 = vmatpush1.bf16.msra.mxu0 0
  %502 = vmatprep.subr.bf16.mxu0 0
  %503 = vmatpush1.bf16.msra.mxu0 0
  %504 = vmatprep.subr.bf16.mxu0 0
  %505 = vmatpush1.bf16.msra.mxu0 0
  %506 = vmatprep.subr.bf16.mxu0 0
  %507 = vmatpush1.bf16.msra.mxu0 0
  %508 = vmatprep.subr.bf16.mxu0 0
  %509 = vmatpush1.bf16.msra.mxu0 0
  %510 = vmatprep.subr.bf16.mxu0 0
  %511 = vmatpush1.bf16.msra.mxu0 0
  %512 = vmatprep.subr.bf16.mxu0 0
  %513 = vmatpush1.bf16.msra.mxu0 0
  %514 = vmatprep.subr.bf16.mxu0 0
  %515 = vmatpush1.bf16.msra.mxu0 0
  %516 = vmatprep.subr.bf16.mxu0 0
  %517 = vmatpush1.bf16.msra.mxu0 0
  %518 = vmatprep.subr.bf16.mxu0 0
  %519 = vmatpush1.bf16.msra.mxu0 0
  %520 = vmatprep.subr.bf16.mxu0 0
  %521 = vmatpush1.bf16.msra.mxu0 0
  %522 = vmatprep.subr.bf16.mxu0 0
  %523 = vmatpush1.bf16.msra.mxu0 0
  %524 = vmatprep.subr.bf16.mxu0 0
  %525 = vmatpush1.bf16.msra.mxu0 0
  %526 = vmatprep.subr.bf16.mxu0 0
  %527 = vmatpush1.bf16.msra.mxu0 0
  %528 = vmatprep.subr.bf16.mxu0 0
  %529 = vmatpush1.bf16.msra.mxu0 0
  %530 = vmatprep.mubr.bf16.mxu0 0
  %531 = vmatmul.mubr.bf16.gmra.mrb[0].mxu0 %v489
  %v532 = vpop.f32.mrb[0].mxu0
  %v533 = vadd.f32 %v486, %v532
  %v534 = vpop.f32.mrb[0].mxu0
  %v535 = vpop.f32.mrb[0].mxu0
  %v536 = vadd.f32 %v486, %v535
  %v537 = vpop.f32.mrb[0].mxu0
  %538 = vdwg.mxu0
  %541 = vrot.lane.b32.xlu0 %v474, 3
  %v542 = vpop.permute.xlu0 %541
  %543 = vrot.lane.b32.xlu0 %v477, 3
  %v544 = vpop.permute.xlu0 %543
  %549 = vrot.lane.b32.xlu0 %v533, 6
  %v550 = vpop.permute.xlu0 %549
  %551 = vrot.lane.b32.xlu0 %v536, 6
  %v552 = vpop.permute.xlu0 %551
  %v555 = vsel %vm62, %v281, %v542
  %v556 = vsel %vm62, %v284, %v544
  %vm557 = vcmask 48128
  %v558 = vsel %vm557, %v555, %v550
  %v559 = vsel %vm557, %v556, %v552
  %vm560 = vcmask 121856
  %561 = vst.msk [vmem:[%s15] sm:$0xff] %vm560, %v558
  %562 = vst.msk [vmem:[%s15 + $0x8] sm:$0xff] %vm560, %v559
  // Predicated region
  $region62: #{net_forward.5} parent=0 // pred_check
    _
  $region63: #{net_forward.5} parent=0 // pred_check_branch
    %564 = sbr.rel (0) target = $region65
  $region64: #{net_forward.5} parent=0 // pred_region
    _
  $region65: #{net_forward.5} parent=0 // pred_fallthru
    _
  // Predicated region
  $region66: #{net_forward.5} parent=0 // pred_check
    _
  $region67: #{net_forward.5} parent=0 // pred_check_branch
    %566 = sbr.rel (0) target = $region69
  $region68: #{net_forward.5} parent=0 // pred_region
    _
  $region69: #{net_forward.5} parent=0 // pred_fallthru
    _

// kernel: net_forward.6
$region0: #{net_forward.6}
  #allocation0 [shape = 'u32[]', space=smem, size = 0x4, offset = 0x4, fixed_abs, tag = 'smem constant byte address 0x4 - core index']
  #allocation1 [shape = 'u32[144,128]{1,0:T(1,128)}', space=vmem, size = 0x12000, scoped, tag = 'internal scratch']
  #allocation2 [shape = 'f32[1,1]{1,0:T(1,128)S(1)}', space=vmem, size = 0x200, scoped, tag = 'scoped memory for net_forward.6']
  %s0 = inlined_call_operand.vmem [shape: f32[48,4], index: 0, kind: input, shape index: {}]
  %s1 = inlined_call_operand.vmem [shape: bf16[4,64], index: 1, kind: input, shape index: {}]
  %s2 = inlined_call_operand.vmem [shape: bf16[64,64], index: 2, kind: input, shape index: {}]
  %s3 = inlined_call_operand.vmem [shape: bf16[64,7], index: 3, kind: input, shape index: {}]
  %s4 = inlined_call_operand.vmem [shape: f32[1,7], index: 4, kind: input, shape index: {}]
  %s5 = inlined_call_operand.vmem [shape: f32[1,64], index: 5, kind: input, shape index: {}, may-alias: {5,6}]
  %s6 = inlined_call_operand.vmem [shape: f32[1,64], index: 6, kind: input, shape index: {}, may-alias: {5,6}]
  %s7 = inlined_call_operand.vmem [shape: f32[1,7], index: 7, kind: input, shape index: {}]
  %s8 = inlined_call_operand.<no memory space> [shape: f32[1,1], index: 8, kind: input, shape index: {}]
  %s9 = inlined_call_operand.vmem [shape: f32[48,1], index: 9, kind: output, shape index: {}]
  %s10 = sld [smem:[#allocation0]]
  $region46: #{net_forward.6} parent=0
    _
  %s12 = ssub.s32 1, %s10
  %s13 = scalar_select 0, %s12, %s10
  %v14 = vstv %s8
  %15 = vst [vmem:[#allocation2] sm:$0x1] %v14
  // Predicated region
  $region2: #{net_forward.6} parent=0 // pred_check
    _
  $region3: #{net_forward.6} parent=0 // pred_check_branch
    %17 = sbr.rel (0) target = $region5
  $region4: #{net_forward.6} parent=0 // pred_region
    _
  $region5: #{net_forward.6} parent=0 // pred_fallthru
    _
  // Predicated region
  $region6: #{net_forward.6} parent=0 // pred_check
    _
  $region7: #{net_forward.6} parent=0 // pred_check_branch
    %19 = sbr.rel (0) target = $region9
  $region8: #{net_forward.6} parent=0 // pred_region
    _
  $region9: #{net_forward.6} parent=0 // pred_fallthru
    _
  // Predicated region
  $region10: #{net_forward.6} parent=0 // pred_check
    _
  $region11: #{net_forward.6} parent=0 // pred_check_branch
    %21 = sbr.rel (0) target = $region13
  $region12: #{net_forward.6} parent=0 // pred_region
    _
  $region13: #{net_forward.6} parent=0 // pred_fallthru
    _
  // Predicated region
  $region14: #{net_forward.6} parent=0 // pred_check
    _
  $region15: #{net_forward.6} parent=0 // pred_check_branch
    %23 = sbr.rel (0) target = $region17
  $region16: #{net_forward.6} parent=0 // pred_region
    _
  $region17: #{net_forward.6} parent=0 // pred_fallthru
    _
  // Predicated region
  $region18: #{net_forward.6} parent=0 // pred_check
    _
  $region19: #{net_forward.6} parent=0 // pred_check_branch
    %25 = sbr.rel (0) target = $region21
  $region20: #{net_forward.6} parent=0 // pred_region
    _
  $region21: #{net_forward.6} parent=0 // pred_fallthru
    _
  // Predicated region
  $region22: #{net_forward.6} parent=0 // pred_check
    _
  $region23: #{net_forward.6} parent=0 // pred_check_branch
    %27 = sbr.rel (0) target = $region25
  $region24: #{net_forward.6} parent=0 // pred_region
    _
  $region25: #{net_forward.6} parent=0 // pred_fallthru
    _
  // Predicated region
  $region26: #{net_forward.6} parent=0 // pred_check
    _
  $region27: #{net_forward.6} parent=0 // pred_check_branch
    %29 = sbr.rel (0) target = $region29
  $region28: #{net_forward.6} parent=0 // pred_region
    _
  $region29: #{net_forward.6} parent=0 // pred_fallthru
    _
  // Predicated region
  $region30: #{net_forward.6} parent=0 // pred_check
    _
  $region31: #{net_forward.6} parent=0 // pred_check_branch
    %31 = sbr.rel (0) target = $region33
  $region32: #{net_forward.6} parent=0 // pred_region
    _
  $region33: #{net_forward.6} parent=0 // pred_fallthru
    _
  // Predicated region
  $region34: #{net_forward.6} parent=0 // pred_check
    _
  $region35: #{net_forward.6} parent=0 // pred_check_branch
    %33 = sbr.rel (0) target = $region37
  $region36: #{net_forward.6} parent=0 // pred_region
    _
  $region37: #{net_forward.6} parent=0 // pred_fallthru
    _
  %v35 = vld [vmem:[%s0] sm:$0xff]
  %v36 = vld [vmem:[%s0 + $0x8] sm:$0xff]
  %v37 = vld [vmem:[%s0 + $0x10] sm:$0xff]
  %v38 = vld [vmem:[%s0 + $0x18] sm:$0xff]
  %v39 = vld [vmem:[%s0 + $0x20] sm:$0xff]
  %v40 = vld [vmem:[%s0 + $0x28] sm:$0xff]
  %v41 = vld [vmem:[%s1] sm:$0x3]
  %v42 = vld [vmem:[%s5] sm:$0x1]
  %v43 = vpack.c.bf16 %v36, %v35
  %v44 = vpack.c.bf16 %v38, %v37
  %v45 = vpack.c.bf16 %v40, %v39
  %v47 = vlaneseq
  %v48 = vshrl.u32 %v47, 7
  %v49 = vsub.s32 0, %v48
  %v50 = vrot.slane %v42, %v49
  %vm52 = vcmask 31744
  %v54 = vsel %vm52, %v43, 0
  %v57 = vsel %vm52, %v44, 0
  %v60 = vsel %vm52, %v45, 0
  %vm62 = vcmask 1041408
  %v64 = vsel %vm62, %v41, 0
  %66 = vmatprep.subr.bf16.mxu0 0
  %67 = vmatpush1.bf16.msra.mxu0 %v64
  %68 = vmatprep.subr.bf16.mxu0 0
  %69 = vmatpush1.bf16.msra.mxu0 0
  %70 = vmatprep.subr.bf16.mxu0 0
  %71 = vmatpush1.bf16.msra.mxu0 0
  %72 = vmatprep.subr.bf16.mxu0 0
  %73 = vmatpush1.bf16.msra.mxu0 0
  %74 = vmatprep.subr.bf16.mxu0 0
  %75 = vmatpush1.bf16.msra.mxu0 0
  %76 = vmatprep.subr.bf16.mxu0 0
  %77 = vmatpush1.bf16.msra.mxu0 0
  %78 = vmatprep.subr.bf16.mxu0 0
  %79 = vmatpush1.bf16.msra.mxu0 0
  %80 = vmatprep.subr.bf16.mxu0 0
  %81 = vmatpush1.bf16.msra.mxu0 0
  %82 = vmatprep.subr.bf16.mxu0 0
  %83 = vmatpush1.bf16.msra.mxu0 0
  %84 = vmatprep.subr.bf16.mxu0 0
  %85 = vmatpush1.bf16.msra.mxu0 0
  %86 = vmatprep.subr.bf16.mxu0 0
  %87 = vmatpush1.bf16.msra.mxu0 0
  %88 = vmatprep.subr.bf16.mxu0 0
  %89 = vmatpush1.bf16.msra.mxu0 0
  %90 = vmatprep.subr.bf16.mxu0 0
  %91 = vmatpush1.bf16.msra.mxu0 0
  %92 = vmatprep.subr.bf16.mxu0 0
  %93 = vmatpush1.bf16.msra.mxu0 0
  %94 = vmatprep.subr.bf16.mxu0 0
  %95 = vmatpush1.bf16.msra.mxu0 0
  %96 = vmatprep.subr.bf16.mxu0 0
  %97 = vmatpush1.bf16.msra.mxu0 0
  %98 = vmatprep.mubr.bf16.mxu0 0
  %99 = vmatmul.mubr.bf16.gmra.mrb[0].mxu0 %v54
  %v100 = vpop.f32.mrb[0].mxu0
  %v101 = vadd.f32 %v50, %v100
  %v102 = vpop.f32.mrb[0].mxu0
  %v103 = vpop.f32.mrb[0].mxu0
  %v104 = vadd.f32 %v50, %v103
  %v105 = vpop.f32.mrb[0].mxu0
  %106 = vmatprep.mubr.bf16.mxu0 0
  %107 = vmatmul.mubr.bf16.gmra.mrb[0].mxu0 %v57
  %v108 = vpop.f32.mrb[0].mxu0
  %v109 = vadd.f32 %v50, %v108
  %v110 = vpop.f32.mrb[0].mxu0
  %v111 = vpop.f32.mrb[0].mxu0
  %v112 = vadd.f32 %v50, %v111
  %v113 = vpop.f32.mrb[0].mxu0
  %114 = vmatprep.mubr.bf16.mxu0 0
  %115 = vmatmul.mubr.bf16.gmra.mrb[0].mxu0 %v60
  %v116 = vpop.f32.mrb[0].mxu0
  %v117 = vadd.f32 %v50, %v116
  %v118 = vpop.f32.mrb[0].mxu0
  %v119 = vpop.f32.mrb[0].mxu0
  %v120 = vadd.f32 %v50, %v119
  %v121 = vpop.f32.mrb[0].mxu0
  %122 = vdwg.mxu0
  %v123 = vmax.f32 %v101, 0.0
  %v124 = vmax.f32 %v104, 0.0
  %v125 = vmax.f32 %v109, 0.0
  %v126 = vmax.f32 %v112, 0.0
  %v127 = vmax.f32 %v117, 0.0
  %v128 = vmax.f32 %v120, 0.0
  %v129 = vld [vmem:[%s2] sm:$0xf]
  %v130 = vld [vmem:[%s2 + $0x4] sm:$0xf]
  %v131 = vld [vmem:[%s2 + $0x8] sm:$0xf]
  %v132 = vld [vmem:[%s2 + $0xc] sm:$0xf]
  %v133 = vld [vmem:[%s2 + $0x10] sm:$0xf]
  %v134 = vld [vmem:[%s2 + $0x14] sm:$0xf]
  %v135 = vld [vmem:[%s2 + $0x18] sm:$0xf]
  %v136 = vld [vmem:[%s2 + $0x1c] sm:$0xf]
  %v137 = vld [vmem:[%s6] sm:$0x1]
  %v138 = vpack.c.bf16 %v124, %v123
  %v139 = vpack.c.bf16 %v126, %v125
  %v140 = vpack.c.bf16 %v128, %v127
  %v142 = vlaneseq
  %v143 = vshrl.u32 %v142, 7
  %v144 = vsub.s32 0, %v143
  %v145 = vrot.slane %v137, %v144
  %v155 = vunpack.c.l.b16 %v129
  %v156 = vunpack.c.l.b16 %v130
  %v157 = vunpack.c.l.b16 %v131
  %v158 = vunpack.c.l.b16 %v132
  %v159 = vunpack.c.l.b16 %v133
  %v160 = vunpack.c.l.b16 %v134
  %v161 = vunpack.c.l.b16 %v135
  %v162 = vunpack.c.l.b16 %v136
  %v163 = vpack.c.b16 %v156, %v155
  %v164 = vpack.c.b16 %v158, %v157
  %v165 = vpack.c.b16 %v160, %v159
  %v166 = vpack.c.b16 %v162, %v161
  %vm171 = vcmask 523264
  %v173 = vsel %vm171, %v138, 0
  %v176 = vsel %vm171, %v139, 0
  %v179 = vsel %vm171, %v140, 0
  %181 = vmatprep.subr.bf16.mxu0 0
  %182 = vmatpush1.bf16.msra.mxu0 %v163
  %183 = vmatprep.subr.bf16.mxu0 0
  %184 = vmatpush1.bf16.msra.mxu0 %v164
  %185 = vmatprep.subr.bf16.mxu0 0
  %186 = vmatpush1.bf16.msra.mxu0 %v165
  %187 = vmatprep.subr.bf16.mxu0 0
  %188 = vmatpush1.bf16.msra.mxu0 %v166
  %189 = vmatprep.subr.bf16.mxu0 0
  %190 = vmatpush1.bf16.msra.mxu0 0
  %191 = vmatprep.subr.bf16.mxu0 0
  %192 = vmatpush1.bf16.msra.mxu0 0
  %193 = vmatprep.subr.bf16.mxu0 0
  %194 = vmatpush1.bf16.msra.mxu0 0
  %195 = vmatprep.subr.bf16.mxu0 0
  %196 = vmatpush1.bf16.msra.mxu0 0
  %197 = vmatprep.subr.bf16.mxu0 0
  %198 = vmatpush1.bf16.msra.mxu0 0
  %199 = vmatprep.subr.bf16.mxu0 0
  %200 = vmatpush1.bf16.msra.mxu0 0
  %201 = vmatprep.subr.bf16.mxu0 0
  %202 = vmatpush1.bf16.msra.mxu0 0
  %203 = vmatprep.subr.bf16.mxu0 0
  %204 = vmatpush1.bf16.msra.mxu0 0
  %205 = vmatprep.subr.bf16.mxu0 0
  %206 = vmatpush1.bf16.msra.mxu0 0
  %207 = vmatprep.subr.bf16.mxu0 0
  %208 = vmatpush1.bf16.msra.mxu0 0
  %209 = vmatprep.subr.bf16.mxu0 0
  %210 = vmatpush1.bf16.msra.mxu0 0
  %211 = vmatprep.subr.bf16.mxu0 0
  %212 = vmatpush1.bf16.msra.mxu0 0
  %213 = vmatprep.mubr.bf16.mxu0 0
  %214 = vmatmul.mubr.bf16.gmra.mrb[0].mxu0 %v173
  %v215 = vpop.f32.mrb[0].mxu0
  %v216 = vadd.f32 %v145, %v215
  %v217 = vpop.f32.mrb[0].mxu0
  %v218 = vpop.f32.mrb[0].mxu0
  %v219 = vadd.f32 %v145, %v218
  %v220 = vpop.f32.mrb[0].mxu0
  %221 = vmatprep.mubr.bf16.mxu0 0
  %222 = vmatmul.mubr.bf16.gmra.mrb[0].mxu0 %v176
  %v223 = vpop.f32.mrb[0].mxu0
  %v224 = vadd.f32 %v145, %v223
  %v225 = vpop.f32.mrb[0].mxu0
  %v226 = vpop.f32.mrb[0].mxu0
  %v227 = vadd.f32 %v145, %v226
  %v228 = vpop.f32.mrb[0].mxu0
  %229 = vmatprep.mubr.bf16.mxu0 0
  %230 = vmatmul.mubr.bf16.gmra.mrb[0].mxu0 %v179
  %v231 = vpop.f32.mrb[0].mxu0
  %v232 = vadd.f32 %v145, %v231
  %v233 = vpop.f32.mrb[0].mxu0
  %v234 = vpop.f32.mrb[0].mxu0
  %v235 = vadd.f32 %v145, %v234
  %v236 = vpop.f32.mrb[0].mxu0
  %237 = vdwg.mxu0
  %v238 = vmax.f32 %v216, 0.0
  %v239 = vmax.f32 %v219, 0.0
  %v240 = vmax.f32 %v224, 0.0
  %v241 = vmax.f32 %v227, 0.0
  %v242 = vmax.f32 %v232, 0.0
  %v243 = vmax.f32 %v235, 0.0
  %v244 = vld [vmem:[%s3] sm:$0xf]
  %v245 = vld [vmem:[%s3 + $0x4] sm:$0xf]
  %v246 = vld [vmem:[%s3 + $0x8] sm:$0xf]
  %v247 = vld [vmem:[%s3 + $0xc] sm:$0xf]
  %v248 = vld [vmem:[%s3 + $0x10] sm:$0xf]
  %v249 = vld [vmem:[%s3 + $0x14] sm:$0xf]
  %v250 = vld [vmem:[%s3 + $0x18] sm:$0xf]
  %v251 = vld [vmem:[%s3 + $0x1c] sm:$0xf]
  %v252 = vld [vmem:[%s7] sm:$0x1]
  %v253 = vpack.c.bf16 %v239, %v238
  %v254 = vpack.c.bf16 %v241, %v240
  %v255 = vpack.c.bf16 %v243, %v242
  %v257 = vlaneseq
  %v258 = vshrl.u32 %v257, 7
  %v259 = vsub.s32 0, %v258
  %v260 = vrot.slane %v252, %v259
  %v270 = vunpack.c.l.b16 %v244
  %v271 = vunpack.c.l.b16 %v245
  %v272 = vunpack.c.l.b16 %v246
  %v273 = vunpack.c.l.b16 %v247
  %v274 = vunpack.c.l.b16 %v248
  %v275 = vunpack.c.l.b16 %v249
  %v276 = vunpack.c.l.b16 %v250
  %v277 = vunpack.c.l.b16 %v251
  %v278 = vpack.c.b16 %v271, %v270
  %v279 = vpack.c.b16 %v273, %v272
  %v280 = vpack.c.b16 %v275, %v274
  %v281 = vpack.c.b16 %v277, %v276
  %v287 = vsel %vm171, %v253, 0
  %v290 = vsel %vm171, %v254, 0
  %v293 = vsel %vm171, %v255, 0
  %295 = vmatprep.subr.bf16.mxu0 0
  %296 = vmatpush1.bf16.msra.mxu0 %v278
  %297 = vmatprep.subr.bf16.mxu0 0
  %298 = vmatpush1.bf16.msra.mxu0 %v279
  %299 = vmatprep.subr.bf16.mxu0 0
  %300 = vmatpush1.bf16.msra.mxu0 %v280
  %301 = vmatprep.subr.bf16.mxu0 0
  %302 = vmatpush1.bf16.msra.mxu0 %v281
  %303 = vmatprep.subr.bf16.mxu0 0
  %304 = vmatpush1.bf16.msra.mxu0 0
  %305 = vmatprep.subr.bf16.mxu0 0
  %306 = vmatpush1.bf16.msra.mxu0 0
  %307 = vmatprep.subr.bf16.mxu0 0
  %308 = vmatpush1.bf16.msra.mxu0 0
  %309 = vmatprep.subr.bf16.mxu0 0
  %310 = vmatpush1.bf16.msra.mxu0 0
  %311 = vmatprep.subr.bf16.mxu0 0
  %312 = vmatpush1.bf16.msra.mxu0 0
  %313 = vmatprep.subr.bf16.mxu0 0
  %314 = vmatpush1.bf16.msra.mxu0 0
  %315 = vmatprep.subr.bf16.mxu0 0
  %316 = vmatpush1.bf16.msra.mxu0 0
  %317 = vmatprep.subr.bf16.mxu0 0
  %318 = vmatpush1.bf16.msra.mxu0 0
  %319 = vmatprep.subr.bf16.mxu0 0
  %320 = vmatpush1.bf16.msra.mxu0 0
  %321 = vmatprep.subr.bf16.mxu0 0
  %322 = vmatpush1.bf16.msra.mxu0 0
  %323 = vmatprep.subr.bf16.mxu0 0
  %324 = vmatpush1.bf16.msra.mxu0 0
  %325 = vmatprep.subr.bf16.mxu0 0
  %326 = vmatpush1.bf16.msra.mxu0 0
  %327 = vmatprep.mubr.bf16.mxu0 0
  %328 = vmatmul.mubr.bf16.gmra.mrb[0].mxu0 %v287
  %v329 = vpop.f32.mrb[0].mxu0
  %v330 = vadd.f32 %v260, %v329
  %v331 = vpop.f32.mrb[0].mxu0
  %v332 = vpop.f32.mrb[0].mxu0
  %v333 = vadd.f32 %v260, %v332
  %v334 = vpop.f32.mrb[0].mxu0
  %335 = vmatprep.mubr.bf16.mxu0 0
  %336 = vmatmul.mubr.bf16.gmra.mrb[0].mxu0 %v290
  %v337 = vpop.f32.mrb[0].mxu0
  %v338 = vadd.f32 %v260, %v337
  %v339 = vpop.f32.mrb[0].mxu0
  %v340 = vpop.f32.mrb[0].mxu0
  %v341 = vadd.f32 %v260, %v340
  %v342 = vpop.f32.mrb[0].mxu0
  %343 = vmatprep.mubr.bf16.mxu0 0
  %344 = vmatmul.mubr.bf16.gmra.mrb[0].mxu0 %v293
  %v345 = vpop.f32.mrb[0].mxu0
  %v346 = vadd.f32 %v260, %v345
  %v347 = vpop.f32.mrb[0].mxu0
  %v348 = vpop.f32.mrb[0].mxu0
  %v349 = vadd.f32 %v260, %v348
  %v350 = vpop.f32.mrb[0].mxu0
  %351 = vdwg.mxu0
  %v352 = vmax.f32 %v330, 0.0
  %v353 = vmax.f32 %v333, 0.0
  %v354 = vmax.f32 %v338, 0.0
  %v355 = vmax.f32 %v341, 0.0
  %v356 = vmax.f32 %v346, 0.0
  %v357 = vmax.f32 %v349, 0.0
  %v358 = vld [vmem:[%s4] sm:$0x1]
  %v359 = vld [vmem:[#allocation2] sm:$0x1]
  %v361 = vlaneseq
  %v362 = vshrl.u32 %v361, 7
  %v363 = vsub.s32 0, %v362
  %v364 = vrot.slane %v358, %v363
  %v366 = vmul.f32 %v352, %v364
  %v367 = vmul.f32 %v353, %v364
  %v368 = vmul.f32 %v354, %v364
  %v369 = vmul.f32 %v355, %v364
  %v370 = vmul.f32 %v356, %v364
  %v371 = vmul.f32 %v357, %v364
  %vm372 = vcmask 56320
  %v373 = vsel %vm372, %v366, 0.0
  %374 = vadd.xlane.f32.xlu0 %v373
  %v375 = vpop.xlane.xlu0 %374
  %v376 = vsel %vm372, %v367, 0.0
  %377 = vadd.xlane.f32.xlu0 %v376
  %v378 = vpop.xlane.xlu0 %377
  %v379 = vsel %vm372, %v368, 0.0
  %380 = vadd.xlane.f32.xlu0 %v379
  %v381 = vpop.xlane.xlu0 %380
  %v382 = vsel %vm372, %v369, 0.0
  %383 = vadd.xlane.f32.xlu0 %v382
  %v384 = vpop.xlane.xlu0 %383
  %v385 = vsel %vm372, %v370, 0.0
  %386 = vadd.xlane.f32.xlu0 %v385
  %v387 = vpop.xlane.xlu0 %386
  %v388 = vsel %vm372, %v371, 0.0
  %389 = vadd.xlane.f32.xlu0 %v388
  %v390 = vpop.xlane.xlu0 %389
  %v392 = vlaneseq
  %v393 = vshrl.u32 %v392, 7
  %v394 = vsub.s32 0, %v393
  %v395 = vrot.slane %v359, %v394
  %v397 = vadd.f32 %v375, %v395
  %v398 = vadd.f32 %v378, %v395
  %v399 = vadd.f32 %v381, %v395
  %v400 = vadd.f32 %v384, %v395
  %v401 = vadd.f32 %v387, %v395
  %v402 = vadd.f32 %v390, %v395
  %vm403 = vcmask 7168
  %404 = vst.msk [vmem:[%s9] sm:$0xff] %vm403, %v397
  %405 = vst.msk [vmem:[%s9 + $0x8] sm:$0xff] %vm403, %v398
  %406 = vst.msk [vmem:[%s9 + $0x10] sm:$0xff] %vm403, %v399
  %407 = vst.msk [vmem:[%s9 + $0x18] sm:$0xff] %vm403, %v400
  %408 = vst.msk [vmem:[%s9 + $0x20] sm:$0xff] %vm403, %v401
  %409 = vst.msk [vmem:[%s9 + $0x28] sm:$0xff] %vm403, %v402
  // Predicated region
  $region38: #{net_forward.6} parent=0 // pred_check
    _
  $region39: #{net_forward.6} parent=0 // pred_check_branch
    %411 = sbr.rel (0) target = $region41
  $region40: #{net_forward.6} parent=0 // pred_region
    _
  $region41: #{net_forward.6} parent=0 // pred_fallthru
    _
  // Predicated region
  $region42: #{net_forward.6} parent=0 // pred_check
    _
  $region43: #{net_forward.6} parent=0 // pred_check_branch
    %413 = sbr.rel (0) target = $region45
  $region44: #{net_forward.6} parent=0 // pred_region
    _
  $region45: #{net_forward.6} parent=0 // pred_fallthru
    _

// kernel: net_forward.7
$region0: #{net_forward.7}
  #allocation0 [shape = 'u32[]', space=smem, size = 0x4, offset = 0x4, fixed_abs, tag = 'smem constant byte address 0x4 - core index']
  #allocation1 [shape = 'u32[144,128]{1,0:T(1,128)}', space=vmem, size = 0x12000, scoped, tag = 'internal scratch']
  %s0 = inlined_call_operand.vmem [shape: f32[16,7], index: 0, kind: input, shape index: {}]
  %s1 = inlined_call_operand.vmem [shape: bf16[7,64], index: 1, kind: input, shape index: {}]
  %s2 = inlined_call_operand.vmem [shape: bf16[64,64], index: 2, kind: input, shape index: {}]
  %s3 = inlined_call_operand.vmem [shape: bf16[64,11], index: 3, kind: input, shape index: {}]
  %s4 = inlined_call_operand.vmem [shape: bf16[11,18], index: 4, kind: input, shape index: {}]
  %s5 = inlined_call_operand.vmem [shape: f32[1,64], index: 5, kind: input, shape index: {}, may-alias: {5,6}]
  %s6 = inlined_call_operand.vmem [shape: f32[1,64], index: 6, kind: input, shape index: {}, may-alias: {5,6}]
  %s7 = inlined_call_operand.vmem [shape: f32[1,11], index: 7, kind: input, shape index: {}]
  %s8 = inlined_call_operand.vmem [shape: f32[1,18], index: 8, kind: input, shape index: {}]
  %s9 = inlined_call_operand.vmem [shape: f32[16,29], index: 9, kind: output, shape index: {}]
  %s10 = sld [smem:[#allocation0]]
  $region46: #{net_forward.7} parent=0
    _
  %s12 = ssub.s32 1, %s10
  %s13 = scalar_select 0, %s12, %s10
  // Predicated region
  $region2: #{net_forward.7} parent=0 // pred_check
    _
  $region3: #{net_forward.7} parent=0 // pred_check_branch
    %15 = sbr.rel (0) target = $region5
  $region4: #{net_forward.7} parent=0 // pred_region
    _
  $region5: #{net_forward.7} parent=0 // pred_fallthru
    _
  // Predicated region
  $region6: #{net_forward.7} parent=0 // pred_check
    _
  $region7: #{net_forward.7} parent=0 // pred_check_branch
    %17 = sbr.rel (0) target = $region9
  $region8: #{net_forward.7} parent=0 // pred_region
    _
  $region9: #{net_forward.7} parent=0 // pred_fallthru
    _
  // Predicated region
  $region10: #{net_forward.7} parent=0 // pred_check
    _
  $region11: #{net_forward.7} parent=0 // pred_check_branch
    %19 = sbr.rel (0) target = $region13
  $region12: #{net_forward.7} parent=0 // pred_region
    _
  $region13: #{net_forward.7} parent=0 // pred_fallthru
    _
  // Predicated region
  $region14: #{net_forward.7} parent=0 // pred_check
    _
  $region15: #{net_forward.7} parent=0 // pred_check_branch
    %21 = sbr.rel (0) target = $region17
  $region16: #{net_forward.7} parent=0 // pred_region
    _
  $region17: #{net_forward.7} parent=0 // pred_fallthru
    _
  // Predicated region
  $region18: #{net_forward.7} parent=0 // pred_check
    _
  $region19: #{net_forward.7} parent=0 // pred_check_branch
    %23 = sbr.rel (0) target = $region21
  $region20: #{net_forward.7} parent=0 // pred_region
    _
  $region21: #{net_forward.7} parent=0 // pred_fallthru
    _
  // Predicated region
  $region22: #{net_forward.7} parent=0 // pred_check
    _
  $region23: #{net_forward.7} parent=0 // pred_check_branch
    %25 = sbr.rel (0) target = $region25
  $region24: #{net_forward.7} parent=0 // pred_region
    _
  $region25: #{net_forward.7} parent=0 // pred_fallthru
    _
  // Predicated region
  $region26: #{net_forward.7} parent=0 // pred_check
    _
  $region27: #{net_forward.7} parent=0 // pred_check_branch
    %27 = sbr.rel (0) target = $region29
  $region28: #{net_forward.7} parent=0 // pred_region
    _
  $region29: #{net_forward.7} parent=0 // pred_fallthru
    _
  // Predicated region
  $region30: #{net_forward.7} parent=0 // pred_check
    _
  $region31: #{net_forward.7} parent=0 // pred_check_branch
    %29 = sbr.rel (0) target = $region33
  $region32: #{net_forward.7} parent=0 // pred_region
    _
  $region33: #{net_forward.7} parent=0 // pred_fallthru
    _
  // Predicated region
  $region34: #{net_forward.7} parent=0 // pred_check
    _
  $region35: #{net_forward.7} parent=0 // pred_check_branch
    %31 = sbr.rel (0) target = $region37
  $region36: #{net_forward.7} parent=0 // pred_region
    _
  $region37: #{net_forward.7} parent=0 // pred_fallthru
    _
  %v33 = vld [vmem:[%s0] sm:$0xff]
  %v34 = vld [vmem:[%s0 + $0x8] sm:$0xff]
  %v35 = vld [vmem:[%s1] sm:$0xf]
  %v36 = vld [vmem:[%s5] sm:$0x1]
  %v37 = vpack.c.bf16 %v34, %v33
  %v39 = vlaneseq
  %v40 = vshrl.u32 %v39, 7
  %v41 = vsub.s32 0, %v40
  %v42 = vrot.slane %v36, %v41
  %vm44 = vcmask 56320
  %v46 = vsel %vm44, %v37, 0
  %vm48 = vcmask 1042432
  %vm49 = vcmask 1043456
  %v50 = vsel %vm48, 4294967295, 65535
  %v51 = vsel %vm49, %v50, 0
  %v53 = vand.u32 %v35, %v51
  %55 = vmatprep.subr.bf16.mxu0 0
  %56 = vmatpush1.bf16.msra.mxu0 %v53
  %57 = vmatprep.subr.bf16.mxu0 0
  %58 = vmatpush1.bf16.msra.mxu0 0
  %59 = vmatprep.subr.bf16.mxu0 0
  %60 = vmatpush1.bf16.msra.mxu0 0
  %61 = vmatprep.subr.bf16.mxu0 0
  %62 = vmatpush1.bf16.msra.mxu0 0
  %63 = vmatprep.subr.bf16.mxu0 0
  %64 = vmatpush1.bf16.msra.mxu0 0
  %65 = vmatprep.subr.bf16.mxu0 0
  %66 = vmatpush1.bf16.msra.mxu0 0
  %67 = vmatprep.subr.bf16.mxu0 0
  %68 = vmatpush1.bf16.msra.mxu0 0
  %69 = vmatprep.subr.bf16.mxu0 0
  %70 = vmatpush1.bf16.msra.mxu0 0
  %71 = vmatprep.subr.bf16.mxu0 0
  %72 = vmatpush1.bf16.msra.mxu0 0
  %73 = vmatprep.subr.bf16.mxu0 0
  %74 = vmatpush1.bf16.msra.mxu0 0
  %75 = vmatprep.subr.bf16.mxu0 0
  %76 = vmatpush1.bf16.msra.mxu0 0
  %77 = vmatprep.subr.bf16.mxu0 0
  %78 = vmatpush1.bf16.msra.mxu0 0
  %79 = vmatprep.subr.bf16.mxu0 0
  %80 = vmatpush1.bf16.msra.mxu0 0
  %81 = vmatprep.subr.bf16.mxu0 0
  %82 = vmatpush1.bf16.msra.mxu0 0
  %83 = vmatprep.subr.bf16.mxu0 0
  %84 = vmatpush1.bf16.msra.mxu0 0
  %85 = vmatprep.subr.bf16.mxu0 0
  %86 = vmatpush1.bf16.msra.mxu0 0
  %87 = vmatprep.mubr.bf16.mxu0 0
  %88 = vmatmul.mubr.bf16.gmra.mrb[0].mxu0 %v46
  %v89 = vpop.f32.mrb[0].mxu0
  %v90 = vadd.f32 %v42, %v89
  %v91 = vpop.f32.mrb[0].mxu0
  %v92 = vpop.f32.mrb[0].mxu0
  %v93 = vadd.f32 %v42, %v92
  %v94 = vpop.f32.mrb[0].mxu0
  %95 = vdwg.mxu0
  %v96 = vmax.f32 %v90, 0.0
  %v97 = vmax.f32 %v93, 0.0
  %v98 = vld [vmem:[%s2] sm:$0xf]
  %v99 = vld [vmem:[%s2 + $0x4] sm:$0xf]
  %v100 = vld [vmem:[%s2 + $0x8] sm:$0xf]
  %v101 = vld [vmem:[%s2 + $0xc] sm:$0xf]
  %v102 = vld [vmem:[%s2 + $0x10] sm:$0xf]
  %v103 = vld [vmem:[%s2 + $0x14] sm:$0xf]
  %v104 = vld [vmem:[%s2 + $0x18] sm:$0xf]
  %v105 = vld [vmem:[%s2 + $0x1c] sm:$0xf]
  %v106 = vld [vmem:[%s6] sm:$0x1]
  %v107 = vpack.c.bf16 %v97, %v96
  %v109 = vlaneseq
  %v110 = vshrl.u32 %v109, 7
  %v111 = vsub.s32 0, %v110
  %v112 = vrot.slane %v106, %v111
  %v122 = vunpack.c.l.b16 %v98
  %v123 = vunpack.c.l.b16 %v99
  %v124 = vunpack.c.l.b16 %v100
  %v125 = vunpack.c.l.b16 %v101
  %v126 = vunpack.c.l.b16 %v102
  %v127 = vunpack.c.l.b16 %v103
  %v128 = vunpack.c.l.b16 %v104
  %v129 = vunpack.c.l.b16 %v105
  %v130 = vpack.c.b16 %v123, %v122
  %v131 = vpack.c.b16 %v125, %v124
  %v132 = vpack.c.b16 %v127, %v126
  %v133 = vpack.c.b16 %v129, %v128
  %vm138 = vcmask 523264
  %v140 = vsel %vm138, %v107, 0
  %142 = vmatprep.subr.bf16.mxu0 0
  %143 = vmatpush1.bf16.msra.mxu0 %v130
  %144 = vmatprep.subr.bf16.mxu0 0
  %145 = vmatpush1.bf16.msra.mxu0 %v131
  %146 = vmatprep.subr.bf16.mxu0 0
  %147 = vmatpush1.bf16.msra.mxu0 %v132
  %148 = vmatprep.subr.bf16.mxu0 0
  %149 = vmatpush1.bf16.msra.mxu0 %v133
  %150 = vmatprep.subr.bf16.mxu0 0
  %151 = vmatpush1.bf16.msra.mxu0 0
  %152 = vmatprep.subr.bf16.mxu0 0
  %153 = vmatpush1.bf16.msra.mxu0 0
  %154 = vmatprep.subr.bf16.mxu0 0
  %155 = vmatpush1.bf16.msra.mxu0 0
  %156 = vmatprep.subr.bf16.mxu0 0
  %157 = vmatpush1.bf16.msra.mxu0 0
  %158 = vmatprep.subr.bf16.mxu0 0
  %159 = vmatpush1.bf16.msra.mxu0 0
  %160 = vmatprep.subr.bf16.mxu0 0
  %161 = vmatpush1.bf16.msra.mxu0 0
  %162 = vmatprep.subr.bf16.mxu0 0
  %163 = vmatpush1.bf16.msra.mxu0 0
  %164 = vmatprep.subr.bf16.mxu0 0
  %165 = vmatpush1.bf16.msra.mxu0 0
  %166 = vmatprep.subr.bf16.mxu0 0
  %167 = vmatpush1.bf16.msra.mxu0 0
  %168 = vmatprep.subr.bf16.mxu0 0
  %169 = vmatpush1.bf16.msra.mxu0 0
  %170 = vmatprep.subr.bf16.mxu0 0
  %171 = vmatpush1.bf16.msra.mxu0 0
  %172 = vmatprep.subr.bf16.mxu0 0
  %173 = vmatpush1.bf16.msra.mxu0 0
  %174 = vmatprep.mubr.bf16.mxu0 0
  %175 = vmatmul.mubr.bf16.gmra.mrb[0].mxu0 %v140
  %v176 = vpop.f32.mrb[0].mxu0
  %v177 = vadd.f32 %v112, %v176
  %v178 = vpop.f32.mrb[0].mxu0
  %v179 = vpop.f32.mrb[0].mxu0
  %v180 = vadd.f32 %v112, %v179
  %v181 = vpop.f32.mrb[0].mxu0
  %182 = vdwg.mxu0
  %v183 = vmax.f32 %v177, 0.0
  %v184 = vmax.f32 %v180, 0.0
  %v185 = vld [vmem:[%s3] sm:$0xf]
  %v186 = vld [vmem:[%s3 + $0x4] sm:$0xf]
  %v187 = vld [vmem:[%s3 + $0x8] sm:$0xf]
  %v188 = vld [vmem:[%s3 + $0xc] sm:$0xf]
  %v189 = vld [vmem:[%s3 + $0x10] sm:$0xf]
  %v190 = vld [vmem:[%s3 + $0x14] sm:$0xf]
  %v191 = vld [vmem:[%s3 + $0x18] sm:$0xf]
  %v192 = vld [vmem:[%s3 + $0x1c] sm:$0xf]
  %v193 = vld [vmem:[%s7] sm:$0x1]
  %v194 = vpack.c.bf16 %v184, %v183
  %v196 = vlaneseq
  %v197 = vshrl.u32 %v196, 7
  %v198 = vsub.s32 0, %v197
  %v199 = vrot.slane %v193, %v198
  %v209 = vunpack.c.l.b16 %v185
  %v210 = vunpack.c.l.b16 %v186
  %v211 = vunpack.c.l.b16 %v187
  %v212 = vunpack.c.l.b16 %v188
  %v213 = vunpack.c.l.b16 %v189
  %v214 = vunpack.c.l.b16 %v190
  %v215 = vunpack.c.l.b16 %v191
  %v216 = vunpack.c.l.b16 %v192
  %v217 = vpack.c.b16 %v210, %v209
  %v218 = vpack.c.b16 %v212, %v211
  %v219 = vpack.c.b16 %v214, %v213
  %v220 = vpack.c.b16 %v216, %v215
  %v226 = vsel %vm138, %v194, 0
  %228 = vmatprep.subr.bf16.mxu0 0
  %229 = vmatpush1.bf16.msra.mxu0 %v217
  %230 = vmatprep.subr.bf16.mxu0 0
  %231 = vmatpush1.bf16.msra.mxu0 %v218
  %232 = vmatprep.subr.bf16.mxu0 0
  %233 = vmatpush1.bf16.msra.mxu0 %v219
  %234 = vmatprep.subr.bf16.mxu0 0
  %235 = vmatpush1.bf16.msra.mxu0 %v220
  %236 = vmatprep.subr.bf16.mxu0 0
  %237 = vmatpush1.bf16.msra.mxu0 0
  %238 = vmatprep.subr.bf16.mxu0 0
  %239 = vmatpush1.bf16.msra.mxu0 0
  %240 = vmatprep.subr.bf16.mxu0 0
  %241 = vmatpush1.bf16.msra.mxu0 0
  %242 = vmatprep.subr.bf16.mxu0 0
  %243 = vmatpush1.bf16.msra.mxu0 0
  %244 = vmatprep.subr.bf16.mxu0 0
  %245 = vmatpush1.bf16.msra.mxu0 0
  %246 = vmatprep.subr.bf16.mxu0 0
  %247 = vmatpush1.bf16.msra.mxu0 0
  %248 = vmatprep.subr.bf16.mxu0 0
  %249 = vmatpush1.bf16.msra.mxu0 0
  %250 = vmatprep.subr.bf16.mxu0 0
  %251 = vmatpush1.bf16.msra.mxu0 0
  %252 = vmatprep.subr.bf16.mxu0 0
  %253 = vmatpush1.bf16.msra.mxu0 0
  %254 = vmatprep.subr.bf16.mxu0 0
  %255 = vmatpush1.bf16.msra.mxu0 0
  %256 = vmatprep.subr.bf16.mxu0 0
  %257 = vmatpush1.bf16.msra.mxu0 0
  %258 = vmatprep.subr.bf16.mxu0 0
  %259 = vmatpush1.bf16.msra.mxu0 0
  %260 = vmatprep.mubr.bf16.mxu0 0
  %261 = vmatmul.mubr.bf16.gmra.mrb[0].mxu0 %v226
  %v262 = vpop.f32.mrb[0].mxu0
  %v263 = vadd.f32 %v199, %v262
  %v264 = vpop.f32.mrb[0].mxu0
  %v265 = vpop.f32.mrb[0].mxu0
  %v266 = vadd.f32 %v199, %v265
  %v267 = vpop.f32.mrb[0].mxu0
  %268 = vdwg.mxu0
  %v269 = vmax.f32 %v263, 0.0
  %v270 = vmax.f32 %v266, 0.0
  %v271 = vld [vmem:[%s4] sm:$0xf]
  %v272 = vld [vmem:[%s4 + $0x4] sm:$0x3]
  %v273 = vld [vmem:[%s8] sm:$0x1]
  %v274 = vpack.c.bf16 %v270, %v269
  %v276 = vlaneseq
  %v277 = vshrl.u32 %v276, 7
  %v278 = vsub.s32 0, %v277
  %v279 = vrot.slane %v273, %v278
  %v283 = vunpack.c.l.b16 %v271
  %v284 = vunpack.c.l.b16 %v272
  %v285 = vpack.c.b16 %v284, %v283
  %vm286 = vcmask 89088
  %v288 = vsel %vm286, %v274, 0
  %vm290 = vcmask 1044480
  %vm291 = vcmask 1045504
  %v292 = vsel %vm290, 4294967295, 65535
  %v293 = vsel %vm291, %v292, 0
  %v295 = vand.u32 %v285, %v293
  %297 = vmatprep.subr.bf16.mxu0 0
  %298 = vmatpush1.bf16.msra.mxu0 %v295
  %299 = vmatprep.subr.bf16.mxu0 0
  %300 = vmatpush1.bf16.msra.mxu0 0
  %301 = vmatprep.subr.bf16.mxu0 0
  %302 = vmatpush1.bf16.msra.mxu0 0
  %303 = vmatprep.subr.bf16.mxu0 0
  %304 = vmatpush1.bf16.msra.mxu0 0
  %305 = vmatprep.subr.bf16.mxu0 0
  %306 = vmatpush1.bf16.msra.mxu0 0
  %307 = vmatprep.subr.bf16.mxu0 0
  %308 = vmatpush1.bf16.msra.mxu0 0
  %309 = vmatprep.subr.bf16.mxu0 0
  %310 = vmatpush1.bf16.msra.mxu0 0
  %311 = vmatprep.subr.bf16.mxu0 0
  %312 = vmatpush1.bf16.msra.mxu0 0
  %313 = vmatprep.subr.bf16.mxu0 0
  %314 = vmatpush1.bf16.msra.mxu0 0
  %315 = vmatprep.subr.bf16.mxu0 0
  %316 = vmatpush1.bf16.msra.mxu0 0
  %317 = vmatprep.subr.bf16.mxu0 0
  %318 = vmatpush1.bf16.msra.mxu0 0
  %319 = vmatprep.subr.bf16.mxu0 0
  %320 = vmatpush1.bf16.msra.mxu0 0
  %321 = vmatprep.subr.bf16.mxu0 0
  %322 = vmatpush1.bf16.msra.mxu0 0
  %323 = vmatprep.subr.bf16.mxu0 0
  %324 = vmatpush1.bf16.msra.mxu0 0
  %325 = vmatprep.subr.bf16.mxu0 0
  %326 = vmatpush1.bf16.msra.mxu0 0
  %327 = vmatprep.subr.bf16.mxu0 0
  %328 = vmatpush1.bf16.msra.mxu0 0
  %329 = vmatprep.mubr.bf16.mxu0 0
  %330 = vmatmul.mubr.bf16.gmra.mrb[0].mxu0 %v288
  %v331 = vpop.f32.mrb[0].mxu0
  %v332 = vadd.f32 %v279, %v331
  %v333 = vpop.f32.mrb[0].mxu0
  %v334 = vpop.f32.mrb[0].mxu0
  %v335 = vadd.f32 %v279, %v334
  %v336 = vpop.f32.mrb[0].mxu0
  %337 = vdwg.mxu0
  %340 = vrot.lane.b32.xlu0 %v332, 11
  %v341 = vpop.permute.xlu0 %340
  %342 = vrot.lane.b32.xlu0 %v335, 11
  %v343 = vpop.permute.xlu0 %342
  %v346 = vsel %vm286, %v269, %v341
  %v347 = vsel %vm286, %v270, %v343
  %vm348 = vcmask 236544
  %349 = vst.msk [vmem:[%s9] sm:$0xff] %vm348, %v346
  %350 = vst.msk [vmem:[%s9 + $0x8] sm:$0xff] %vm348, %v347
  // Predicated region
  $region38: #{net_forward.7} parent=0 // pred_check
    _
  $region39: #{net_forward.7} parent=0 // pred_check_branch
    %352 = sbr.rel (0) target = $region41
  $region40: #{net_forward.7} parent=0 // pred_region
    _
  $region41: #{net_forward.7} parent=0 // pred_fallthru
    _
  // Predicated region
  $region42: #{net_forward.7} parent=0 // pred_check
    _
  $region43: #{net_forward.7} parent=0 // pred_check_branch
    %354 = sbr.rel (0) target = $region45
  $region44: #{net_forward.7} parent=0 // pred_region
    _
  $region45: #{net_forward.7} parent=0 // pred_fallthru
    _

// kernel: net_forward.8
$region0: #{net_forward.8}
  #allocation0 [shape = 'u32[]', space=smem, size = 0x4, offset = 0x4, fixed_abs, tag = 'smem constant byte address 0x4 - core index']
  #allocation1 [shape = 'u32[144,128]{1,0:T(1,128)}', space=vmem, size = 0x12000, scoped, tag = 'internal scratch']
  #allocation2 [shape = 'f32[1,1]{1,0:T(1,128)S(1)}', space=vmem, size = 0x200, scoped, tag = 'scoped memory for net_forward.8']
  %s0 = inlined_call_operand.vmem [shape: f32[48,14], index: 0, kind: input, shape index: {}]
  %s1 = inlined_call_operand.vmem [shape: bf16[14,32], index: 1, kind: input, shape index: {}]
  %s2 = inlined_call_operand.vmem [shape: bf16[32,32], index: 2, kind: input, shape index: {}]
  %s3 = inlined_call_operand.vmem [shape: bf16[32,7], index: 3, kind: input, shape index: {}]
  %s4 = inlined_call_operand.vmem [shape: f32[1,7], index: 4, kind: input, shape index: {}]
  %s5 = inlined_call_operand.vmem [shape: f32[1,32], index: 5, kind: input, shape index: {}, may-alias: {5,6}]
  %s6 = inlined_call_operand.vmem [shape: f32[1,32], index: 6, kind: input, shape index: {}, may-alias: {5,6}]
  %s7 = inlined_call_operand.vmem [shape: f32[1,7], index: 7, kind: input, shape index: {}]
  %s8 = inlined_call_operand.<no memory space> [shape: f32[1,1], index: 8, kind: input, shape index: {}]
  %s9 = inlined_call_operand.vmem [shape: f32[48,1], index: 9, kind: output, shape index: {}]
  %s10 = sld [smem:[#allocation0]]
  $region46: #{net_forward.8} parent=0
    _
  %s12 = ssub.s32 1, %s10
  %s13 = scalar_select 0, %s12, %s10
  %v14 = vstv %s8
  %15 = vst [vmem:[#allocation2] sm:$0x1] %v14
  // Predicated region
  $region2: #{net_forward.8} parent=0 // pred_check
    _
  $region3: #{net_forward.8} parent=0 // pred_check_branch
    %17 = sbr.rel (0) target = $region5
  $region4: #{net_forward.8} parent=0 // pred_region
    _
  $region5: #{net_forward.8} parent=0 // pred_fallthru
    _
  // Predicated region
  $region6: #{net_forward.8} parent=0 // pred_check
    _
  $region7: #{net_forward.8} parent=0 // pred_check_branch
    %19 = sbr.rel (0) target = $region9
  $region8: #{net_forward.8} parent=0 // pred_region
    _
  $region9: #{net_forward.8} parent=0 // pred_fallthru
    _
  // Predicated region
  $region10: #{net_forward.8} parent=0 // pred_check
    _
  $region11: #{net_forward.8} parent=0 // pred_check_branch
    %21 = sbr.rel (0) target = $region13
  $region12: #{net_forward.8} parent=0 // pred_region
    _
  $region13: #{net_forward.8} parent=0 // pred_fallthru
    _
  // Predicated region
  $region14: #{net_forward.8} parent=0 // pred_check
    _
  $region15: #{net_forward.8} parent=0 // pred_check_branch
    %23 = sbr.rel (0) target = $region17
  $region16: #{net_forward.8} parent=0 // pred_region
    _
  $region17: #{net_forward.8} parent=0 // pred_fallthru
    _
  // Predicated region
  $region18: #{net_forward.8} parent=0 // pred_check
    _
  $region19: #{net_forward.8} parent=0 // pred_check_branch
    %25 = sbr.rel (0) target = $region21
  $region20: #{net_forward.8} parent=0 // pred_region
    _
  $region21: #{net_forward.8} parent=0 // pred_fallthru
    _
  // Predicated region
  $region22: #{net_forward.8} parent=0 // pred_check
    _
  $region23: #{net_forward.8} parent=0 // pred_check_branch
    %27 = sbr.rel (0) target = $region25
  $region24: #{net_forward.8} parent=0 // pred_region
    _
  $region25: #{net_forward.8} parent=0 // pred_fallthru
    _
  // Predicated region
  $region26: #{net_forward.8} parent=0 // pred_check
    _
  $region27: #{net_forward.8} parent=0 // pred_check_branch
    %29 = sbr.rel (0) target = $region29
  $region28: #{net_forward.8} parent=0 // pred_region
    _
  $region29: #{net_forward.8} parent=0 // pred_fallthru
    _
  // Predicated region
  $region30: #{net_forward.8} parent=0 // pred_check
    _
  $region31: #{net_forward.8} parent=0 // pred_check_branch
    %31 = sbr.rel (0) target = $region33
  $region32: #{net_forward.8} parent=0 // pred_region
    _
  $region33: #{net_forward.8} parent=0 // pred_fallthru
    _
  // Predicated region
  $region34: #{net_forward.8} parent=0 // pred_check
    _
  $region35: #{net_forward.8} parent=0 // pred_check_branch
    %33 = sbr.rel (0) target = $region37
  $region36: #{net_forward.8} parent=0 // pred_region
    _
  $region37: #{net_forward.8} parent=0 // pred_fallthru
    _
  %v35 = vld [vmem:[%s0] sm:$0xff]
  %v36 = vld [vmem:[%s0 + $0x8] sm:$0xff]
  %v37 = vld [vmem:[%s0 + $0x10] sm:$0xff]
  %v38 = vld [vmem:[%s0 + $0x18] sm:$0xff]
  %v39 = vld [vmem:[%s0 + $0x20] sm:$0xff]
  %v40 = vld [vmem:[%s0 + $0x28] sm:$0xff]
  %v41 = vld [vmem:[%s1] sm:$0xf]
  %v42 = vld [vmem:[%s1 + $0x4] sm:$0x7]
  %v43 = vld [vmem:[%s5] sm:$0x1]
  %v44 = vpack.c.bf16 %v36, %v35
  %v45 = vpack.c.bf16 %v38, %v37
  %v46 = vpack.c.bf16 %v40, %v39
  %v48 = vlaneseq
  %v49 = vshrl.u32 %v48, 7
  %v50 = vsub.s32 0, %v49
  %v51 = vrot.slane %v43, %v50
  %v55 = vunpack.c.l.b16 %v41
  %v56 = vunpack.c.l.b16 %v42
  %v57 = vpack.c.b16 %v56, %v55
  %vm58 = vcmask 113664
  %v60 = vsel %vm58, %v44, 0
  %v63 = vsel %vm58, %v45, 0
  %v66 = vsel %vm58, %v46, 0
  %vm68 = vcmask 1046528
  %v70 = vsel %vm68, %v57, 0
  %72 = vmatprep.subr.bf16.mxu0 0
  %73 = vmatpush1.bf16.msra.mxu0 %v70
  %74 = vmatprep.subr.bf16.mxu0 0
  %75 = vmatpush1.bf16.msra.mxu0 0
  %76 = vmatprep.subr.bf16.mxu0 0
  %77 = vmatpush1.bf16.msra.mxu0 0
  %78 = vmatprep.subr.bf16.mxu0 0
  %79 = vmatpush1.bf16.msra.mxu0 0
  %80 = vmatprep.subr.bf16.mxu0 0
  %81 = vmatpush1.bf16.msra.mxu0 0
  %82 = vmatprep.subr.bf16.mxu0 0
  %83 = vmatpush1.bf16.msra.mxu0 0
  %84 = vmatprep.subr.bf16.mxu0 0
  %85 = vmatpush1.bf16.msra.mxu0 0
  %86 = vmatprep.subr.bf16.mxu0 0
  %87 = vmatpush1.bf16.msra.mxu0 0
  %88 = vmatprep.subr.bf16.mxu0 0
  %89 = vmatpush1.bf16.msra.mxu0 0
  %90 = vmatprep.subr.bf16.mxu0 0
  %91 = vmatpush1.bf16.msra.mxu0 0
  %92 = vmatprep.subr.bf16.mxu0 0
  %93 = vmatpush1.bf16.msra.mxu0 0
  %94 = vmatprep.subr.bf16.mxu0 0
  %95 = vmatpush1.bf16.msra.mxu0 0
  %96 = vmatprep.subr.bf16.mxu0 0
  %97 = vmatpush1.bf16.msra.mxu0 0
  %98 = vmatprep.subr.bf16.mxu0 0
  %99 = vmatpush1.bf16.msra.mxu0 0
  %100 = vmatprep.subr.bf16.mxu0 0
  %101 = vmatpush1.bf16.msra.mxu0 0
  %102 = vmatprep.subr.bf16.mxu0 0
  %103 = vmatpush1.bf16.msra.mxu0 0
  %104 = vmatprep.mubr.bf16.mxu0 0
  %105 = vmatmul.mubr.bf16.gmra.mrb[0].mxu0 %v60
  %v106 = vpop.f32.mrb[0].mxu0
  %v107 = vadd.f32 %v51, %v106
  %v108 = vpop.f32.mrb[0].mxu0
  %v109 = vpop.f32.mrb[0].mxu0
  %v110 = vadd.f32 %v51, %v109
  %v111 = vpop.f32.mrb[0].mxu0
  %112 = vmatprep.mubr.bf16.mxu0 0
  %113 = vmatmul.mubr.bf16.gmra.mrb[0].mxu0 %v63
  %v114 = vpop.f32.mrb[0].mxu0
  %v115 = vadd.f32 %v51, %v114
  %v116 = vpop.f32.mrb[0].mxu0
  %v117 = vpop.f32.mrb[0].mxu0
  %v118 = vadd.f32 %v51, %v117
  %v119 = vpop.f32.mrb[0].mxu0
  %120 = vmatprep.mubr.bf16.mxu0 0
  %121 = vmatmul.mubr.bf16.gmra.mrb[0].mxu0 %v66
  %v122 = vpop.f32.mrb[0].mxu0
  %v123 = vadd.f32 %v51, %v122
  %v124 = vpop.f32.mrb[0].mxu0
  %v125 = vpop.f32.mrb[0].mxu0
  %v126 = vadd.f32 %v51, %v125
  %v127 = vpop.f32.mrb[0].mxu0
  %128 = vdwg.mxu0
  %v129 = vmax.f32 %v107, 0.0
  %v130 = vmax.f32 %v110, 0.0
  %v131 = vmax.f32 %v115, 0.0
  %v132 = vmax.f32 %v118, 0.0
  %v133 = vmax.f32 %v123, 0.0
  %v134 = vmax.f32 %v126, 0.0
  %v135 = vld [vmem:[%s2] sm:$0xf]
  %v136 = vld [vmem:[%s2 + $0x4] sm:$0xf]
  %v137 = vld [vmem:[%s2 + $0x8] sm:$0xf]
  %v138 = vld [vmem:[%s2 + $0xc] sm:$0xf]
  %v139 = vld [vmem:[%s6] sm:$0x1]
  %v140 = vpack.c.bf16 %v130, %v129
  %v141 = vpack.c.bf16 %v132, %v131
  %v142 = vpack.c.bf16 %v134, %v133
  %v144 = vlaneseq
  %v145 = vshrl.u32 %v144, 7
  %v146 = vsub.s32 0, %v145
  %v147 = vrot.slane %v139, %v146
  %v153 = vunpack.c.l.b16 %v135
  %v154 = vunpack.c.l.b16 %v136
  %v155 = vunpack.c.l.b16 %v137
  %v156 = vunpack.c.l.b16 %v138
  %v157 = vpack.c.b16 %v154, %v153
  %v158 = vpack.c.b16 %v156, %v155
  %vm161 = vcmask 261120
  %v163 = vsel %vm161, %v140, 0
  %v166 = vsel %vm161, %v141, 0
  %v169 = vsel %vm161, %v142, 0
  %171 = vmatprep.subr.bf16.mxu0 0
  %172 = vmatpush1.bf16.msra.mxu0 %v157
  %173 = vmatprep.subr.bf16.mxu0 0
  %174 = vmatpush1.bf16.msra.mxu0 %v158
  %175 = vmatprep.subr.bf16.mxu0 0
  %176 = vmatpush1.bf16.msra.mxu0 0
  %177 = vmatprep.subr.bf16.mxu0 0
  %178 = vmatpush1.bf16.msra.mxu0 0
  %179 = vmatprep.subr.bf16.mxu0 0
  %180 = vmatpush1.bf16.msra.mxu0 0
  %181 = vmatprep.subr.bf16.mxu0 0
  %182 = vmatpush1.bf16.msra.mxu0 0
  %183 = vmatprep.subr.bf16.mxu0 0
  %184 = vmatpush1.bf16.msra.mxu0 0
  %185 = vmatprep.subr.bf16.mxu0 0
  %186 = vmatpush1.bf16.msra.mxu0 0
  %187 = vmatprep.subr.bf16.mxu0 0
  %188 = vmatpush1.bf16.msra.mxu0 0
  %189 = vmatprep.subr.bf16.mxu0 0
  %190 = vmatpush1.bf16.msra.mxu0 0
  %191 = vmatprep.subr.bf16.mxu0 0
  %192 = vmatpush1.bf16.msra.mxu0 0
  %193 = vmatprep.subr.bf16.mxu0 0
  %194 = vmatpush1.bf16.msra.mxu0 0
  %195 = vmatprep.subr.bf16.mxu0 0
  %196 = vmatpush1.bf16.msra.mxu0 0
  %197 = vmatprep.subr.bf16.mxu0 0
  %198 = vmatpush1.bf16.msra.mxu0 0
  %199 = vmatprep.subr.bf16.mxu0 0
  %200 = vmatpush1.bf16.msra.mxu0 0
  %201 = vmatprep.subr.bf16.mxu0 0
  %202 = vmatpush1.bf16.msra.mxu0 0
  %203 = vmatprep.mubr.bf16.mxu0 0
  %204 = vmatmul.mubr.bf16.gmra.mrb[0].mxu0 %v163
  %v205 = vpop.f32.mrb[0].mxu0
  %v206 = vadd.f32 %v147, %v205
  %v207 = vpop.f32.mrb[0].mxu0
  %v208 = vpop.f32.mrb[0].mxu0
  %v209 = vadd.f32 %v147, %v208
  %v210 = vpop.f32.mrb[0].mxu0
  %211 = vmatprep.mubr.bf16.mxu0 0
  %212 = vmatmul.mubr.bf16.gmra.mrb[0].mxu0 %v166
  %v213 = vpop.f32.mrb[0].mxu0
  %v214 = vadd.f32 %v147, %v213
  %v215 = vpop.f32.mrb[0].mxu0
  %v216 = vpop.f32.mrb[0].mxu0
  %v217 = vadd.f32 %v147, %v216
  %v218 = vpop.f32.mrb[0].mxu0
  %219 = vmatprep.mubr.bf16.mxu0 0
  %220 = vmatmul.mubr.bf16.gmra.mrb[0].mxu0 %v169
  %v221 = vpop.f32.mrb[0].mxu0
  %v222 = vadd.f32 %v147, %v221
  %v223 = vpop.f32.mrb[0].mxu0
  %v224 = vpop.f32.mrb[0].mxu0
  %v225 = vadd.f32 %v147, %v224
  %v226 = vpop.f32.mrb[0].mxu0
  %227 = vdwg.mxu0
  %v228 = vmax.f32 %v206, 0.0
  %v229 = vmax.f32 %v209, 0.0
  %v230 = vmax.f32 %v214, 0.0
  %v231 = vmax.f32 %v217, 0.0
  %v232 = vmax.f32 %v222, 0.0
  %v233 = vmax.f32 %v225, 0.0
  %v234 = vld [vmem:[%s3] sm:$0xf]
  %v235 = vld [vmem:[%s3 + $0x4] sm:$0xf]
  %v236 = vld [vmem:[%s3 + $0x8] sm:$0xf]
  %v237 = vld [vmem:[%s3 + $0xc] sm:$0xf]
  %v238 = vld [vmem:[%s7] sm:$0x1]
  %v239 = vpack.c.bf16 %v229, %v228
  %v240 = vpack.c.bf16 %v231, %v230
  %v241 = vpack.c.bf16 %v233, %v232
  %v243 = vlaneseq
  %v244 = vshrl.u32 %v243, 7
  %v245 = vsub.s32 0, %v244
  %v246 = vrot.slane %v238, %v245
  %v252 = vunpack.c.l.b16 %v234
  %v253 = vunpack.c.l.b16 %v235
  %v254 = vunpack.c.l.b16 %v236
  %v255 = vunpack.c.l.b16 %v237
  %v256 = vpack.c.b16 %v253, %v252
  %v257 = vpack.c.b16 %v255, %v254
  %v261 = vsel %vm161, %v239, 0
  %v264 = vsel %vm161, %v240, 0
  %v267 = vsel %vm161, %v241, 0
  %269 = vmatprep.subr.bf16.mxu0 0
  %270 = vmatpush1.bf16.msra.mxu0 %v256
  %271 = vmatprep.subr.bf16.mxu0 0
  %272 = vmatpush1.bf16.msra.mxu0 %v257
  %273 = vmatprep.subr.bf16.mxu0 0
  %274 = vmatpush1.bf16.msra.mxu0 0
  %275 = vmatprep.subr.bf16.mxu0 0
  %276 = vmatpush1.bf16.msra.mxu0 0
  %277 = vmatprep.subr.bf16.mxu0 0
  %278 = vmatpush1.bf16.msra.mxu0 0
  %279 = vmatprep.subr.bf16.mxu0 0
  %280 = vmatpush1.bf16.msra.mxu0 0
  %281 = vmatprep.subr.bf16.mxu0 0
  %282 = vmatpush1.bf16.msra.mxu0 0
  %283 = vmatprep.subr.bf16.mxu0 0
  %284 = vmatpush1.bf16.msra.mxu0 0
  %285 = vmatprep.subr.bf16.mxu0 0
  %286 = vmatpush1.bf16.msra.mxu0 0
  %287 = vmatprep.subr.bf16.mxu0 0
  %288 = vmatpush1.bf16.msra.mxu0 0
  %289 = vmatprep.subr.bf16.mxu0 0
  %290 = vmatpush1.bf16.msra.mxu0 0
  %291 = vmatprep.subr.bf16.mxu0 0
  %292 = vmatpush1.bf16.msra.mxu0 0
  %293 = vmatprep.subr.bf16.mxu0 0
  %294 = vmatpush1.bf16.msra.mxu0 0
  %295 = vmatprep.subr.bf16.mxu0 0
  %296 = vmatpush1.bf16.msra.mxu0 0
  %297 = vmatprep.subr.bf16.mxu0 0
  %298 = vmatpush1.bf16.msra.mxu0 0
  %299 = vmatprep.subr.bf16.mxu0 0
  %300 = vmatpush1.bf16.msra.mxu0 0
  %301 = vmatprep.mubr.bf16.mxu0 0
  %302 = vmatmul.mubr.bf16.gmra.mrb[0].mxu0 %v261
  %v303 = vpop.f32.mrb[0].mxu0
  %v304 = vadd.f32 %v246, %v303
  %v305 = vpop.f32.mrb[0].mxu0
  %v306 = vpop.f32.mrb[0].mxu0
  %v307 = vadd.f32 %v246, %v306
  %v308 = vpop.f32.mrb[0].mxu0
  %309 = vmatprep.mubr.bf16.mxu0 0
  %310 = vmatmul.mubr.bf16.gmra.mrb[0].mxu0 %v264
  %v311 = vpop.f32.mrb[0].mxu0
  %v312 = vadd.f32 %v246, %v311
  %v313 = vpop.f32.mrb[0].mxu0
  %v314 = vpop.f32.mrb[0].mxu0
  %v315 = vadd.f32 %v246, %v314
  %v316 = vpop.f32.mrb[0].mxu0
  %317 = vmatprep.mubr.bf16.mxu0 0
  %318 = vmatmul.mubr.bf16.gmra.mrb[0].mxu0 %v267
  %v319 = vpop.f32.mrb[0].mxu0
  %v320 = vadd.f32 %v246, %v319
  %v321 = vpop.f32.mrb[0].mxu0
  %v322 = vpop.f32.mrb[0].mxu0
  %v323 = vadd.f32 %v246, %v322
  %v324 = vpop.f32.mrb[0].mxu0
  %325 = vdwg.mxu0
  %v326 = vmax.f32 %v304, 0.0
  %v327 = vmax.f32 %v307, 0.0
  %v328 = vmax.f32 %v312, 0.0
  %v329 = vmax.f32 %v315, 0.0
  %v330 = vmax.f32 %v320, 0.0
  %v331 = vmax.f32 %v323, 0.0
  %v332 = vld [vmem:[%s4] sm:$0x1]
  %v333 = vld [vmem:[#allocation2] sm:$0x1]
  %v335 = vlaneseq
  %v336 = vshrl.u32 %v335, 7
  %v337 = vsub.s32 0, %v336
  %v338 = vrot.slane %v332, %v337
  %v340 = vmul.f32 %v326, %v338
  %v341 = vmul.f32 %v327, %v338
  %v342 = vmul.f32 %v328, %v338
  %v343 = vmul.f32 %v329, %v338
  %v344 = vmul.f32 %v330, %v338
  %v345 = vmul.f32 %v331, %v338
  %vm346 = vcmask 56320
  %v347 = vsel %vm346, %v340, 0.0
  %348 = vadd.xlane.f32.xlu0 %v347
  %v349 = vpop.xlane.xlu0 %348
  %v350 = vsel %vm346, %v341, 0.0
  %351 = vadd.xlane.f32.xlu0 %v350
  %v352 = vpop.xlane.xlu0 %351
  %v353 = vsel %vm346, %v342, 0.0
  %354 = vadd.xlane.f32.xlu0 %v353
  %v355 = vpop.xlane.xlu0 %354
  %v356 = vsel %vm346, %v343, 0.0
  %357 = vadd.xlane.f32.xlu0 %v356
  %v358 = vpop.xlane.xlu0 %357
  %v359 = vsel %vm346, %v344, 0.0
  %360 = vadd.xlane.f32.xlu0 %v359
  %v361 = vpop.xlane.xlu0 %360
  %v362 = vsel %vm346, %v345, 0.0
  %363 = vadd.xlane.f32.xlu0 %v362
  %v364 = vpop.xlane.xlu0 %363
  %v366 = vlaneseq
  %v367 = vshrl.u32 %v366, 7
  %v368 = vsub.s32 0, %v367
  %v369 = vrot.slane %v333, %v368
  %v371 = vadd.f32 %v349, %v369
  %v372 = vadd.f32 %v352, %v369
  %v373 = vadd.f32 %v355, %v369
  %v374 = vadd.f32 %v358, %v369
  %v375 = vadd.f32 %v361, %v369
  %v376 = vadd.f32 %v364, %v369
  %vm377 = vcmask 7168
  %378 = vst.msk [vmem:[%s9] sm:$0xff] %vm377, %v371
  %379 = vst.msk [vmem:[%s9 + $0x8] sm:$0xff] %vm377, %v372
  %380 = vst.msk [vmem:[%s9 + $0x10] sm:$0xff] %vm377, %v373
  %381 = vst.msk [vmem:[%s9 + $0x18] sm:$0xff] %vm377, %v374
  %382 = vst.msk [vmem:[%s9 + $0x20] sm:$0xff] %vm377, %v375
  %383 = vst.msk [vmem:[%s9 + $0x28] sm:$0xff] %vm377, %v376
  // Predicated region
  $region38: #{net_forward.8} parent=0 // pred_check
    _
  $region39: #{net_forward.8} parent=0 // pred_check_branch
    %385 = sbr.rel (0) target = $region41
  $region40: #{net_forward.8} parent=0 // pred_region
    _
  $region41: #{net_forward.8} parent=0 // pred_fallthru
    _
  // Predicated region
  $region42: #{net_forward.8} parent=0 // pred_check
    _
  $region43: #{net_forward.8} parent=0 // pred_check_branch
    %387 = sbr.rel (0) target = $region45
  $region44: #{net_forward.8} parent=0 // pred_region
    _
  $region45: #{net_forward.8} parent=0 // pred_fallthru
    _

// kernel: net_forward.9
$region0: #{net_forward.9}
  #allocation0 [shape = 'u32[]', space=smem, size = 0x4, offset = 0x4, fixed_abs, tag = 'smem constant byte address 0x4 - core index']
  #allocation1 [shape = 'u32[144,128]{1,0:T(1,128)}', space=vmem, size = 0x12000, scoped, tag = 'internal scratch']
  #allocation2 [shape = 'f32[1,1]{1,0:T(1,128)S(1)}', space=vmem, size = 0x200, scoped, tag = 'scoped memory for net_forward.9']
  %s0 = inlined_call_operand.vmem [shape: f32[16,16], index: 0, kind: input, shape index: {}]
  %s1 = inlined_call_operand.vmem [shape: bf16[16,64], index: 1, kind: input, shape index: {}]
  %s2 = inlined_call_operand.vmem [shape: bf16[64,64], index: 2, kind: input, shape index: {}]
  %s3 = inlined_call_operand.vmem [shape: bf16[64,32], index: 3, kind: input, shape index: {}]
  %s4 = inlined_call_operand.vmem [shape: f32[1,32], index: 4, kind: input, shape index: {}]
  %s5 = inlined_call_operand.vmem [shape: f32[1,64], index: 5, kind: input, shape index: {}, may-alias: {5,6}]
  %s6 = inlined_call_operand.vmem [shape: f32[1,64], index: 6, kind: input, shape index: {}, may-alias: {5,6}]
  %s7 = inlined_call_operand.vmem [shape: f32[1,32], index: 7, kind: input, shape index: {}]
  %s8 = inlined_call_operand.<no memory space> [shape: f32[1,1], index: 8, kind: input, shape index: {}]
  %s9 = inlined_call_operand.vmem [shape: f32[16,1], index: 9, kind: output, shape index: {}]
  %s10 = sld [smem:[#allocation0]]
  $region46: #{net_forward.9} parent=0
    _
  %s12 = ssub.s32 1, %s10
  %s13 = scalar_select 0, %s12, %s10
  %v14 = vstv %s8
  %15 = vst [vmem:[#allocation2] sm:$0x1] %v14
  // Predicated region
  $region2: #{net_forward.9} parent=0 // pred_check
    _
  $region3: #{net_forward.9} parent=0 // pred_check_branch
    %17 = sbr.rel (0) target = $region5
  $region4: #{net_forward.9} parent=0 // pred_region
    _
  $region5: #{net_forward.9} parent=0 // pred_fallthru
    _
  // Predicated region
  $region6: #{net_forward.9} parent=0 // pred_check
    _
  $region7: #{net_forward.9} parent=0 // pred_check_branch
    %19 = sbr.rel (0) target = $region9
  $region8: #{net_forward.9} parent=0 // pred_region
    _
  $region9: #{net_forward.9} parent=0 // pred_fallthru
    _
  // Predicated region
  $region10: #{net_forward.9} parent=0 // pred_check
    _
  $region11: #{net_forward.9} parent=0 // pred_check_branch
    %21 = sbr.rel (0) target = $region13
  $region12: #{net_forward.9} parent=0 // pred_region
    _
  $region13: #{net_forward.9} parent=0 // pred_fallthru
    _
  // Predicated region
  $region14: #{net_forward.9} parent=0 // pred_check
    _
  $region15: #{net_forward.9} parent=0 // pred_check_branch
    %23 = sbr.rel (0) target = $region17
  $region16: #{net_forward.9} parent=0 // pred_region
    _
  $region17: #{net_forward.9} parent=0 // pred_fallthru
    _
  // Predicated region
  $region18: #{net_forward.9} parent=0 // pred_check
    _
  $region19: #{net_forward.9} parent=0 // pred_check_branch
    %25 = sbr.rel (0) target = $region21
  $region20: #{net_forward.9} parent=0 // pred_region
    _
  $region21: #{net_forward.9} parent=0 // pred_fallthru
    _
  // Predicated region
  $region22: #{net_forward.9} parent=0 // pred_check
    _
  $region23: #{net_forward.9} parent=0 // pred_check_branch
    %27 = sbr.rel (0) target = $region25
  $region24: #{net_forward.9} parent=0 // pred_region
    _
  $region25: #{net_forward.9} parent=0 // pred_fallthru
    _
  // Predicated region
  $region26: #{net_forward.9} parent=0 // pred_check
    _
  $region27: #{net_forward.9} parent=0 // pred_check_branch
    %29 = sbr.rel (0) target = $region29
  $region28: #{net_forward.9} parent=0 // pred_region
    _
  $region29: #{net_forward.9} parent=0 // pred_fallthru
    _
  // Predicated region
  $region30: #{net_forward.9} parent=0 // pred_check
    _
  $region31: #{net_forward.9} parent=0 // pred_check_branch
    %31 = sbr.rel (0) target = $region33
  $region32: #{net_forward.9} parent=0 // pred_region
    _
  $region33: #{net_forward.9} parent=0 // pred_fallthru
    _
  // Predicated region
  $region34: #{net_forward.9} parent=0 // pred_check
    _
  $region35: #{net_forward.9} parent=0 // pred_check_branch
    %33 = sbr.rel (0) target = $region37
  $region36: #{net_forward.9} parent=0 // pred_region
    _
  $region37: #{net_forward.9} parent=0 // pred_fallthru
    _
  %v35 = vld [vmem:[%s0] sm:$0xff]
  %v36 = vld [vmem:[%s0 + $0x8] sm:$0xff]
  %v37 = vld [vmem:[%s1] sm:$0xf]
  %v38 = vld [vmem:[%s1 + $0x4] sm:$0xf]
  %v39 = vld [vmem:[%s5] sm:$0x1]
  %v40 = vpack.c.bf16 %v36, %v35
  %v42 = vlaneseq
  %v43 = vshrl.u32 %v42, 7
  %v44 = vsub.s32 0, %v43
  %v45 = vrot.slane %v39, %v44
  %v49 = vunpack.c.l.b16 %v37
  %v50 = vunpack.c.l.b16 %v38
  %v51 = vpack.c.b16 %v50, %v49
  %vm53 = vcmask 130048
  %v55 = vsel %vm53, %v40, 0
  %57 = vmatprep.subr.bf16.mxu0 0
  %58 = vmatpush1.bf16.msra.mxu0 %v51
  %59 = vmatprep.subr.bf16.mxu0 0
  %60 = vmatpush1.bf16.msra.mxu0 0
  %61 = vmatprep.subr.bf16.mxu0 0
  %62 = vmatpush1.bf16.msra.mxu0 0
  %63 = vmatprep.subr.bf16.mxu0 0
  %64 = vmatpush1.bf16.msra.mxu0 0
  %65 = vmatprep.subr.bf16.mxu0 0
  %66 = vmatpush1.bf16.msra.mxu0 0
  %67 = vmatprep.subr.bf16.mxu0 0
  %68 = vmatpush1.bf16.msra.mxu0 0
  %69 = vmatprep.subr.bf16.mxu0 0
  %70 = vmatpush1.bf16.msra.mxu0 0
  %71 = vmatprep.subr.bf16.mxu0 0
  %72 = vmatpush1.bf16.msra.mxu0 0
  %73 = vmatprep.subr.bf16.mxu0 0
  %74 = vmatpush1.bf16.msra.mxu0 0
  %75 = vmatprep.subr.bf16.mxu0 0
  %76 = vmatpush1.bf16.msra.mxu0 0
  %77 = vmatprep.subr.bf16.mxu0 0
  %78 = vmatpush1.bf16.msra.mxu0 0
  %79 = vmatprep.subr.bf16.mxu0 0
  %80 = vmatpush1.bf16.msra.mxu0 0
  %81 = vmatprep.subr.bf16.mxu0 0
  %82 = vmatpush1.bf16.msra.mxu0 0
  %83 = vmatprep.subr.bf16.mxu0 0
  %84 = vmatpush1.bf16.msra.mxu0 0
  %85 = vmatprep.subr.bf16.mxu0 0
  %86 = vmatpush1.bf16.msra.mxu0 0
  %87 = vmatprep.subr.bf16.mxu0 0
  %88 = vmatpush1.bf16.msra.mxu0 0
  %89 = vmatprep.mubr.bf16.mxu0 0
  %90 = vmatmul.mubr.bf16.gmra.mrb[0].mxu0 %v55
  %v91 = vpop.f32.mrb[0].mxu0
  %v92 = vadd.f32 %v45, %v91
  %v93 = vpop.f32.mrb[0].mxu0
  %v94 = vpop.f32.mrb[0].mxu0
  %v95 = vadd.f32 %v45, %v94
  %v96 = vpop.f32.mrb[0].mxu0
  %97 = vdwg.mxu0
  %v98 = vmax.f32 %v92, 0.0
  %v99 = vmax.f32 %v95, 0.0
  %v100 = vld [vmem:[%s2] sm:$0xf]
  %v101 = vld [vmem:[%s2 + $0x4] sm:$0xf]
  %v102 = vld [vmem:[%s2 + $0x8] sm:$0xf]
  %v103 = vld [vmem:[%s2 + $0xc] sm:$0xf]
  %v104 = vld [vmem:[%s2 + $0x10] sm:$0xf]
  %v105 = vld [vmem:[%s2 + $0x14] sm:$0xf]
  %v106 = vld [vmem:[%s2 + $0x18] sm:$0xf]
  %v107 = vld [vmem:[%s2 + $0x1c] sm:$0xf]
  %v108 = vld [vmem:[%s6] sm:$0x1]
  %v109 = vpack.c.bf16 %v99, %v98
  %v111 = vlaneseq
  %v112 = vshrl.u32 %v111, 7
  %v113 = vsub.s32 0, %v112
  %v114 = vrot.slane %v108, %v113
  %v124 = vunpack.c.l.b16 %v100
  %v125 = vunpack.c.l.b16 %v101
  %v126 = vunpack.c.l.b16 %v102
  %v127 = vunpack.c.l.b16 %v103
  %v128 = vunpack.c.l.b16 %v104
  %v129 = vunpack.c.l.b16 %v105
  %v130 = vunpack.c.l.b16 %v106
  %v131 = vunpack.c.l.b16 %v107
  %v132 = vpack.c.b16 %v125, %v124
  %v133 = vpack.c.b16 %v127, %v126
  %v134 = vpack.c.b16 %v129, %v128
  %v135 = vpack.c.b16 %v131, %v130
  %vm140 = vcmask 523264
  %v142 = vsel %vm140, %v109, 0
  %144 = vmatprep.subr.bf16.mxu0 0
  %145 = vmatpush1.bf16.msra.mxu0 %v132
  %146 = vmatprep.subr.bf16.mxu0 0
  %147 = vmatpush1.bf16.msra.mxu0 %v133
  %148 = vmatprep.subr.bf16.mxu0 0
  %149 = vmatpush1.bf16.msra.mxu0 %v134
  %150 = vmatprep.subr.bf16.mxu0 0
  %151 = vmatpush1.bf16.msra.mxu0 %v135
  %152 = vmatprep.subr.bf16.mxu0 0
  %153 = vmatpush1.bf16.msra.mxu0 0
  %154 = vmatprep.subr.bf16.mxu0 0
  %155 = vmatpush1.bf16.msra.mxu0 0
  %156 = vmatprep.subr.bf16.mxu0 0
  %157 = vmatpush1.bf16.msra.mxu0 0
  %158 = vmatprep.subr.bf16.mxu0 0
  %159 = vmatpush1.bf16.msra.mxu0 0
  %160 = vmatprep.subr.bf16.mxu0 0
  %161 = vmatpush1.bf16.msra.mxu0 0
  %162 = vmatprep.subr.bf16.mxu0 0
  %163 = vmatpush1.bf16.msra.mxu0 0
  %164 = vmatprep.subr.bf16.mxu0 0
  %165 = vmatpush1.bf16.msra.mxu0 0
  %166 = vmatprep.subr.bf16.mxu0 0
  %167 = vmatpush1.bf16.msra.mxu0 0
  %168 = vmatprep.subr.bf16.mxu0 0
  %169 = vmatpush1.bf16.msra.mxu0 0
  %170 = vmatprep.subr.bf16.mxu0 0
  %171 = vmatpush1.bf16.msra.mxu0 0
  %172 = vmatprep.subr.bf16.mxu0 0
  %173 = vmatpush1.bf16.msra.mxu0 0
  %174 = vmatprep.subr.bf16.mxu0 0
  %175 = vmatpush1.bf16.msra.mxu0 0
  %176 = vmatprep.mubr.bf16.mxu0 0
  %177 = vmatmul.mubr.bf16.gmra.mrb[0].mxu0 %v142
  %v178 = vpop.f32.mrb[0].mxu0
  %v179 = vadd.f32 %v114, %v178
  %v180 = vpop.f32.mrb[0].mxu0
  %v181 = vpop.f32.mrb[0].mxu0
  %v182 = vadd.f32 %v114, %v181
  %v183 = vpop.f32.mrb[0].mxu0
  %184 = vdwg.mxu0
  %v185 = vmax.f32 %v179, 0.0
  %v186 = vmax.f32 %v182, 0.0
  %v187 = vld [vmem:[%s3] sm:$0xf]
  %v188 = vld [vmem:[%s3 + $0x4] sm:$0xf]
  %v189 = vld [vmem:[%s3 + $0x8] sm:$0xf]
  %v190 = vld [vmem:[%s3 + $0xc] sm:$0xf]
  %v191 = vld [vmem:[%s3 + $0x10] sm:$0xf]
  %v192 = vld [vmem:[%s3 + $0x14] sm:$0xf]
  %v193 = vld [vmem:[%s3 + $0x18] sm:$0xf]
  %v194 = vld [vmem:[%s3 + $0x1c] sm:$0xf]
  %v195 = vld [vmem:[%s7] sm:$0x1]
  %v196 = vpack.c.bf16 %v186, %v185
  %v198 = vlaneseq
  %v199 = vshrl.u32 %v198, 7
  %v200 = vsub.s32 0, %v199
  %v201 = vrot.slane %v195, %v200
  %v211 = vunpack.c.l.b16 %v187
  %v212 = vunpack.c.l.b16 %v188
  %v213 = vunpack.c.l.b16 %v189
  %v214 = vunpack.c.l.b16 %v190
  %v215 = vunpack.c.l.b16 %v191
  %v216 = vunpack.c.l.b16 %v192
  %v217 = vunpack.c.l.b16 %v193
  %v218 = vunpack.c.l.b16 %v194
  %v219 = vpack.c.b16 %v212, %v211
  %v220 = vpack.c.b16 %v214, %v213
  %v221 = vpack.c.b16 %v216, %v215
  %v222 = vpack.c.b16 %v218, %v217
  %v228 = vsel %vm140, %v196, 0
  %230 = vmatprep.subr.bf16.mxu0 0
  %231 = vmatpush1.bf16.msra.mxu0 %v219
  %232 = vmatprep.subr.bf16.mxu0 0
  %233 = vmatpush1.bf16.msra.mxu0 %v220
  %234 = vmatprep.subr.bf16.mxu0 0
  %235 = vmatpush1.bf16.msra.mxu0 %v221
  %236 = vmatprep.subr.bf16.mxu0 0
  %237 = vmatpush1.bf16.msra.mxu0 %v222
  %238 = vmatprep.subr.bf16.mxu0 0
  %239 = vmatpush1.bf16.msra.mxu0 0
  %240 = vmatprep.subr.bf16.mxu0 0
  %241 = vmatpush1.bf16.msra.mxu0 0
  %242 = vmatprep.subr.bf16.mxu0 0
  %243 = vmatpush1.bf16.msra.mxu0 0
  %244 = vmatprep.subr.bf16.mxu0 0
  %245 = vmatpush1.bf16.msra.mxu0 0
  %246 = vmatprep.subr.bf16.mxu0 0
  %247 = vmatpush1.bf16.msra.mxu0 0
  %248 = vmatprep.subr.bf16.mxu0 0
  %249 = vmatpush1.bf16.msra.mxu0 0
  %250 = vmatprep.subr.bf16.mxu0 0
  %251 = vmatpush1.bf16.msra.mxu0 0
  %252 = vmatprep.subr.bf16.mxu0 0
  %253 = vmatpush1.bf16.msra.mxu0 0
  %254 = vmatprep.subr.bf16.mxu0 0
  %255 = vmatpush1.bf16.msra.mxu0 0
  %256 = vmatprep.subr.bf16.mxu0 0
  %257 = vmatpush1.bf16.msra.mxu0 0
  %258 = vmatprep.subr.bf16.mxu0 0
  %259 = vmatpush1.bf16.msra.mxu0 0
  %260 = vmatprep.subr.bf16.mxu0 0
  %261 = vmatpush1.bf16.msra.mxu0 0
  %262 = vmatprep.mubr.bf16.mxu0 0
  %263 = vmatmul.mubr.bf16.gmra.mrb[0].mxu0 %v228
  %v264 = vpop.f32.mrb[0].mxu0
  %v265 = vadd.f32 %v201, %v264
  %v266 = vpop.f32.mrb[0].mxu0
  %v267 = vpop.f32.mrb[0].mxu0
  %v268 = vadd.f32 %v201, %v267
  %v269 = vpop.f32.mrb[0].mxu0
  %270 = vdwg.mxu0
  %v271 = vmax.f32 %v265, 0.0
  %v272 = vmax.f32 %v268, 0.0
  %v273 = vld [vmem:[%s4] sm:$0x1]
  %v274 = vld [vmem:[#allocation2] sm:$0x1]
  %v276 = vlaneseq
  %v277 = vshrl.u32 %v276, 7
  %v278 = vsub.s32 0, %v277
  %v279 = vrot.slane %v273, %v278
  %v281 = vmul.f32 %v271, %v279
  %v282 = vmul.f32 %v272, %v279
  %vm283 = vcmask 261120
  %v284 = vsel %vm283, %v281, 0.0
  %285 = vadd.xlane.f32.xlu0 %v284
  %v286 = vpop.xlane.xlu0 %285
  %v287 = vsel %vm283, %v282, 0.0
  %288 = vadd.xlane.f32.xlu0 %v287
  %v289 = vpop.xlane.xlu0 %288
  %v291 = vlaneseq
  %v292 = vshrl.u32 %v291, 7
  %v293 = vsub.s32 0, %v292
  %v294 = vrot.slane %v274, %v293
  %v296 = vadd.f32 %v286, %v294
  %v297 = vadd.f32 %v289, %v294
  %v298 = vxor.u32 %v296, 2147483648
  %v299 = vxor.u32 %v297, 2147483648
  %v300 = vmul.f32 %v298, 1.442695
  %v301 = vpow.pop %v300
  %v302 = vmul.f32 %v299, 1.442695
  %v303 = vpow.pop %v302
  %v304 = vadd.f32 %v301, 1.0
  %v305 = vadd.f32 %v303, 1.0
  %v306 = vrcp.pop %v304
  %v307 = vmul.f32 1.0, %v306
  %v308 = vrcp.pop %v305
  %v309 = vmul.f32 1.0, %v308
  %vm310 = vcmask 7168
  %311 = vst.msk [vmem:[%s9] sm:$0xff] %vm310, %v307
  %312 = vst.msk [vmem:[%s9 + $0x8] sm:$0xff] %vm310, %v309
  // Predicated region
  $region38: #{net_forward.9} parent=0 // pred_check
    _
  $region39: #{net_forward.9} parent=0 // pred_check_branch
    %314 = sbr.rel (0) target = $region41
  $region40: #{net_forward.9} parent=0 // pred_region
    _
  $region41: #{net_forward.9} parent=0 // pred_fallthru
    _
  // Predicated region
  $region42: #{net_forward.9} parent=0 // pred_check
    _
  $region43: #{net_forward.9} parent=0 // pred_check_branch
    %316 = sbr.rel (0) target = $region45
  $region44: #{net_forward.9} parent=0 // pred_region
    _
  $region45: #{net_forward.9} parent=0 // pred_fallthru
    _

</llo_original>
